<compile_context>
chip_gen: v7x
topology: tpu7x:2x2x1
jax: 0.10.0
libtpu: 0.0.40
codegen_flags: <defaults>
</compile_context>

<pallas_src>
import functools

import jax
import jax.numpy as jnp
from jax.experimental import pallas as pl
from jax.experimental.pallas import tpu as pltpu

D_IN = 784          # 28 * 28, flattened MNIST image
H1 = 512
H2 = 256
LAT_PAD = 128       # latent dim padded to one full lane tile (inside kernel only)


def _round_up(n, m):
    return ((n + m - 1) // m) * m


# --------------------------------------------------------------------------- #
# Kernel
# --------------------------------------------------------------------------- #
def vae_kernel(x_ref, eps_ref,
               w1_ref, b1_ref, w2_ref, b2_ref, wms_ref, bms_ref,
               dw1_ref, db1_ref, dw2_ref, db2_ref, dw3_ref, db3_ref,
               out_ref, kl_ref, *, latent_dims, batch, block_b):
    f32 = jnp.float32
    bf16 = jnp.bfloat16

    # ------------------------------ encoder ------------------------------- #
    x = x_ref[...].astype(bf16)                                     # (TB, 784)
    h = jnp.dot(x, w1_ref[...], preferred_element_type=f32) + b1_ref[...]
    h = jnp.maximum(h, 0.0).astype(bf16)
    h = jnp.dot(h, w2_ref[...], preferred_element_type=f32) + b2_ref[...]
    h = jnp.maximum(h, 0.0).astype(bf16)

    # fused [mu | log_sigma] head: one (TB,256)@(256,256) matmul, halves are
    # lane-aligned 128-wide slabs.
    ms = jnp.dot(h, wms_ref[...], preferred_element_type=f32) + bms_ref[...]
    mu = ms[:, :LAT_PAD]                                            # (TB, 128) f32
    log_sigma = ms[:, LAT_PAD:]                                     # (TB, 128) f32
    sigma = jnp.exp(log_sigma)

    # ------------------------- reparameterization ------------------------- #
    # eps arrives at its natural width; pad to 128 lanes with zeros in-kernel.
    eps = jnp.concatenate(
        [eps_ref[...], jnp.zeros((block_b, LAT_PAD - latent_dims), f32)], axis=1)
    z = mu + sigma * eps                                            # (TB, 128) f32

    # ----------------------------- KL term -------------------------------- #
    # Mask padded batch rows / padded latent lanes; reuse pre-exp activation as
    # log(sigma).  Reduce lane-parallel: wrapper sums all block partials.
    row = pl.program_id(0) * block_b + jax.lax.broadcasted_iota(
        jnp.int32, (block_b, LAT_PAD), 0)
    col = jax.lax.broadcasted_iota(jnp.int32, (block_b, LAT_PAD), 1)
    valid = (row < batch) & (col < latent_dims)
    kl_el = jnp.where(valid, sigma * sigma + mu * mu - log_sigma - 0.5, 0.0)
    kl_ref[...] = jnp.sum(
        kl_el.reshape(block_b // 8, 8, LAT_PAD), axis=0).reshape(1, 8, LAT_PAD)

    # ------------------------------ decoder ------------------------------- #
    d = z.astype(bf16)
    d = jnp.dot(d, dw1_ref[...], preferred_element_type=f32) + db1_ref[...]
    d = jnp.maximum(d, 0.0).astype(bf16)
    d = jnp.dot(d, dw2_ref[...], preferred_element_type=f32) + db2_ref[...]
    d = jnp.maximum(d, 0.0).astype(bf16)
    logits = jnp.dot(d, dw3_ref[...], preferred_element_type=f32) + db3_ref[...]
    out_ref[...] = jax.nn.sigmoid(logits)                           # (TB, 784) f32


# --------------------------------------------------------------------------- #
# Parameters
# --------------------------------------------------------------------------- #
def init_params(key, latent_dims, scale=0.05):
    """Synthetic parameters at the PyTorch module's logical shapes.

    Weights stored transposed as (in_features, out_features) so the kernel
    computes x @ W + b (== PyTorch x @ weight.T + bias)."""
    shapes = dict(
        enc_w1=(D_IN, H1), enc_b1=(1, H1),
        enc_w2=(H1, H2), enc_b2=(1, H2),
        enc_wmu=(H2, latent_dims), enc_bmu=(1, latent_dims),
        enc_wsg=(H2, latent_dims), enc_bsg=(1, latent_dims),
        dec_w1=(latent_dims, H2), dec_b1=(1, H2),
        dec_w2=(H2, H1), dec_b2=(1, H1),
        dec_w3=(H1, D_IN), dec_b3=(1, D_IN),
    )
    keys = jax.random.split(key, len(shapes))
    return {name: scale * jax.random.normal(k, shp, dtype=jnp.float32)
            for k, (name, shp) in zip(keys, shapes.items())}


def prepare_params(p, latent_dims):
    """Fuse the mu/log-sigma heads (latent padded to 128 lanes), cast weights
    to bf16.  w1 / dw3 stay at their natural 784-wide shapes."""
    def padw(w, rows, cols):
        return jnp.pad(w, ((0, rows - w.shape[0]), (0, cols - w.shape[1])))

    wms = jnp.concatenate([padw(p["enc_wmu"], H2, LAT_PAD),
                           padw(p["enc_wsg"], H2, LAT_PAD)], axis=1)   # (256, 256)
    bms = jnp.concatenate([padw(p["enc_bmu"], 1, LAT_PAD),
                           padw(p["enc_bsg"], 1, LAT_PAD)], axis=1)    # (1, 256)
    dw1 = padw(p["dec_w1"], LAT_PAD, H2)               # zero rows for padded latents

    bf = jnp.bfloat16
    return [p["enc_w1"].astype(bf), p["enc_b1"],
            p["enc_w2"].astype(bf), p["enc_b2"],
            wms.astype(bf), bms,
            dw1.astype(bf), p["dec_b1"],
            p["dec_w2"].astype(bf), p["dec_b2"],
            p["dec_w3"].astype(bf), p["dec_b3"]]


# --------------------------------------------------------------------------- #
# Wrapper
# --------------------------------------------------------------------------- #
def vae_forward(x, packed_params, eps, latent_dims, *, block_b=512):
    """x: (B, 1, 28, 28) f32, eps: (B, latent_dims) N(0,1) sample.
    Returns ((B, 1, 28, 28) reconstruction, scalar KL)."""
    B = x.shape[0]
    # Choose TB so the batch splits into >= 2 "parallel" blocks when possible
    # (keeps both TensorCores busy on v7x), capped at block_b.
    half = -(-B // 2)
    TB = max(8, min(block_b, _round_up(half, 8)))
    B_pad = _round_up(B, TB)
    n_blocks = B_pad // TB

    x_flat = x.reshape(B, D_IN).astype(jnp.float32)      # metadata-only for f32 x
    eps_f = eps.astype(jnp.float32)
    if B_pad != B:
        x_flat = jnp.pad(x_flat, ((0, B_pad - B), (0, 0)))
        eps_f = jnp.pad(eps_f, ((0, B_pad - B), (0, 0)))

    def const_spec(w):
        shape = w.shape
        return pl.BlockSpec(shape, lambda i, _n=len(shape): (0,) * _n)

    param_specs = [const_spec(w) for w in packed_params]

    flops = 2 * B_pad * (D_IN * H1 + H1 * H2 + H2 * 2 * LAT_PAD
                         + LAT_PAD * H2 + H2 * H1 + H1 * D_IN)
    bytes_accessed = (sum(int(w.size) * int(w.dtype.itemsize) for w in packed_params)
                      + B_pad * (D_IN * 4 + latent_dims * 4 + D_IN * 4)
                      + n_blocks * 8 * LAT_PAD * 4)
    transcendentals = B_pad * (LAT_PAD + D_IN)           # exp + sigmoid

    kernel = functools.partial(vae_kernel, latent_dims=latent_dims,
                               batch=B, block_b=TB)

    out_pad, kl_blocks = pl.pallas_call(
        kernel,
        grid=(n_blocks,),
        in_specs=[pl.BlockSpec((TB, D_IN), lambda i: (i, 0)),
                  pl.BlockSpec((TB, latent_dims), lambda i: (i, 0))] + param_specs,
        out_specs=(pl.BlockSpec((TB, D_IN), lambda i: (i, 0)),
                   pl.BlockSpec((1, 8, LAT_PAD), lambda i: (i, 0, 0))),
        out_shape=(jax.ShapeDtypeStruct((B_pad, D_IN), jnp.float32),
                   jax.ShapeDtypeStruct((n_blocks, 8, LAT_PAD), jnp.float32)),
        compiler_params=pltpu.CompilerParams(
            dimension_semantics=("parallel",),
            vmem_limit_bytes=32 * 1024 * 1024),
        cost_estimate=pl.CostEstimate(flops=int(flops),
                                      transcendentals=int(transcendentals),
                                      bytes_accessed=int(bytes_accessed)),
    )(x_flat, eps_f, *packed_params)

    recon = out_pad[:B].reshape(B, 1, 28, 28)            # metadata-only if B == B_pad
    kl = jnp.sum(kl_blocks)                              # padded entries were masked to 0
    return recon, kl


# --------------------------------------------------------------------------- #
# Pure-JAX reference (same bf16 casts, for correctness checking)
# --------------------------------------------------------------------------- #
def vae_reference(x, packed_params, eps, latent_dims):
    (w1, b1, w2, b2, wms, bms, dw1, db1, dw2, db2, dw3, db3) = packed_params
    f32, bf16 = jnp.float32, jnp.bfloat16
    B = x.shape[0]
    xf = x.reshape(B, D_IN).astype(bf16)
    h = jnp.maximum(jnp.dot(xf, w1, preferred_element_type=f32) + b1, 0.).astype(bf16)
    h = jnp.maximum(jnp.dot(h, w2, preferred_element_type=f32) + b2, 0.).astype(bf16)
    ms = jnp.dot(h, wms, preferred_element_type=f32) + bms
    mu, log_sigma = ms[:, :LAT_PAD], ms[:, LAT_PAD:]
    sigma = jnp.exp(log_sigma)
    eps_pad = jnp.pad(eps.astype(f32), ((0, 0), (0, LAT_PAD - latent_dims)))
    z = mu + sigma * eps_pad
    kl = jnp.sum((sigma ** 2 + mu ** 2 - log_sigma - 0.5)[:, :latent_dims])
    d = z.astype(bf16)
    d = jnp.maximum(jnp.dot(d, dw1, preferred_element_type=f32) + db1, 0.).astype(bf16)
    d = jnp.maximum(jnp.dot(d, dw2, preferred_element_type=f32) + db2, 0.).astype(bf16)
    out = jax.nn.sigmoid(jnp.dot(d, dw3, preferred_element_type=f32) + db3)
    return out.reshape(B, 1, 28, 28), kl


if __name__ == "__main__":
    latent_dims = 16
    B = 2

    key = jax.random.PRNGKey(0)
    k_x, k_eps, k_p = jax.random.split(key, 3)

    x = jax.random.uniform(k_x, (B, 1, 28, 28), dtype=jnp.float32)
    # The module's self.N.sample(mu.shape) is supplied as an explicit eps input.
    eps = jax.random.normal(k_eps, (B, latent_dims), dtype=jnp.float32)
    params = prepare_params(init_params(k_p, latent_dims), latent_dims)

    recon, kl = vae_forward(x, params, eps, latent_dims)
    jax.block_until_ready((recon, kl))

    assert recon.shape == (B, 1, 28, 28)
    assert recon.dtype == jnp.float32
    assert bool(jnp.all(jnp.isfinite(recon)))
    assert bool(jnp.isfinite(kl))

    ref_recon, ref_kl = vae_reference(x, params, eps, latent_dims)
    assert bool(jnp.allclose(recon, ref_recon, atol=2e-2, rtol=2e-2))
    assert bool(jnp.allclose(kl, ref_kl, atol=2e-2, rtol=2e-2))

    print("KERNEL_OK")
</pallas_src>

<mosaic_0001>
module attributes {stable_mosaic.version = 11 : i64} {
  func.func @vae_kernel(%arg0: i32, %arg1: memref<8x784xf32, #tpu.memory_space<vmem>>, %arg2: memref<8x16xf32, #tpu.memory_space<vmem>>, %arg3: memref<784x512xbf16, #tpu.memory_space<vmem>>, %arg4: memref<1x512xf32, #tpu.memory_space<vmem>>, %arg5: memref<512x256xbf16, #tpu.memory_space<vmem>>, %arg6: memref<1x256xf32, #tpu.memory_space<vmem>>, %arg7: memref<256x256xbf16, #tpu.memory_space<vmem>>, %arg8: memref<1x256xf32, #tpu.memory_space<vmem>>, %arg9: memref<128x256xbf16, #tpu.memory_space<vmem>>, %arg10: memref<1x256xf32, #tpu.memory_space<vmem>>, %arg11: memref<256x512xbf16, #tpu.memory_space<vmem>>, %arg12: memref<1x512xf32, #tpu.memory_space<vmem>>, %arg13: memref<512x784xbf16, #tpu.memory_space<vmem>>, %arg14: memref<1x784xf32, #tpu.memory_space<vmem>>, %arg15: memref<8x784xf32, #tpu.memory_space<vmem>>, %arg16: memref<1x8x128xf32, #tpu.memory_space<vmem>>) attributes {dimension_semantics = [#tpu.dimension_semantics<parallel>], iteration_bounds = array<i64: 1>, scalar_prefetch = 0 : i64, scratch_operands = 0 : i64, tpu.core_type = #tpu.core_type<tc>, window_params = [{transform_indices = @transform_0, window_bounds = array<i64: 8, 784>}, {transform_indices = @transform_1, window_bounds = array<i64: 8, 16>}, {pipeline_mode = #tpu.pipeline_mode<synchronous>, transform_indices = @transform_2, window_bounds = array<i64: 784, 512>}, {pipeline_mode = #tpu.pipeline_mode<synchronous>, transform_indices = @transform_3, window_bounds = array<i64: 1, 512>}, {pipeline_mode = #tpu.pipeline_mode<synchronous>, transform_indices = @transform_4, window_bounds = array<i64: 512, 256>}, {pipeline_mode = #tpu.pipeline_mode<synchronous>, transform_indices = @transform_5, window_bounds = array<i64: 1, 256>}, {pipeline_mode = #tpu.pipeline_mode<synchronous>, transform_indices = @transform_6, window_bounds = array<i64: 256, 256>}, {pipeline_mode = #tpu.pipeline_mode<synchronous>, transform_indices = @transform_7, window_bounds = array<i64: 1, 256>}, {pipeline_mode = #tpu.pipeline_mode<synchronous>, transform_indices = @transform_8, window_bounds = array<i64: 128, 256>}, {pipeline_mode = #tpu.pipeline_mode<synchronous>, transform_indices = @transform_9, window_bounds = array<i64: 1, 256>}, {pipeline_mode = #tpu.pipeline_mode<synchronous>, transform_indices = @transform_10, window_bounds = array<i64: 256, 512>}, {pipeline_mode = #tpu.pipeline_mode<synchronous>, transform_indices = @transform_11, window_bounds = array<i64: 1, 512>}, {pipeline_mode = #tpu.pipeline_mode<synchronous>, transform_indices = @transform_12, window_bounds = array<i64: 512, 784>}, {pipeline_mode = #tpu.pipeline_mode<synchronous>, transform_indices = @transform_13, window_bounds = array<i64: 1, 784>}, {transform_indices = @transform_14, window_bounds = array<i64: 8, 784>}, {transform_indices = @transform_15, window_bounds = array<i64: 1, 8, 128>}]} {
    %c0 = arith.constant 0 : index
    %c0_0 = arith.constant 0 : index
    %0 = vector.load %arg1[%c0, %c0_0] : memref<8x784xf32, #tpu.memory_space<vmem>>, vector<8x784xf32>
    %1 = arith.truncf %0 : vector<8x784xf32> to vector<8x784xbf16>
    %c0_1 = arith.constant 0 : index
    %c0_2 = arith.constant 0 : index
    %2 = vector.load %arg3[%c0_1, %c0_2] : memref<784x512xbf16, #tpu.memory_space<vmem>>, vector<784x512xbf16>
    %cst = arith.constant dense<0.000000e+00> : vector<8x512xf32>
    %3 = tpu.matmul %1, %2, %cst {dimension_numbers = #tpu.dot_dimension_numbers<[1], [0], [0], [1], [0, 0, 1, 1], [], []>} : vector<8x784xbf16>, vector<784x512xbf16>, vector<8x512xf32> -> vector<8x512xf32>
    %c0_3 = arith.constant 0 : index
    %c0_4 = arith.constant 0 : index
    %4 = vector.load %arg4[%c0_3, %c0_4] : memref<1x512xf32, #tpu.memory_space<vmem>>, vector<1x512xf32>
    %5 = vector.broadcast %4 : vector<1x512xf32> to vector<8x512xf32>
    %6 = arith.addf %3, %5 : vector<8x512xf32>
    %cst_5 = arith.constant 0.000000e+00 : f32
    %7 = vector.broadcast %cst_5 : f32 to vector<8x512xf32>
    %8 = arith.maximumf %6, %7 : vector<8x512xf32>
    %9 = arith.truncf %8 : vector<8x512xf32> to vector<8x512xbf16>
    %c0_6 = arith.constant 0 : index
    %c0_7 = arith.constant 0 : index
    %10 = vector.load %arg5[%c0_6, %c0_7] : memref<512x256xbf16, #tpu.memory_space<vmem>>, vector<512x256xbf16>
    %cst_8 = arith.constant dense<0.000000e+00> : vector<8x256xf32>
    %11 = tpu.matmul %9, %10, %cst_8 {dimension_numbers = #tpu.dot_dimension_numbers<[1], [0], [0], [1], [0, 0, 1, 1], [], []>} : vector<8x512xbf16>, vector<512x256xbf16>, vector<8x256xf32> -> vector<8x256xf32>
    %c0_9 = arith.constant 0 : index
    %c0_10 = arith.constant 0 : index
    %12 = vector.load %arg6[%c0_9, %c0_10] : memref<1x256xf32, #tpu.memory_space<vmem>>, vector<1x256xf32>
    %13 = vector.broadcast %12 : vector<1x256xf32> to vector<8x256xf32>
    %14 = arith.addf %11, %13 : vector<8x256xf32>
    %cst_11 = arith.constant 0.000000e+00 : f32
    %15 = vector.broadcast %cst_11 : f32 to vector<8x256xf32>
    %16 = arith.maximumf %14, %15 : vector<8x256xf32>
    %17 = arith.truncf %16 : vector<8x256xf32> to vector<8x256xbf16>
    %c0_12 = arith.constant 0 : index
    %c0_13 = arith.constant 0 : index
    %18 = vector.load %arg7[%c0_12, %c0_13] : memref<256x256xbf16, #tpu.memory_space<vmem>>, vector<256x256xbf16>
    %cst_14 = arith.constant dense<0.000000e+00> : vector<8x256xf32>
    %19 = tpu.matmul %17, %18, %cst_14 {dimension_numbers = #tpu.dot_dimension_numbers<[1], [0], [0], [1], [0, 0, 1, 1], [], []>} : vector<8x256xbf16>, vector<256x256xbf16>, vector<8x256xf32> -> vector<8x256xf32>
    %c0_15 = arith.constant 0 : index
    %c0_16 = arith.constant 0 : index
    %20 = vector.load %arg8[%c0_15, %c0_16] : memref<1x256xf32, #tpu.memory_space<vmem>>, vector<1x256xf32>
    %21 = vector.broadcast %20 : vector<1x256xf32> to vector<8x256xf32>
    %22 = arith.addf %19, %21 : vector<8x256xf32>
    %23 = vector.extract_strided_slice %22 {offsets = [0, 0], sizes = [8, 128], strides = [1, 1]} : vector<8x256xf32> to vector<8x128xf32>
    %24 = vector.extract_strided_slice %22 {offsets = [0, 128], sizes = [8, 128], strides = [1, 1]} : vector<8x256xf32> to vector<8x128xf32>
    %25 = math.exp %24 : vector<8x128xf32>
    %c0_17 = arith.constant 0 : index
    %c0_18 = arith.constant 0 : index
    %26 = vector.load %arg2[%c0_17, %c0_18] : memref<8x16xf32, #tpu.memory_space<vmem>>, vector<8x16xf32>
    %cst_19 = arith.constant 0.000000e+00 : f32
    %27 = vector.broadcast %cst_19 : f32 to vector<8x112xf32>
    %28 = tpu.concatenate %26, %27 in 1 : vector<8x16xf32>, vector<8x112xf32> -> vector<8x128xf32>
    %29 = arith.mulf %25, %28 : vector<8x128xf32>
    %30 = arith.addf %23, %29 : vector<8x128xf32>
    %c8_i32 = arith.constant 8 : i32
    %31 = arith.muli %arg0, %c8_i32 : i32
    %32 = tpu.iota {dimensions = array<i32: 0>} : vector<8x128xi32>
    %33 = vector.broadcast %31 : i32 to vector<8x128xi32>
    %34 = arith.addi %33, %32 : vector<8x128xi32>
    %35 = tpu.iota {dimensions = array<i32: 1>} : vector<8x128xi32>
    %c2_i32 = arith.constant 2 : i32
    %36 = vector.broadcast %c2_i32 : i32 to vector<8x128xi32>
    %37 = arith.cmpi slt, %34, %36 : vector<8x128xi32>
    %c16_i32 = arith.constant 16 : i32
    %38 = vector.broadcast %c16_i32 : i32 to vector<8x128xi32>
    %39 = arith.cmpi slt, %35, %38 : vector<8x128xi32>
    %40 = arith.andi %37, %39 : vector<8x128xi1>
    %41 = arith.mulf %25, %25 : vector<8x128xf32>
    %42 = arith.mulf %23, %23 : vector<8x128xf32>
    %43 = arith.addf %41, %42 : vector<8x128xf32>
    %44 = arith.subf %43, %24 : vector<8x128xf32>
    %cst_20 = arith.constant 5.000000e-01 : f32
    %45 = vector.broadcast %cst_20 : f32 to vector<8x128xf32>
    %46 = arith.subf %44, %45 : vector<8x128xf32>
    %cst_21 = arith.constant 0.000000e+00 : f32
    %47 = vector.broadcast %cst_21 : f32 to vector<8x128xf32>
    %48 = arith.select %40, %46, %47 : vector<8x128xi1>, vector<8x128xf32>
    %49 = vector.shape_cast %48 : vector<8x128xf32> to vector<1x8x128xf32>
    %cst_22 = arith.constant dense<0.000000e+00> : vector<8x128xf32>
    %50 = vector.multi_reduction <add>, %49, %cst_22 [0] : vector<1x8x128xf32> to vector<8x128xf32>
    %51 = vector.shape_cast %50 : vector<8x128xf32> to vector<1x8x128xf32>
    %c0_23 = arith.constant 0 : index
    %c0_24 = arith.constant 0 : index
    %c0_25 = arith.constant 0 : index
    %52 = vector.load %arg16[%c0_23, %c0_24, %c0_25] : memref<1x8x128xf32, #tpu.memory_space<vmem>>, vector<1x8x128xf32>
    tpu.vector_store %arg16[%c0_23, %c0_24, %c0_25], %51 {strides = array<i32>} : memref<1x8x128xf32, #tpu.memory_space<vmem>>, vector<1x8x128xf32>,
    %53 = arith.truncf %30 : vector<8x128xf32> to vector<8x128xbf16>
    %c0_26 = arith.constant 0 : index
    %c0_27 = arith.constant 0 : index
    %54 = vector.load %arg9[%c0_26, %c0_27] : memref<128x256xbf16, #tpu.memory_space<vmem>>, vector<128x256xbf16>
    %cst_28 = arith.constant dense<0.000000e+00> : vector<8x256xf32>
    %55 = tpu.matmul %53, %54, %cst_28 {dimension_numbers = #tpu.dot_dimension_numbers<[1], [0], [0], [1], [0, 0, 1, 1], [], []>} : vector<8x128xbf16>, vector<128x256xbf16>, vector<8x256xf32> -> vector<8x256xf32>
    %c0_29 = arith.constant 0 : index
    %c0_30 = arith.constant 0 : index
    %56 = vector.load %arg10[%c0_29, %c0_30] : memref<1x256xf32, #tpu.memory_space<vmem>>, vector<1x256xf32>
    %57 = vector.broadcast %56 : vector<1x256xf32> to vector<8x256xf32>
    %58 = arith.addf %55, %57 : vector<8x256xf32>
    %cst_31 = arith.constant 0.000000e+00 : f32
    %59 = vector.broadcast %cst_31 : f32 to vector<8x256xf32>
    %60 = arith.maximumf %58, %59 : vector<8x256xf32>
    %61 = arith.truncf %60 : vector<8x256xf32> to vector<8x256xbf16>
    %c0_32 = arith.constant 0 : index
    %c0_33 = arith.constant 0 : index
    %62 = vector.load %arg11[%c0_32, %c0_33] : memref<256x512xbf16, #tpu.memory_space<vmem>>, vector<256x512xbf16>
    %cst_34 = arith.constant dense<0.000000e+00> : vector<8x512xf32>
    %63 = tpu.matmul %61, %62, %cst_34 {dimension_numbers = #tpu.dot_dimension_numbers<[1], [0], [0], [1], [0, 0, 1, 1], [], []>} : vector<8x256xbf16>, vector<256x512xbf16>, vector<8x512xf32> -> vector<8x512xf32>
    %c0_35 = arith.constant 0 : index
    %c0_36 = arith.constant 0 : index
    %64 = vector.load %arg12[%c0_35, %c0_36] : memref<1x512xf32, #tpu.memory_space<vmem>>, vector<1x512xf32>
    %65 = vector.broadcast %64 : vector<1x512xf32> to vector<8x512xf32>
    %66 = arith.addf %63, %65 : vector<8x512xf32>
    %cst_37 = arith.constant 0.000000e+00 : f32
    %67 = vector.broadcast %cst_37 : f32 to vector<8x512xf32>
    %68 = arith.maximumf %66, %67 : vector<8x512xf32>
    %69 = arith.truncf %68 : vector<8x512xf32> to vector<8x512xbf16>
    %c0_38 = arith.constant 0 : index
    %c0_39 = arith.constant 0 : index
    %70 = vector.load %arg13[%c0_38, %c0_39] : memref<512x784xbf16, #tpu.memory_space<vmem>>, vector<512x784xbf16>
    %cst_40 = arith.constant dense<0.000000e+00> : vector<8x784xf32>
    %71 = tpu.matmul %69, %70, %cst_40 {dimension_numbers = #tpu.dot_dimension_numbers<[1], [0], [0], [1], [0, 0, 1, 1], [], []>} : vector<8x512xbf16>, vector<512x784xbf16>, vector<8x784xf32> -> vector<8x784xf32>
    %c0_41 = arith.constant 0 : index
    %c0_42 = arith.constant 0 : index
    %72 = vector.load %arg14[%c0_41, %c0_42] : memref<1x784xf32, #tpu.memory_space<vmem>>, vector<1x784xf32>
    %73 = vector.broadcast %72 : vector<1x784xf32> to vector<8x784xf32>
    %74 = arith.addf %71, %73 : vector<8x784xf32>
    %75 = arith.negf %74 : vector<8x784xf32>
    %76 = math.exp %75 : vector<8x784xf32>
    %cst_43 = arith.constant 1.000000e+00 : f32
    %77 = vector.broadcast %cst_43 : f32 to vector<8x784xf32>
    %78 = arith.addf %77, %76 : vector<8x784xf32>
    %79 = arith.divf %77, %78 : vector<8x784xf32>
    %c0_44 = arith.constant 0 : index
    %c0_45 = arith.constant 0 : index
    %80 = vector.load %arg15[%c0_44, %c0_45] : memref<8x784xf32, #tpu.memory_space<vmem>>, vector<8x784xf32>
    tpu.vector_store %arg15[%c0_44, %c0_45], %79 {strides = array<i32>} : memref<8x784xf32, #tpu.memory_space<vmem>>, vector<8x784xf32>,
    return
  }
  func.func @transform_0(%arg0: i32) -> (i32, i32) {
    %c0_i32 = arith.constant 0 : i32
    %c0_i32_0 = arith.constant 0 : i32
    return %arg0, %c0_i32 : i32, i32
  }
  func.func @transform_1(%arg0: i32) -> (i32, i32) {
    %c0_i32 = arith.constant 0 : i32
    %c0_i32_0 = arith.constant 0 : i32
    return %arg0, %c0_i32 : i32, i32
  }
  func.func @transform_2(%arg0: i32) -> (i32, i32) {
    %c0_i32 = arith.constant 0 : i32
    %c0_i32_0 = arith.constant 0 : i32
    %c0_i32_1 = arith.constant 0 : i32
    return %c0_i32, %c0_i32_0 : i32, i32
  }
  func.func @transform_3(%arg0: i32) -> (i32, i32) {
    %c0_i32 = arith.constant 0 : i32
    %c0_i32_0 = arith.constant 0 : i32
    %c0_i32_1 = arith.constant 0 : i32
    return %c0_i32, %c0_i32_0 : i32, i32
  }
  func.func @transform_4(%arg0: i32) -> (i32, i32) {
    %c0_i32 = arith.constant 0 : i32
    %c0_i32_0 = arith.constant 0 : i32
    %c0_i32_1 = arith.constant 0 : i32
    return %c0_i32, %c0_i32_0 : i32, i32
  }
  func.func @transform_5(%arg0: i32) -> (i32, i32) {
    %c0_i32 = arith.constant 0 : i32
    %c0_i32_0 = arith.constant 0 : i32
    %c0_i32_1 = arith.constant 0 : i32
    return %c0_i32, %c0_i32_0 : i32, i32
  }
  func.func @transform_6(%arg0: i32) -> (i32, i32) {
    %c0_i32 = arith.constant 0 : i32
    %c0_i32_0 = arith.constant 0 : i32
    %c0_i32_1 = arith.constant 0 : i32
    return %c0_i32, %c0_i32_0 : i32, i32
  }
  func.func @transform_7(%arg0: i32) -> (i32, i32) {
    %c0_i32 = arith.constant 0 : i32
    %c0_i32_0 = arith.constant 0 : i32
    %c0_i32_1 = arith.constant 0 : i32
    return %c0_i32, %c0_i32_0 : i32, i32
  }
  func.func @transform_8(%arg0: i32) -> (i32, i32) {
    %c0_i32 = arith.constant 0 : i32
    %c0_i32_0 = arith.constant 0 : i32
    %c0_i32_1 = arith.constant 0 : i32
    return %c0_i32, %c0_i32_0 : i32, i32
  }
  func.func @transform_9(%arg0: i32) -> (i32, i32) {
    %c0_i32 = arith.constant 0 : i32
    %c0_i32_0 = arith.constant 0 : i32
    %c0_i32_1 = arith.constant 0 : i32
    return %c0_i32, %c0_i32_0 : i32, i32
  }
  func.func @transform_10(%arg0: i32) -> (i32, i32) {
    %c0_i32 = arith.constant 0 : i32
    %c0_i32_0 = arith.constant 0 : i32
    %c0_i32_1 = arith.constant 0 : i32
    return %c0_i32, %c0_i32_0 : i32, i32
  }
  func.func @transform_11(%arg0: i32) -> (i32, i32) {
    %c0_i32 = arith.constant 0 : i32
    %c0_i32_0 = arith.constant 0 : i32
    %c0_i32_1 = arith.constant 0 : i32
    return %c0_i32, %c0_i32_0 : i32, i32
  }
  func.func @transform_12(%arg0: i32) -> (i32, i32) {
    %c0_i32 = arith.constant 0 : i32
    %c0_i32_0 = arith.constant 0 : i32
    %c0_i32_1 = arith.constant 0 : i32
    return %c0_i32, %c0_i32_0 : i32, i32
  }
  func.func @transform_13(%arg0: i32) -> (i32, i32) {
    %c0_i32 = arith.constant 0 : i32
    %c0_i32_0 = arith.constant 0 : i32
    %c0_i32_1 = arith.constant 0 : i32
    return %c0_i32, %c0_i32_0 : i32, i32
  }
  func.func @transform_14(%arg0: i32) -> (i32, i32) {
    %c0_i32 = arith.constant 0 : i32
    %c0_i32_0 = arith.constant 0 : i32
    return %arg0, %c0_i32 : i32, i32
  }
  func.func @transform_15(%arg0: i32) -> (i32, i32, i32) {
    %c0_i32 = arith.constant 0 : i32
    %c0_i32_0 = arith.constant 0 : i32
    %c0_i32_1 = arith.constant 0 : i32
    return %arg0, %c0_i32, %c0_i32_0 : i32, i32, i32
  }
}

</mosaic_0001>

<llo_original>
// kernel: tpu_custom_call.1
$region0: #{tpu_custom_call.1}
  #allocation0 [shape = 'u32[]', space=smem, size = 0x4, offset = 0x4, fixed_abs, tag = 'smem constant byte address 0x4 - core index']
  #allocation1 [shape = 'u32[144,128]{1,0:T(1,128)}', space=vmem, size = 0x12000, scoped, tag = 'internal scratch']
  %s0 = inlined_call_operand.vmem [shape: f32[8,784], index: 0, kind: input, shape index: {}]
  %s1 = inlined_call_operand.vmem [shape: f32[8,16], index: 1, kind: input, shape index: {}]
  %s2 = inlined_call_operand.vmem [shape: bf16[784,512], index: 2, kind: input, shape index: {}]
  %s3 = inlined_call_operand.vmem [shape: f32[1,512], index: 3, kind: input, shape index: {}]
  %s4 = inlined_call_operand.vmem [shape: bf16[512,256], index: 4, kind: input, shape index: {}]
  %s5 = inlined_call_operand.vmem [shape: f32[1,256], index: 5, kind: input, shape index: {}]
  %s6 = inlined_call_operand.vmem [shape: bf16[256,256], index: 6, kind: input, shape index: {}]
  %s7 = inlined_call_operand.vmem [shape: f32[1,256], index: 7, kind: input, shape index: {}]
  %s8 = inlined_call_operand.vmem [shape: bf16[128,256], index: 8, kind: input, shape index: {}]
  %s9 = inlined_call_operand.vmem [shape: f32[1,256], index: 9, kind: input, shape index: {}]
  %s10 = inlined_call_operand.vmem [shape: bf16[256,512], index: 10, kind: input, shape index: {}]
  %s11 = inlined_call_operand.vmem [shape: f32[1,512], index: 11, kind: input, shape index: {}]
  %s12 = inlined_call_operand.vmem [shape: bf16[512,784], index: 12, kind: input, shape index: {}]
  %s13 = inlined_call_operand.vmem [shape: f32[1,784], index: 13, kind: input, shape index: {}]
  %s14 = inlined_call_operand.hbm [shape: f32[8,784], index: 14, kind: output, shape index: {0}]
  %s15 = inlined_call_operand.hbm [shape: f32[1,8,128], index: 15, kind: output, shape index: {1}]
  %16 = xla_tuple %s14, %s15
  %s17 = sld [smem:[#allocation0]]
  $region74: #{tpu_custom_call.1} parent=0
    _
  %s19 = ssub.s32 1, %s17
  %s20 = scalar_select 0, %s19, %s17
  $region1: #{tpu_custom_call.1} parent=0
    #allocation2 [shape = 'u8[28672]{0}', space=vmem, size = 0x7000, scoped, tag = 'output window, operand 0, single buffered']
    #allocation3 [shape = 's32[1]{0}', space=sflag, size = 0x4, scoped, tag = 'scoped memory for tpu_custom_call.1']
    #allocation4 [shape = 'u8[4096]{0}', space=vmem, size = 0x1000, scoped, tag = 'output window, operand 1, single buffered']
    #allocation5 [shape = 's32[1]{0}', space=sflag, size = 0x4, scoped, tag = 'scoped memory for tpu_custom_call.1']
    %21 = vsyncpa [#allocation3], 0
    %22 = vsyncpa [#allocation5], 0
    // Predicated region
    $region2: #{tpu_custom_call.1} parent=1 // pred_check
      _
    $region3: #{tpu_custom_call.1} parent=1 // pred_check_branch
      %24 = sbr.rel (0) target = $region5
    $region4: #{tpu_custom_call.1} parent=1 // pred_region
      _
    $region5: #{tpu_custom_call.1} parent=1 // pred_fallthru
      _
    // Predicated region
    $region6: #{tpu_custom_call.1} parent=1 // pred_check
      _
    $region7: #{tpu_custom_call.1} parent=1 // pred_check_branch
      %26 = sbr.rel (0) target = $region9
    $region8: #{tpu_custom_call.1} parent=1 // pred_region
      _
    $region9: #{tpu_custom_call.1} parent=1 // pred_fallthru
      _
    // Predicated region
    $region10: #{tpu_custom_call.1} parent=1 // pred_check
      _
    $region11: #{tpu_custom_call.1} parent=1 // pred_check_branch
      %28 = sbr.rel (0) target = $region13
    $region12: #{tpu_custom_call.1} parent=1 // pred_region
      _
    $region13: #{tpu_custom_call.1} parent=1 // pred_fallthru
      _
    // Predicated region
    $region14: #{tpu_custom_call.1} parent=1 // pred_check
      _
    $region15: #{tpu_custom_call.1} parent=1 // pred_check_branch
      %30 = sbr.rel (0) target = $region17
    $region16: #{tpu_custom_call.1} parent=1 // pred_region
      _
    $region17: #{tpu_custom_call.1} parent=1 // pred_fallthru
      _
    // Predicated region
    $region18: #{tpu_custom_call.1} parent=1 // pred_check
      _
    $region19: #{tpu_custom_call.1} parent=1 // pred_check_branch
      %32 = sbr.rel (0) target = $region21
    $region20: #{tpu_custom_call.1} parent=1 // pred_region
      _
    $region21: #{tpu_custom_call.1} parent=1 // pred_fallthru
      _
    // Predicated region
    $region22: #{tpu_custom_call.1} parent=1 // pred_check
      _
    $region23: #{tpu_custom_call.1} parent=1 // pred_check_branch
      %34 = sbr.rel (0) target = $region25
    $region24: #{tpu_custom_call.1} parent=1 // pred_region
      _
    $region25: #{tpu_custom_call.1} parent=1 // pred_fallthru
      _
    // Predicated region
    $region26: #{tpu_custom_call.1} parent=1 // pred_check
      _
    $region27: #{tpu_custom_call.1} parent=1 // pred_check_branch
      %36 = sbr.rel (0) target = $region29
    $region28: #{tpu_custom_call.1} parent=1 // pred_region
      _
    $region29: #{tpu_custom_call.1} parent=1 // pred_fallthru
      _
    // Predicated region
    $region30: #{tpu_custom_call.1} parent=1 // pred_check
      _
    $region31: #{tpu_custom_call.1} parent=1 // pred_check_branch
      %38 = sbr.rel (0) target = $region33
    $region32: #{tpu_custom_call.1} parent=1 // pred_region
      _
    $region33: #{tpu_custom_call.1} parent=1 // pred_fallthru
      _
    // Predicated region
    $region34: #{tpu_custom_call.1} parent=1 // pred_check
      _
    $region35: #{tpu_custom_call.1} parent=1 // pred_check_branch
      %40 = sbr.rel (0) target = $region37
    $region36: #{tpu_custom_call.1} parent=1 // pred_region
      _
    $region37: #{tpu_custom_call.1} parent=1 // pred_fallthru
      _
    // Predicated region
    $region38: #{tpu_custom_call.1} parent=1 // pred_check
      _
    $region39: #{tpu_custom_call.1} parent=1 // pred_check_branch
      %42 = sbr.rel (0) target = $region41
    $region40: #{tpu_custom_call.1} parent=1 // pred_region
      _
    $region41: #{tpu_custom_call.1} parent=1 // pred_fallthru
      _
    // Predicated region
    $region42: #{tpu_custom_call.1} parent=1 // pred_check
      _
    $region43: #{tpu_custom_call.1} parent=1 // pred_check_branch
      %44 = sbr.rel (0) target = $region45
    $region44: #{tpu_custom_call.1} parent=1 // pred_region
      _
    $region45: #{tpu_custom_call.1} parent=1 // pred_fallthru
      _
    // Predicated region
    $region46: #{tpu_custom_call.1} parent=1 // pred_check
      _
    $region47: #{tpu_custom_call.1} parent=1 // pred_check_branch
      %46 = sbr.rel (0) target = $region49
    $region48: #{tpu_custom_call.1} parent=1 // pred_region
      _
    $region49: #{tpu_custom_call.1} parent=1 // pred_fallthru
      _
    // Predicated region
    $region50: #{tpu_custom_call.1} parent=1 // pred_check
      _
    $region51: #{tpu_custom_call.1} parent=1 // pred_check_branch
      %48 = sbr.rel (0) target = $region53
    $region52: #{tpu_custom_call.1} parent=1 // pred_region
      _
    $region53: #{tpu_custom_call.1} parent=1 // pred_fallthru
      _
    // Predicated region
    $region54: #{tpu_custom_call.1} parent=1 // pred_check
      _
    $region55: #{tpu_custom_call.1} parent=1 // pred_check_branch
      %50 = sbr.rel (0) target = $region57
    $region56: #{tpu_custom_call.1} parent=1 // pred_region
      _
    $region57: #{tpu_custom_call.1} parent=1 // pred_fallthru
      _
    %v52 = vld [vmem:[%s0] sm:$0xff]
    %v53 = vld [vmem:[%s0 + $0x8] sm:$0xff]
    %v54 = vld [vmem:[%s0 + $0x10] sm:$0xff]
    %v55 = vld [vmem:[%s0 + $0x18] sm:$0xff]
    %v56 = vld [vmem:[%s0 + $0x20] sm:$0xff]
    %v57 = vld [vmem:[%s0 + $0x28] sm:$0xff]
    %v58 = vld [vmem:[%s0 + $0x30] sm:$0xff]
    %v59 = vpack.c.bf16 %v52, %v52
    %v60 = vpack.c.bf16 %v53, %v53
    %v61 = vpack.c.bf16 %v54, %v54
    %v62 = vpack.c.bf16 %v55, %v55
    %v63 = vpack.c.bf16 %v56, %v56
    %v64 = vpack.c.bf16 %v57, %v57
    %v65 = vpack.c.bf16 %v58, %v58
    %v66 = vld [vmem:[%s2] sm:$0xff]
    %v67 = vld [vmem:[%s2 + $0x8] sm:$0xff]
    %v68 = vld [vmem:[%s2 + $0x10] sm:$0xff]
    %v69 = vld [vmem:[%s2 + $0x18] sm:$0xff]
    %v70 = vld [vmem:[%s2 + $0x20] sm:$0xff]
    %v71 = vld [vmem:[%s2 + $0x28] sm:$0xff]
    %v72 = vld [vmem:[%s2 + $0x30] sm:$0xff]
    %v73 = vld [vmem:[%s2 + $0x38] sm:$0xff]
    %v74 = vld [vmem:[%s2 + $0x40] sm:$0xff]
    %v75 = vld [vmem:[%s2 + $0x48] sm:$0xff]
    %v76 = vld [vmem:[%s2 + $0x50] sm:$0xff]
    %v77 = vld [vmem:[%s2 + $0x58] sm:$0xff]
    %v78 = vld [vmem:[%s2 + $0x60] sm:$0xff]
    %v79 = vld [vmem:[%s2 + $0x68] sm:$0xff]
    %v80 = vld [vmem:[%s2 + $0x70] sm:$0xff]
    %v81 = vld [vmem:[%s2 + $0x78] sm:$0xff]
    %v82 = vld [vmem:[%s2 + $0x80] sm:$0xff]
    %v83 = vld [vmem:[%s2 + $0x88] sm:$0xff]
    %v84 = vld [vmem:[%s2 + $0x90] sm:$0xff]
    %v85 = vld [vmem:[%s2 + $0x98] sm:$0xff]
    %v86 = vld [vmem:[%s2 + $0xa0] sm:$0xff]
    %v87 = vld [vmem:[%s2 + $0xa8] sm:$0xff]
    %v88 = vld [vmem:[%s2 + $0xb0] sm:$0xff]
    %v89 = vld [vmem:[%s2 + $0xb8] sm:$0xff]
    %v90 = vld [vmem:[%s2 + $0xc0] sm:$0xff]
    %v91 = vld [vmem:[%s2 + $0xc8] sm:$0xff]
    %v92 = vld [vmem:[%s2 + $0xd0] sm:$0xff]
    %v93 = vld [vmem:[%s2 + $0xd8] sm:$0xff]
    %v94 = vld [vmem:[%s2 + $0xe0] sm:$0xff]
    %v95 = vld [vmem:[%s2 + $0xe8] sm:$0xff]
    %v96 = vld [vmem:[%s2 + $0xf0] sm:$0xff]
    %v97 = vld [vmem:[%s2 + $0xf8] sm:$0xff]
    %v98 = vld [vmem:[%s2 + $0x100] sm:$0xff]
    %v99 = vld [vmem:[%s2 + $0x108] sm:$0xff]
    %v100 = vld [vmem:[%s2 + $0x110] sm:$0xff]
    %v101 = vld [vmem:[%s2 + $0x118] sm:$0xff]
    %v102 = vld [vmem:[%s2 + $0x120] sm:$0xff]
    %v103 = vld [vmem:[%s2 + $0x128] sm:$0xff]
    %v104 = vld [vmem:[%s2 + $0x130] sm:$0xff]
    %v105 = vld [vmem:[%s2 + $0x138] sm:$0xff]
    %v106 = vld [vmem:[%s2 + $0x140] sm:$0xff]
    %v107 = vld [vmem:[%s2 + $0x148] sm:$0xff]
    %v108 = vld [vmem:[%s2 + $0x150] sm:$0xff]
    %v109 = vld [vmem:[%s2 + $0x158] sm:$0xff]
    %v110 = vld [vmem:[%s2 + $0x160] sm:$0xff]
    %v111 = vld [vmem:[%s2 + $0x168] sm:$0xff]
    %v112 = vld [vmem:[%s2 + $0x170] sm:$0xff]
    %v113 = vld [vmem:[%s2 + $0x178] sm:$0xff]
    %v114 = vld [vmem:[%s2 + $0x180] sm:$0xff]
    %v115 = vld [vmem:[%s2 + $0x188] sm:$0xff]
    %v116 = vld [vmem:[%s2 + $0x190] sm:$0xff]
    %v117 = vld [vmem:[%s2 + $0x198] sm:$0xff]
    %v118 = vld [vmem:[%s2 + $0x1a0] sm:$0xff]
    %v119 = vld [vmem:[%s2 + $0x1a8] sm:$0xff]
    %v120 = vld [vmem:[%s2 + $0x1b0] sm:$0xff]
    %v121 = vld [vmem:[%s2 + $0x1b8] sm:$0xff]
    %v122 = vld [vmem:[%s2 + $0x1c0] sm:$0xff]
    %v123 = vld [vmem:[%s2 + $0x1c8] sm:$0xff]
    %v124 = vld [vmem:[%s2 + $0x1d0] sm:$0xff]
    %v125 = vld [vmem:[%s2 + $0x1d8] sm:$0xff]
    %v126 = vld [vmem:[%s2 + $0x1e0] sm:$0xff]
    %v127 = vld [vmem:[%s2 + $0x1e8] sm:$0xff]
    %v128 = vld [vmem:[%s2 + $0x1f0] sm:$0xff]
    %v129 = vld [vmem:[%s2 + $0x1f8] sm:$0xff]
    %v130 = vld [vmem:[%s2 + $0x200] sm:$0xff]
    %v131 = vld [vmem:[%s2 + $0x208] sm:$0xff]
    %v132 = vld [vmem:[%s2 + $0x210] sm:$0xff]
    %v133 = vld [vmem:[%s2 + $0x218] sm:$0xff]
    %v134 = vld [vmem:[%s2 + $0x220] sm:$0xff]
    %v135 = vld [vmem:[%s2 + $0x228] sm:$0xff]
    %v136 = vld [vmem:[%s2 + $0x230] sm:$0xff]
    %v137 = vld [vmem:[%s2 + $0x238] sm:$0xff]
    %v138 = vld [vmem:[%s2 + $0x240] sm:$0xff]
    %v139 = vld [vmem:[%s2 + $0x248] sm:$0xff]
    %v140 = vld [vmem:[%s2 + $0x250] sm:$0xff]
    %v141 = vld [vmem:[%s2 + $0x258] sm:$0xff]
    %v142 = vld [vmem:[%s2 + $0x260] sm:$0xff]
    %v143 = vld [vmem:[%s2 + $0x268] sm:$0xff]
    %v144 = vld [vmem:[%s2 + $0x270] sm:$0xff]
    %v145 = vld [vmem:[%s2 + $0x278] sm:$0xff]
    %v146 = vld [vmem:[%s2 + $0x280] sm:$0xff]
    %v147 = vld [vmem:[%s2 + $0x288] sm:$0xff]
    %v148 = vld [vmem:[%s2 + $0x290] sm:$0xff]
    %v149 = vld [vmem:[%s2 + $0x298] sm:$0xff]
    %v150 = vld [vmem:[%s2 + $0x2a0] sm:$0xff]
    %v151 = vld [vmem:[%s2 + $0x2a8] sm:$0xff]
    %v152 = vld [vmem:[%s2 + $0x2b0] sm:$0xff]
    %v153 = vld [vmem:[%s2 + $0x2b8] sm:$0xff]
    %v154 = vld [vmem:[%s2 + $0x2c0] sm:$0xff]
    %v155 = vld [vmem:[%s2 + $0x2c8] sm:$0xff]
    %v156 = vld [vmem:[%s2 + $0x2d0] sm:$0xff]
    %v157 = vld [vmem:[%s2 + $0x2d8] sm:$0xff]
    %v158 = vld [vmem:[%s2 + $0x2e0] sm:$0xff]
    %v159 = vld [vmem:[%s2 + $0x2e8] sm:$0xff]
    %v160 = vld [vmem:[%s2 + $0x2f0] sm:$0xff]
    %v161 = vld [vmem:[%s2 + $0x2f8] sm:$0xff]
    %v162 = vld [vmem:[%s2 + $0x300] sm:$0xff]
    %v163 = vld [vmem:[%s2 + $0x308] sm:$0xff]
    %v164 = vld [vmem:[%s2 + $0x310] sm:$0xff]
    %v165 = vld [vmem:[%s2 + $0x318] sm:$0xff]
    %v166 = vld [vmem:[%s2 + $0x320] sm:$0xff]
    %v167 = vld [vmem:[%s2 + $0x328] sm:$0xff]
    %v168 = vld [vmem:[%s2 + $0x330] sm:$0xff]
    %v169 = vld [vmem:[%s2 + $0x338] sm:$0xff]
    %v170 = vld [vmem:[%s2 + $0x340] sm:$0xff]
    %v171 = vld [vmem:[%s2 + $0x348] sm:$0xff]
    %v172 = vld [vmem:[%s2 + $0x350] sm:$0xff]
    %v173 = vld [vmem:[%s2 + $0x358] sm:$0xff]
    %v174 = vld [vmem:[%s2 + $0x360] sm:$0xff]
    %v175 = vld [vmem:[%s2 + $0x368] sm:$0xff]
    %v176 = vld [vmem:[%s2 + $0x370] sm:$0xff]
    %v177 = vld [vmem:[%s2 + $0x378] sm:$0xff]
    %v178 = vld [vmem:[%s2 + $0x380] sm:$0xff]
    %v179 = vld [vmem:[%s2 + $0x388] sm:$0xff]
    %v180 = vld [vmem:[%s2 + $0x390] sm:$0xff]
    %v181 = vld [vmem:[%s2 + $0x398] sm:$0xff]
    %v182 = vld [vmem:[%s2 + $0x3a0] sm:$0xff]
    %v183 = vld [vmem:[%s2 + $0x3a8] sm:$0xff]
    %v184 = vld [vmem:[%s2 + $0x3b0] sm:$0xff]
    %v185 = vld [vmem:[%s2 + $0x3b8] sm:$0xff]
    %v186 = vld [vmem:[%s2 + $0x3c0] sm:$0xff]
    %v187 = vld [vmem:[%s2 + $0x3c8] sm:$0xff]
    %v188 = vld [vmem:[%s2 + $0x3d0] sm:$0xff]
    %v189 = vld [vmem:[%s2 + $0x3d8] sm:$0xff]
    %v190 = vld [vmem:[%s2 + $0x3e0] sm:$0xff]
    %v191 = vld [vmem:[%s2 + $0x3e8] sm:$0xff]
    %v192 = vld [vmem:[%s2 + $0x3f0] sm:$0xff]
    %v193 = vld [vmem:[%s2 + $0x3f8] sm:$0xff]
    %v194 = vld [vmem:[%s2 + $0x400] sm:$0xff]
    %v195 = vld [vmem:[%s2 + $0x408] sm:$0xff]
    %v196 = vld [vmem:[%s2 + $0x410] sm:$0xff]
    %v197 = vld [vmem:[%s2 + $0x418] sm:$0xff]
    %v198 = vld [vmem:[%s2 + $0x420] sm:$0xff]
    %v199 = vld [vmem:[%s2 + $0x428] sm:$0xff]
    %v200 = vld [vmem:[%s2 + $0x430] sm:$0xff]
    %v201 = vld [vmem:[%s2 + $0x438] sm:$0xff]
    %v202 = vld [vmem:[%s2 + $0x440] sm:$0xff]
    %v203 = vld [vmem:[%s2 + $0x448] sm:$0xff]
    %v204 = vld [vmem:[%s2 + $0x450] sm:$0xff]
    %v205 = vld [vmem:[%s2 + $0x458] sm:$0xff]
    %v206 = vld [vmem:[%s2 + $0x460] sm:$0xff]
    %v207 = vld [vmem:[%s2 + $0x468] sm:$0xff]
    %v208 = vld [vmem:[%s2 + $0x470] sm:$0xff]
    %v209 = vld [vmem:[%s2 + $0x478] sm:$0xff]
    %v210 = vld [vmem:[%s2 + $0x480] sm:$0xff]
    %v211 = vld [vmem:[%s2 + $0x488] sm:$0xff]
    %v212 = vld [vmem:[%s2 + $0x490] sm:$0xff]
    %v213 = vld [vmem:[%s2 + $0x498] sm:$0xff]
    %v214 = vld [vmem:[%s2 + $0x4a0] sm:$0xff]
    %v215 = vld [vmem:[%s2 + $0x4a8] sm:$0xff]
    %v216 = vld [vmem:[%s2 + $0x4b0] sm:$0xff]
    %v217 = vld [vmem:[%s2 + $0x4b8] sm:$0xff]
    %v218 = vld [vmem:[%s2 + $0x4c0] sm:$0xff]
    %v219 = vld [vmem:[%s2 + $0x4c8] sm:$0xff]
    %v220 = vld [vmem:[%s2 + $0x4d0] sm:$0xff]
    %v221 = vld [vmem:[%s2 + $0x4d8] sm:$0xff]
    %v222 = vld [vmem:[%s2 + $0x4e0] sm:$0xff]
    %v223 = vld [vmem:[%s2 + $0x4e8] sm:$0xff]
    %v224 = vld [vmem:[%s2 + $0x4f0] sm:$0xff]
    %v225 = vld [vmem:[%s2 + $0x4f8] sm:$0xff]
    %v226 = vld [vmem:[%s2 + $0x500] sm:$0xff]
    %v227 = vld [vmem:[%s2 + $0x508] sm:$0xff]
    %v228 = vld [vmem:[%s2 + $0x510] sm:$0xff]
    %v229 = vld [vmem:[%s2 + $0x518] sm:$0xff]
    %v230 = vld [vmem:[%s2 + $0x520] sm:$0xff]
    %v231 = vld [vmem:[%s2 + $0x528] sm:$0xff]
    %v232 = vld [vmem:[%s2 + $0x530] sm:$0xff]
    %v233 = vld [vmem:[%s2 + $0x538] sm:$0xff]
    %v234 = vld [vmem:[%s2 + $0x540] sm:$0xff]
    %v235 = vld [vmem:[%s2 + $0x548] sm:$0xff]
    %v236 = vld [vmem:[%s2 + $0x550] sm:$0xff]
    %v237 = vld [vmem:[%s2 + $0x558] sm:$0xff]
    %v238 = vld [vmem:[%s2 + $0x560] sm:$0xff]
    %v239 = vld [vmem:[%s2 + $0x568] sm:$0xff]
    %v240 = vld [vmem:[%s2 + $0x570] sm:$0xff]
    %v241 = vld [vmem:[%s2 + $0x578] sm:$0xff]
    %v242 = vld [vmem:[%s2 + $0x580] sm:$0xff]
    %v243 = vld [vmem:[%s2 + $0x588] sm:$0xff]
    %v244 = vld [vmem:[%s2 + $0x590] sm:$0xff]
    %v245 = vld [vmem:[%s2 + $0x598] sm:$0xff]
    %v246 = vld [vmem:[%s2 + $0x5a0] sm:$0xff]
    %v247 = vld [vmem:[%s2 + $0x5a8] sm:$0xff]
    %v248 = vld [vmem:[%s2 + $0x5b0] sm:$0xff]
    %v249 = vld [vmem:[%s2 + $0x5b8] sm:$0xff]
    %v250 = vld [vmem:[%s2 + $0x5c0] sm:$0xff]
    %v251 = vld [vmem:[%s2 + $0x5c8] sm:$0xff]
    %v252 = vld [vmem:[%s2 + $0x5d0] sm:$0xff]
    %v253 = vld [vmem:[%s2 + $0x5d8] sm:$0xff]
    %v254 = vld [vmem:[%s2 + $0x5e0] sm:$0xff]
    %v255 = vld [vmem:[%s2 + $0x5e8] sm:$0xff]
    %v256 = vld [vmem:[%s2 + $0x5f0] sm:$0xff]
    %v257 = vld [vmem:[%s2 + $0x5f8] sm:$0xff]
    %v258 = vld [vmem:[%s2 + $0x600] sm:$0xff]
    %v259 = vld [vmem:[%s2 + $0x608] sm:$0xff]
    %v260 = vld [vmem:[%s2 + $0x610] sm:$0xff]
    %v261 = vld [vmem:[%s2 + $0x618] sm:$0xff]
    %v262 = vld [vmem:[%s3] sm:$0xf]
    %v264 = vlaneseq
    %v265 = vshrl.u32 %v264, 7
    %v266 = vsub.s32 0, %v265
    %v267 = vrot.slane %v262, %v266
    %v268 = vlaneseq
    %v269 = vshrl.u32 %v268, 7
    %v270 = vsub.s32 1, %v269
    %v271 = vrot.slane %v262, %v270
    %v272 = vlaneseq
    %v273 = vshrl.u32 %v272, 7
    %v274 = vsub.s32 2, %v273
    %v275 = vrot.slane %v262, %v274
    %v276 = vlaneseq
    %v277 = vshrl.u32 %v276, 7
    %v278 = vsub.s32 3, %v277
    %v279 = vrot.slane %v262, %v278
    %v480 = vunpack.c.l.b16 %v66
    %v481 = vunpack.c.h.b16 %v66
    %v482 = vunpack.c.l.b16 %v67
    %v483 = vunpack.c.h.b16 %v67
    %v484 = vunpack.c.l.b16 %v68
    %v485 = vunpack.c.h.b16 %v68
    %v486 = vunpack.c.l.b16 %v69
    %v487 = vunpack.c.h.b16 %v69
    %v488 = vunpack.c.l.b16 %v70
    %v489 = vunpack.c.h.b16 %v70
    %v490 = vunpack.c.l.b16 %v71
    %v491 = vunpack.c.h.b16 %v71
    %v492 = vunpack.c.l.b16 %v72
    %v493 = vunpack.c.h.b16 %v72
    %v494 = vunpack.c.l.b16 %v73
    %v495 = vunpack.c.h.b16 %v73
    %v496 = vunpack.c.l.b16 %v74
    %v497 = vunpack.c.h.b16 %v74
    %v498 = vunpack.c.l.b16 %v75
    %v499 = vunpack.c.h.b16 %v75
    %v500 = vunpack.c.l.b16 %v76
    %v501 = vunpack.c.h.b16 %v76
    %v502 = vunpack.c.l.b16 %v77
    %v503 = vunpack.c.h.b16 %v77
    %v504 = vunpack.c.l.b16 %v78
    %v505 = vunpack.c.h.b16 %v78
    %v506 = vunpack.c.l.b16 %v79
    %v507 = vunpack.c.h.b16 %v79
    %v508 = vunpack.c.l.b16 %v80
    %v509 = vunpack.c.h.b16 %v80
    %v510 = vunpack.c.l.b16 %v81
    %v511 = vunpack.c.h.b16 %v81
    %v512 = vunpack.c.l.b16 %v82
    %v513 = vunpack.c.h.b16 %v82
    %v514 = vunpack.c.l.b16 %v83
    %v515 = vunpack.c.h.b16 %v83
    %v516 = vunpack.c.l.b16 %v84
    %v517 = vunpack.c.h.b16 %v84
    %v518 = vunpack.c.l.b16 %v85
    %v519 = vunpack.c.h.b16 %v85
    %v520 = vunpack.c.l.b16 %v86
    %v521 = vunpack.c.h.b16 %v86
    %v522 = vunpack.c.l.b16 %v87
    %v523 = vunpack.c.h.b16 %v87
    %v524 = vunpack.c.l.b16 %v88
    %v525 = vunpack.c.h.b16 %v88
    %v526 = vunpack.c.l.b16 %v89
    %v527 = vunpack.c.h.b16 %v89
    %v528 = vunpack.c.l.b16 %v90
    %v529 = vunpack.c.h.b16 %v90
    %v530 = vunpack.c.l.b16 %v91
    %v531 = vunpack.c.h.b16 %v91
    %v532 = vunpack.c.l.b16 %v92
    %v533 = vunpack.c.h.b16 %v92
    %v534 = vunpack.c.l.b16 %v93
    %v535 = vunpack.c.h.b16 %v93
    %v536 = vunpack.c.l.b16 %v94
    %v537 = vunpack.c.h.b16 %v94
    %v538 = vunpack.c.l.b16 %v95
    %v539 = vunpack.c.h.b16 %v95
    %v540 = vunpack.c.l.b16 %v96
    %v541 = vunpack.c.h.b16 %v96
    %v542 = vunpack.c.l.b16 %v97
    %v543 = vunpack.c.h.b16 %v97
    %v544 = vunpack.c.l.b16 %v98
    %v545 = vunpack.c.h.b16 %v98
    %v546 = vunpack.c.l.b16 %v99
    %v547 = vunpack.c.h.b16 %v99
    %v548 = vunpack.c.l.b16 %v100
    %v549 = vunpack.c.h.b16 %v100
    %v550 = vunpack.c.l.b16 %v101
    %v551 = vunpack.c.h.b16 %v101
    %v552 = vunpack.c.l.b16 %v102
    %v553 = vunpack.c.h.b16 %v102
    %v554 = vunpack.c.l.b16 %v103
    %v555 = vunpack.c.h.b16 %v103
    %v556 = vunpack.c.l.b16 %v104
    %v557 = vunpack.c.h.b16 %v104
    %v558 = vunpack.c.l.b16 %v105
    %v559 = vunpack.c.h.b16 %v105
    %v560 = vunpack.c.l.b16 %v106
    %v561 = vunpack.c.h.b16 %v106
    %v562 = vunpack.c.l.b16 %v107
    %v563 = vunpack.c.h.b16 %v107
    %v564 = vunpack.c.l.b16 %v108
    %v565 = vunpack.c.h.b16 %v108
    %v566 = vunpack.c.l.b16 %v109
    %v567 = vunpack.c.h.b16 %v109
    %v568 = vunpack.c.l.b16 %v110
    %v569 = vunpack.c.h.b16 %v110
    %v570 = vunpack.c.l.b16 %v111
    %v571 = vunpack.c.h.b16 %v111
    %v572 = vunpack.c.l.b16 %v112
    %v573 = vunpack.c.h.b16 %v112
    %v574 = vunpack.c.l.b16 %v113
    %v575 = vunpack.c.h.b16 %v113
    %v576 = vunpack.c.l.b16 %v114
    %v577 = vunpack.c.h.b16 %v114
    %v578 = vunpack.c.l.b16 %v115
    %v579 = vunpack.c.h.b16 %v115
    %v580 = vunpack.c.l.b16 %v116
    %v581 = vunpack.c.h.b16 %v116
    %v582 = vunpack.c.l.b16 %v117
    %v583 = vunpack.c.h.b16 %v117
    %v584 = vunpack.c.l.b16 %v118
    %v585 = vunpack.c.h.b16 %v118
    %v586 = vunpack.c.l.b16 %v119
    %v587 = vunpack.c.h.b16 %v119
    %v588 = vunpack.c.l.b16 %v120
    %v589 = vunpack.c.h.b16 %v120
    %v590 = vunpack.c.l.b16 %v121
    %v591 = vunpack.c.h.b16 %v121
    %v592 = vunpack.c.l.b16 %v122
    %v593 = vunpack.c.h.b16 %v122
    %v594 = vunpack.c.l.b16 %v123
    %v595 = vunpack.c.h.b16 %v123
    %v596 = vunpack.c.l.b16 %v124
    %v597 = vunpack.c.h.b16 %v124
    %v598 = vunpack.c.l.b16 %v125
    %v599 = vunpack.c.h.b16 %v125
    %v600 = vunpack.c.l.b16 %v126
    %v601 = vunpack.c.h.b16 %v126
    %v602 = vunpack.c.l.b16 %v127
    %v603 = vunpack.c.h.b16 %v127
    %v604 = vunpack.c.l.b16 %v128
    %v605 = vunpack.c.h.b16 %v128
    %v606 = vunpack.c.l.b16 %v129
    %v607 = vunpack.c.h.b16 %v129
    %v608 = vunpack.c.l.b16 %v130
    %v609 = vunpack.c.h.b16 %v130
    %v610 = vunpack.c.l.b16 %v131
    %v611 = vunpack.c.h.b16 %v131
    %v612 = vunpack.c.l.b16 %v132
    %v613 = vunpack.c.h.b16 %v132
    %v614 = vunpack.c.l.b16 %v133
    %v615 = vunpack.c.h.b16 %v133
    %v616 = vunpack.c.l.b16 %v134
    %v617 = vunpack.c.h.b16 %v134
    %v618 = vunpack.c.l.b16 %v135
    %v619 = vunpack.c.h.b16 %v135
    %v620 = vunpack.c.l.b16 %v136
    %v621 = vunpack.c.h.b16 %v136
    %v622 = vunpack.c.l.b16 %v137
    %v623 = vunpack.c.h.b16 %v137
    %v624 = vunpack.c.l.b16 %v138
    %v625 = vunpack.c.h.b16 %v138
    %v626 = vunpack.c.l.b16 %v139
    %v627 = vunpack.c.h.b16 %v139
    %v628 = vunpack.c.l.b16 %v140
    %v629 = vunpack.c.h.b16 %v140
    %v630 = vunpack.c.l.b16 %v141
    %v631 = vunpack.c.h.b16 %v141
    %v632 = vunpack.c.l.b16 %v142
    %v633 = vunpack.c.h.b16 %v142
    %v634 = vunpack.c.l.b16 %v143
    %v635 = vunpack.c.h.b16 %v143
    %v636 = vunpack.c.l.b16 %v144
    %v637 = vunpack.c.h.b16 %v144
    %v638 = vunpack.c.l.b16 %v145
    %v639 = vunpack.c.h.b16 %v145
    %v640 = vunpack.c.l.b16 %v146
    %v641 = vunpack.c.h.b16 %v146
    %v642 = vunpack.c.l.b16 %v147
    %v643 = vunpack.c.h.b16 %v147
    %v644 = vunpack.c.l.b16 %v148
    %v645 = vunpack.c.h.b16 %v148
    %v646 = vunpack.c.l.b16 %v149
    %v647 = vunpack.c.h.b16 %v149
    %v648 = vunpack.c.l.b16 %v150
    %v649 = vunpack.c.h.b16 %v150
    %v650 = vunpack.c.l.b16 %v151
    %v651 = vunpack.c.h.b16 %v151
    %v652 = vunpack.c.l.b16 %v152
    %v653 = vunpack.c.h.b16 %v152
    %v654 = vunpack.c.l.b16 %v153
    %v655 = vunpack.c.h.b16 %v153
    %v656 = vunpack.c.l.b16 %v154
    %v657 = vunpack.c.h.b16 %v154
    %v658 = vunpack.c.l.b16 %v155
    %v659 = vunpack.c.h.b16 %v155
    %v660 = vunpack.c.l.b16 %v156
    %v661 = vunpack.c.h.b16 %v156
    %v662 = vunpack.c.l.b16 %v157
    %v663 = vunpack.c.h.b16 %v157
    %v664 = vunpack.c.l.b16 %v158
    %v665 = vunpack.c.h.b16 %v158
    %v666 = vunpack.c.l.b16 %v159
    %v667 = vunpack.c.h.b16 %v159
    %v668 = vunpack.c.l.b16 %v160
    %v669 = vunpack.c.h.b16 %v160
    %v670 = vunpack.c.l.b16 %v161
    %v671 = vunpack.c.h.b16 %v161
    %v672 = vunpack.c.l.b16 %v162
    %v673 = vunpack.c.h.b16 %v162
    %v674 = vunpack.c.l.b16 %v163
    %v675 = vunpack.c.h.b16 %v163
    %v676 = vunpack.c.l.b16 %v164
    %v677 = vunpack.c.h.b16 %v164
    %v678 = vunpack.c.l.b16 %v165
    %v679 = vunpack.c.h.b16 %v165
    %v680 = vunpack.c.l.b16 %v166
    %v681 = vunpack.c.h.b16 %v166
    %v682 = vunpack.c.l.b16 %v167
    %v683 = vunpack.c.h.b16 %v167
    %v684 = vunpack.c.l.b16 %v168
    %v685 = vunpack.c.h.b16 %v168
    %v686 = vunpack.c.l.b16 %v169
    %v687 = vunpack.c.h.b16 %v169
    %v688 = vunpack.c.l.b16 %v170
    %v689 = vunpack.c.h.b16 %v170
    %v690 = vunpack.c.l.b16 %v171
    %v691 = vunpack.c.h.b16 %v171
    %v692 = vunpack.c.l.b16 %v172
    %v693 = vunpack.c.h.b16 %v172
    %v694 = vunpack.c.l.b16 %v173
    %v695 = vunpack.c.h.b16 %v173
    %v696 = vunpack.c.l.b16 %v174
    %v697 = vunpack.c.h.b16 %v174
    %v698 = vunpack.c.l.b16 %v175
    %v699 = vunpack.c.h.b16 %v175
    %v700 = vunpack.c.l.b16 %v176
    %v701 = vunpack.c.h.b16 %v176
    %v702 = vunpack.c.l.b16 %v177
    %v703 = vunpack.c.h.b16 %v177
    %v704 = vunpack.c.l.b16 %v178
    %v705 = vunpack.c.h.b16 %v178
    %v706 = vunpack.c.l.b16 %v179
    %v707 = vunpack.c.h.b16 %v179
    %v708 = vunpack.c.l.b16 %v180
    %v709 = vunpack.c.h.b16 %v180
    %v710 = vunpack.c.l.b16 %v181
    %v711 = vunpack.c.h.b16 %v181
    %v712 = vunpack.c.l.b16 %v182
    %v713 = vunpack.c.h.b16 %v182
    %v714 = vunpack.c.l.b16 %v183
    %v715 = vunpack.c.h.b16 %v183
    %v716 = vunpack.c.l.b16 %v184
    %v717 = vunpack.c.h.b16 %v184
    %v718 = vunpack.c.l.b16 %v185
    %v719 = vunpack.c.h.b16 %v185
    %v720 = vunpack.c.l.b16 %v186
    %v721 = vunpack.c.h.b16 %v186
    %v722 = vunpack.c.l.b16 %v187
    %v723 = vunpack.c.h.b16 %v187
    %v724 = vunpack.c.l.b16 %v188
    %v725 = vunpack.c.h.b16 %v188
    %v726 = vunpack.c.l.b16 %v189
    %v727 = vunpack.c.h.b16 %v189
    %v728 = vunpack.c.l.b16 %v190
    %v729 = vunpack.c.h.b16 %v190
    %v730 = vunpack.c.l.b16 %v191
    %v731 = vunpack.c.h.b16 %v191
    %v732 = vunpack.c.l.b16 %v192
    %v733 = vunpack.c.h.b16 %v192
    %v734 = vunpack.c.l.b16 %v193
    %v735 = vunpack.c.h.b16 %v193
    %v736 = vunpack.c.l.b16 %v194
    %v737 = vunpack.c.h.b16 %v194
    %v738 = vunpack.c.l.b16 %v195
    %v739 = vunpack.c.h.b16 %v195
    %v740 = vunpack.c.l.b16 %v196
    %v741 = vunpack.c.h.b16 %v196
    %v742 = vunpack.c.l.b16 %v197
    %v743 = vunpack.c.h.b16 %v197
    %v744 = vunpack.c.l.b16 %v198
    %v745 = vunpack.c.h.b16 %v198
    %v746 = vunpack.c.l.b16 %v199
    %v747 = vunpack.c.h.b16 %v199
    %v748 = vunpack.c.l.b16 %v200
    %v749 = vunpack.c.h.b16 %v200
    %v750 = vunpack.c.l.b16 %v201
    %v751 = vunpack.c.h.b16 %v201
    %v752 = vunpack.c.l.b16 %v202
    %v753 = vunpack.c.h.b16 %v202
    %v754 = vunpack.c.l.b16 %v203
    %v755 = vunpack.c.h.b16 %v203
    %v756 = vunpack.c.l.b16 %v204
    %v757 = vunpack.c.h.b16 %v204
    %v758 = vunpack.c.l.b16 %v205
    %v759 = vunpack.c.h.b16 %v205
    %v760 = vunpack.c.l.b16 %v206
    %v761 = vunpack.c.h.b16 %v206
    %v762 = vunpack.c.l.b16 %v207
    %v763 = vunpack.c.h.b16 %v207
    %v764 = vunpack.c.l.b16 %v208
    %v765 = vunpack.c.h.b16 %v208
    %v766 = vunpack.c.l.b16 %v209
    %v767 = vunpack.c.h.b16 %v209
    %v768 = vunpack.c.l.b16 %v210
    %v769 = vunpack.c.h.b16 %v210
    %v770 = vunpack.c.l.b16 %v211
    %v771 = vunpack.c.h.b16 %v211
    %v772 = vunpack.c.l.b16 %v212
    %v773 = vunpack.c.h.b16 %v212
    %v774 = vunpack.c.l.b16 %v213
    %v775 = vunpack.c.h.b16 %v213
    %v776 = vunpack.c.l.b16 %v214
    %v777 = vunpack.c.h.b16 %v214
    %v778 = vunpack.c.l.b16 %v215
    %v779 = vunpack.c.h.b16 %v215
    %v780 = vunpack.c.l.b16 %v216
    %v781 = vunpack.c.h.b16 %v216
    %v782 = vunpack.c.l.b16 %v217
    %v783 = vunpack.c.h.b16 %v217
    %v784 = vunpack.c.l.b16 %v218
    %v785 = vunpack.c.h.b16 %v218
    %v786 = vunpack.c.l.b16 %v219
    %v787 = vunpack.c.h.b16 %v219
    %v788 = vunpack.c.l.b16 %v220
    %v789 = vunpack.c.h.b16 %v220
    %v790 = vunpack.c.l.b16 %v221
    %v791 = vunpack.c.h.b16 %v221
    %v792 = vunpack.c.l.b16 %v222
    %v793 = vunpack.c.h.b16 %v222
    %v794 = vunpack.c.l.b16 %v223
    %v795 = vunpack.c.h.b16 %v223
    %v796 = vunpack.c.l.b16 %v224
    %v797 = vunpack.c.h.b16 %v224
    %v798 = vunpack.c.l.b16 %v225
    %v799 = vunpack.c.h.b16 %v225
    %v800 = vunpack.c.l.b16 %v226
    %v801 = vunpack.c.h.b16 %v226
    %v802 = vunpack.c.l.b16 %v227
    %v803 = vunpack.c.h.b16 %v227
    %v804 = vunpack.c.l.b16 %v228
    %v805 = vunpack.c.h.b16 %v228
    %v806 = vunpack.c.l.b16 %v229
    %v807 = vunpack.c.h.b16 %v229
    %v808 = vunpack.c.l.b16 %v230
    %v809 = vunpack.c.h.b16 %v230
    %v810 = vunpack.c.l.b16 %v231
    %v811 = vunpack.c.h.b16 %v231
    %v812 = vunpack.c.l.b16 %v232
    %v813 = vunpack.c.h.b16 %v232
    %v814 = vunpack.c.l.b16 %v233
    %v815 = vunpack.c.h.b16 %v233
    %v816 = vunpack.c.l.b16 %v234
    %v817 = vunpack.c.h.b16 %v234
    %v818 = vunpack.c.l.b16 %v235
    %v819 = vunpack.c.h.b16 %v235
    %v820 = vunpack.c.l.b16 %v236
    %v821 = vunpack.c.h.b16 %v236
    %v822 = vunpack.c.l.b16 %v237
    %v823 = vunpack.c.h.b16 %v237
    %v824 = vunpack.c.l.b16 %v238
    %v825 = vunpack.c.h.b16 %v238
    %v826 = vunpack.c.l.b16 %v239
    %v827 = vunpack.c.h.b16 %v239
    %v828 = vunpack.c.l.b16 %v240
    %v829 = vunpack.c.h.b16 %v240
    %v830 = vunpack.c.l.b16 %v241
    %v831 = vunpack.c.h.b16 %v241
    %v832 = vunpack.c.l.b16 %v242
    %v833 = vunpack.c.h.b16 %v242
    %v834 = vunpack.c.l.b16 %v243
    %v835 = vunpack.c.h.b16 %v243
    %v836 = vunpack.c.l.b16 %v244
    %v837 = vunpack.c.h.b16 %v244
    %v838 = vunpack.c.l.b16 %v245
    %v839 = vunpack.c.h.b16 %v245
    %v840 = vunpack.c.l.b16 %v246
    %v841 = vunpack.c.h.b16 %v246
    %v842 = vunpack.c.l.b16 %v247
    %v843 = vunpack.c.h.b16 %v247
    %v844 = vunpack.c.l.b16 %v248
    %v845 = vunpack.c.h.b16 %v248
    %v846 = vunpack.c.l.b16 %v249
    %v847 = vunpack.c.h.b16 %v249
    %v848 = vunpack.c.l.b16 %v250
    %v849 = vunpack.c.h.b16 %v250
    %v850 = vunpack.c.l.b16 %v251
    %v851 = vunpack.c.h.b16 %v251
    %v852 = vunpack.c.l.b16 %v252
    %v853 = vunpack.c.h.b16 %v252
    %v854 = vunpack.c.l.b16 %v253
    %v855 = vunpack.c.h.b16 %v253
    %v856 = vunpack.c.l.b16 %v254
    %v857 = vunpack.c.h.b16 %v254
    %v858 = vunpack.c.l.b16 %v255
    %v859 = vunpack.c.h.b16 %v255
    %v860 = vunpack.c.l.b16 %v256
    %v861 = vunpack.c.h.b16 %v256
    %v862 = vunpack.c.l.b16 %v257
    %v863 = vunpack.c.h.b16 %v257
    %v864 = vunpack.c.l.b16 %v258
    %v865 = vunpack.c.h.b16 %v258
    %v866 = vunpack.c.l.b16 %v259
    %v867 = vunpack.c.h.b16 %v259
    %v868 = vunpack.c.l.b16 %v260
    %v869 = vunpack.c.h.b16 %v260
    %v870 = vunpack.c.l.b16 %v261
    %v871 = vunpack.c.h.b16 %v261
    %v872 = vpack.c.b16 %v484, %v480
    %v873 = vpack.c.b16 %v485, %v481
    %v874 = vpack.c.b16 %v486, %v482
    %v875 = vpack.c.b16 %v487, %v483
    %v876 = vpack.c.b16 %v492, %v488
    %v877 = vpack.c.b16 %v493, %v489
    %v878 = vpack.c.b16 %v494, %v490
    %v879 = vpack.c.b16 %v495, %v491
    %v880 = vpack.c.b16 %v500, %v496
    %v881 = vpack.c.b16 %v501, %v497
    %v882 = vpack.c.b16 %v502, %v498
    %v883 = vpack.c.b16 %v503, %v499
    %v884 = vpack.c.b16 %v508, %v504
    %v885 = vpack.c.b16 %v509, %v505
    %v886 = vpack.c.b16 %v510, %v506
    %v887 = vpack.c.b16 %v511, %v507
    %v888 = vpack.c.b16 %v516, %v512
    %v889 = vpack.c.b16 %v517, %v513
    %v890 = vpack.c.b16 %v518, %v514
    %v891 = vpack.c.b16 %v519, %v515
    %v892 = vpack.c.b16 %v524, %v520
    %v893 = vpack.c.b16 %v525, %v521
    %v894 = vpack.c.b16 %v526, %v522
    %v895 = vpack.c.b16 %v527, %v523
    %v896 = vpack.c.b16 %v532, %v528
    %v897 = vpack.c.b16 %v533, %v529
    %v898 = vpack.c.b16 %v534, %v530
    %v899 = vpack.c.b16 %v535, %v531
    %v900 = vpack.c.b16 %v540, %v536
    %v901 = vpack.c.b16 %v541, %v537
    %v902 = vpack.c.b16 %v542, %v538
    %v903 = vpack.c.b16 %v543, %v539
    %v904 = vpack.c.b16 %v548, %v544
    %v905 = vpack.c.b16 %v549, %v545
    %v906 = vpack.c.b16 %v550, %v546
    %v907 = vpack.c.b16 %v551, %v547
    %v908 = vpack.c.b16 %v556, %v552
    %v909 = vpack.c.b16 %v557, %v553
    %v910 = vpack.c.b16 %v558, %v554
    %v911 = vpack.c.b16 %v559, %v555
    %v912 = vpack.c.b16 %v564, %v560
    %v913 = vpack.c.b16 %v565, %v561
    %v914 = vpack.c.b16 %v566, %v562
    %v915 = vpack.c.b16 %v567, %v563
    %v916 = vpack.c.b16 %v572, %v568
    %v917 = vpack.c.b16 %v573, %v569
    %v918 = vpack.c.b16 %v574, %v570
    %v919 = vpack.c.b16 %v575, %v571
    %v920 = vpack.c.b16 %v580, %v576
    %v921 = vpack.c.b16 %v581, %v577
    %v922 = vpack.c.b16 %v582, %v578
    %v923 = vpack.c.b16 %v583, %v579
    %v924 = vpack.c.b16 %v588, %v584
    %v925 = vpack.c.b16 %v589, %v585
    %v926 = vpack.c.b16 %v590, %v586
    %v927 = vpack.c.b16 %v591, %v587
    %v928 = vpack.c.b16 %v596, %v592
    %v929 = vpack.c.b16 %v597, %v593
    %v930 = vpack.c.b16 %v598, %v594
    %v931 = vpack.c.b16 %v599, %v595
    %v932 = vpack.c.b16 %v604, %v600
    %v933 = vpack.c.b16 %v605, %v601
    %v934 = vpack.c.b16 %v606, %v602
    %v935 = vpack.c.b16 %v607, %v603
    %v936 = vpack.c.b16 %v612, %v608
    %v937 = vpack.c.b16 %v613, %v609
    %v938 = vpack.c.b16 %v614, %v610
    %v939 = vpack.c.b16 %v615, %v611
    %v940 = vpack.c.b16 %v620, %v616
    %v941 = vpack.c.b16 %v621, %v617
    %v942 = vpack.c.b16 %v622, %v618
    %v943 = vpack.c.b16 %v623, %v619
    %v944 = vpack.c.b16 %v628, %v624
    %v945 = vpack.c.b16 %v629, %v625
    %v946 = vpack.c.b16 %v630, %v626
    %v947 = vpack.c.b16 %v631, %v627
    %v948 = vpack.c.b16 %v636, %v632
    %v949 = vpack.c.b16 %v637, %v633
    %v950 = vpack.c.b16 %v638, %v634
    %v951 = vpack.c.b16 %v639, %v635
    %v952 = vpack.c.b16 %v644, %v640
    %v953 = vpack.c.b16 %v645, %v641
    %v954 = vpack.c.b16 %v646, %v642
    %v955 = vpack.c.b16 %v647, %v643
    %v956 = vpack.c.b16 %v652, %v648
    %v957 = vpack.c.b16 %v653, %v649
    %v958 = vpack.c.b16 %v654, %v650
    %v959 = vpack.c.b16 %v655, %v651
    %v960 = vpack.c.b16 %v660, %v656
    %v961 = vpack.c.b16 %v661, %v657
    %v962 = vpack.c.b16 %v662, %v658
    %v963 = vpack.c.b16 %v663, %v659
    %v964 = vpack.c.b16 %v668, %v664
    %v965 = vpack.c.b16 %v669, %v665
    %v966 = vpack.c.b16 %v670, %v666
    %v967 = vpack.c.b16 %v671, %v667
    %v968 = vpack.c.b16 %v676, %v672
    %v969 = vpack.c.b16 %v677, %v673
    %v970 = vpack.c.b16 %v678, %v674
    %v971 = vpack.c.b16 %v679, %v675
    %v972 = vpack.c.b16 %v684, %v680
    %v973 = vpack.c.b16 %v685, %v681
    %v974 = vpack.c.b16 %v686, %v682
    %v975 = vpack.c.b16 %v687, %v683
    %v976 = vpack.c.b16 %v692, %v688
    %v977 = vpack.c.b16 %v693, %v689
    %v978 = vpack.c.b16 %v694, %v690
    %v979 = vpack.c.b16 %v695, %v691
    %v980 = vpack.c.b16 %v700, %v696
    %v981 = vpack.c.b16 %v701, %v697
    %v982 = vpack.c.b16 %v702, %v698
    %v983 = vpack.c.b16 %v703, %v699
    %v984 = vpack.c.b16 %v708, %v704
    %v985 = vpack.c.b16 %v709, %v705
    %v986 = vpack.c.b16 %v710, %v706
    %v987 = vpack.c.b16 %v711, %v707
    %v988 = vpack.c.b16 %v716, %v712
    %v989 = vpack.c.b16 %v717, %v713
    %v990 = vpack.c.b16 %v718, %v714
    %v991 = vpack.c.b16 %v719, %v715
    %v992 = vpack.c.b16 %v724, %v720
    %v993 = vpack.c.b16 %v725, %v721
    %v994 = vpack.c.b16 %v726, %v722
    %v995 = vpack.c.b16 %v727, %v723
    %v996 = vpack.c.b16 %v732, %v728
    %v997 = vpack.c.b16 %v733, %v729
    %v998 = vpack.c.b16 %v734, %v730
    %v999 = vpack.c.b16 %v735, %v731
    %v1000 = vpack.c.b16 %v740, %v736
    %v1001 = vpack.c.b16 %v741, %v737
    %v1002 = vpack.c.b16 %v742, %v738
    %v1003 = vpack.c.b16 %v743, %v739
    %v1004 = vpack.c.b16 %v748, %v744
    %v1005 = vpack.c.b16 %v749, %v745
    %v1006 = vpack.c.b16 %v750, %v746
    %v1007 = vpack.c.b16 %v751, %v747
    %v1008 = vpack.c.b16 %v756, %v752
    %v1009 = vpack.c.b16 %v757, %v753
    %v1010 = vpack.c.b16 %v758, %v754
    %v1011 = vpack.c.b16 %v759, %v755
    %v1012 = vpack.c.b16 %v764, %v760
    %v1013 = vpack.c.b16 %v765, %v761
    %v1014 = vpack.c.b16 %v766, %v762
    %v1015 = vpack.c.b16 %v767, %v763
    %v1016 = vpack.c.b16 %v772, %v768
    %v1017 = vpack.c.b16 %v773, %v769
    %v1018 = vpack.c.b16 %v774, %v770
    %v1019 = vpack.c.b16 %v775, %v771
    %v1020 = vpack.c.b16 %v780, %v776
    %v1021 = vpack.c.b16 %v781, %v777
    %v1022 = vpack.c.b16 %v782, %v778
    %v1023 = vpack.c.b16 %v783, %v779
    %v1024 = vpack.c.b16 %v788, %v784
    %v1025 = vpack.c.b16 %v789, %v785
    %v1026 = vpack.c.b16 %v790, %v786
    %v1027 = vpack.c.b16 %v791, %v787
    %v1028 = vpack.c.b16 %v796, %v792
    %v1029 = vpack.c.b16 %v797, %v793
    %v1030 = vpack.c.b16 %v798, %v794
    %v1031 = vpack.c.b16 %v799, %v795
    %v1032 = vpack.c.b16 %v804, %v800
    %v1033 = vpack.c.b16 %v805, %v801
    %v1034 = vpack.c.b16 %v806, %v802
    %v1035 = vpack.c.b16 %v807, %v803
    %v1036 = vpack.c.b16 %v812, %v808
    %v1037 = vpack.c.b16 %v813, %v809
    %v1038 = vpack.c.b16 %v814, %v810
    %v1039 = vpack.c.b16 %v815, %v811
    %v1040 = vpack.c.b16 %v820, %v816
    %v1041 = vpack.c.b16 %v821, %v817
    %v1042 = vpack.c.b16 %v822, %v818
    %v1043 = vpack.c.b16 %v823, %v819
    %v1044 = vpack.c.b16 %v828, %v824
    %v1045 = vpack.c.b16 %v829, %v825
    %v1046 = vpack.c.b16 %v830, %v826
    %v1047 = vpack.c.b16 %v831, %v827
    %v1048 = vpack.c.b16 %v836, %v832
    %v1049 = vpack.c.b16 %v837, %v833
    %v1050 = vpack.c.b16 %v838, %v834
    %v1051 = vpack.c.b16 %v839, %v835
    %v1052 = vpack.c.b16 %v844, %v840
    %v1053 = vpack.c.b16 %v845, %v841
    %v1054 = vpack.c.b16 %v846, %v842
    %v1055 = vpack.c.b16 %v847, %v843
    %v1056 = vpack.c.b16 %v852, %v848
    %v1057 = vpack.c.b16 %v853, %v849
    %v1058 = vpack.c.b16 %v854, %v850
    %v1059 = vpack.c.b16 %v855, %v851
    %v1060 = vpack.c.b16 %v860, %v856
    %v1061 = vpack.c.b16 %v861, %v857
    %v1062 = vpack.c.b16 %v862, %v858
    %v1063 = vpack.c.b16 %v863, %v859
    %v1064 = vpack.c.b16 %v868, %v864
    %v1065 = vpack.c.b16 %v869, %v865
    %v1066 = vpack.c.b16 %v870, %v866
    %v1067 = vpack.c.b16 %v871, %v867
    %vm1264 = vcmask 130048
    %v1266 = vsel %vm1264, %v65, 0
    %1268 = vmatprep.subr.bf16.mxu0 %v873
    %1269 = vmatpush1.bf16.msra.mxu0 %v872
    %1270 = vmatprep.subr.bf16.mxu0 %v877
    %1271 = vmatpush1.bf16.msra.mxu0 %v876
    %1272 = vmatprep.subr.bf16.mxu0 %v881
    %1273 = vmatpush1.bf16.msra.mxu0 %v880
    %1274 = vmatprep.subr.bf16.mxu0 %v885
    %1275 = vmatpush1.bf16.msra.mxu0 %v884
    %1276 = vmatprep.subr.bf16.mxu0 %v889
    %1277 = vmatpush1.bf16.msra.mxu0 %v888
    %1278 = vmatprep.subr.bf16.mxu0 %v893
    %1279 = vmatpush1.bf16.msra.mxu0 %v892
    %1280 = vmatprep.subr.bf16.mxu0 %v897
    %1281 = vmatpush1.bf16.msra.mxu0 %v896
    %1282 = vmatprep.subr.bf16.mxu0 %v901
    %1283 = vmatpush1.bf16.msra.mxu0 %v900
    %1284 = vmatprep.subr.bf16.mxu0 %v905
    %1285 = vmatpush1.bf16.msra.mxu0 %v904
    %1286 = vmatprep.subr.bf16.mxu0 %v909
    %1287 = vmatpush1.bf16.msra.mxu0 %v908
    %1288 = vmatprep.subr.bf16.mxu0 %v913
    %1289 = vmatpush1.bf16.msra.mxu0 %v912
    %1290 = vmatprep.subr.bf16.mxu0 %v917
    %1291 = vmatpush1.bf16.msra.mxu0 %v916
    %1292 = vmatprep.subr.bf16.mxu0 %v921
    %1293 = vmatpush1.bf16.msra.mxu0 %v920
    %1294 = vmatprep.subr.bf16.mxu0 %v925
    %1295 = vmatpush1.bf16.msra.mxu0 %v924
    %1296 = vmatprep.subr.bf16.mxu0 %v929
    %1297 = vmatpush1.bf16.msra.mxu0 %v928
    %1298 = vmatprep.subr.bf16.mxu0 %v933
    %1299 = vmatpush1.bf16.msra.mxu0 %v932
    %1300 = vmatprep.mubr.bf16.mxu0 %v60
    %1301 = vmatmul.mubr.bf16.gmra.mrb[0].mxu0 %v59
    %v1302 = vpop.f32.mrb[0].mxu0
    %v1303 = vadd.f32 %v267, %v1302
    %v1304 = vpop.f32.mrb[0].mxu0
    %v1305 = vadd.f32 %v271, %v1304
    %v1306 = vpop.f32.mrb[0].mxu0
    %v1307 = vpop.f32.mrb[0].mxu0
    %1308 = vdwg.mxu0
    %1309 = vmatprep.subr.bf16.mxu0 %v937
    %1310 = vmatpush1.bf16.msra.mxu0 %v936
    %1311 = vmatprep.subr.bf16.mxu0 %v941
    %1312 = vmatpush1.bf16.msra.mxu0 %v940
    %1313 = vmatprep.subr.bf16.mxu0 %v945
    %1314 = vmatpush1.bf16.msra.mxu0 %v944
    %1315 = vmatprep.subr.bf16.mxu0 %v949
    %1316 = vmatpush1.bf16.msra.mxu0 %v948
    %1317 = vmatprep.subr.bf16.mxu0 %v953
    %1318 = vmatpush1.bf16.msra.mxu0 %v952
    %1319 = vmatprep.subr.bf16.mxu0 %v957
    %1320 = vmatpush1.bf16.msra.mxu0 %v956
    %1321 = vmatprep.subr.bf16.mxu0 %v961
    %1322 = vmatpush1.bf16.msra.mxu0 %v960
    %1323 = vmatprep.subr.bf16.mxu0 %v965
    %1324 = vmatpush1.bf16.msra.mxu0 %v964
    %1325 = vmatprep.subr.bf16.mxu0 %v969
    %1326 = vmatpush1.bf16.msra.mxu0 %v968
    %1327 = vmatprep.subr.bf16.mxu0 %v973
    %1328 = vmatpush1.bf16.msra.mxu0 %v972
    %1329 = vmatprep.subr.bf16.mxu0 %v977
    %1330 = vmatpush1.bf16.msra.mxu0 %v976
    %1331 = vmatprep.subr.bf16.mxu0 %v981
    %1332 = vmatpush1.bf16.msra.mxu0 %v980
    %1333 = vmatprep.subr.bf16.mxu0 %v985
    %1334 = vmatpush1.bf16.msra.mxu0 %v984
    %1335 = vmatprep.subr.bf16.mxu0 %v989
    %1336 = vmatpush1.bf16.msra.mxu0 %v988
    %1337 = vmatprep.subr.bf16.mxu0 %v993
    %1338 = vmatpush1.bf16.msra.mxu0 %v992
    %1339 = vmatprep.subr.bf16.mxu0 %v997
    %1340 = vmatpush1.bf16.msra.mxu0 %v996
    %1341 = vmatprep.mubr.bf16.mxu0 %v62
    %1342 = vmatmul.mubr.bf16.gmra.mrb[0].mxu0 %v61
    %v1343 = vpop.f32.mrb[0].mxu0
    %v1344 = vadd.f32 %v1303, %v1343
    %v1345 = vpop.f32.mrb[0].mxu0
    %v1346 = vadd.f32 %v1305, %v1345
    %v1347 = vpop.f32.mrb[0].mxu0
    %v1348 = vpop.f32.mrb[0].mxu0
    %1349 = vdwg.mxu0
    %1350 = vmatprep.subr.bf16.mxu0 %v1001
    %1351 = vmatpush1.bf16.msra.mxu0 %v1000
    %1352 = vmatprep.subr.bf16.mxu0 %v1005
    %1353 = vmatpush1.bf16.msra.mxu0 %v1004
    %1354 = vmatprep.subr.bf16.mxu0 %v1009
    %1355 = vmatpush1.bf16.msra.mxu0 %v1008
    %1356 = vmatprep.subr.bf16.mxu0 %v1013
    %1357 = vmatpush1.bf16.msra.mxu0 %v1012
    %1358 = vmatprep.subr.bf16.mxu0 %v1017
    %1359 = vmatpush1.bf16.msra.mxu0 %v1016
    %1360 = vmatprep.subr.bf16.mxu0 %v1021
    %1361 = vmatpush1.bf16.msra.mxu0 %v1020
    %1362 = vmatprep.subr.bf16.mxu0 %v1025
    %1363 = vmatpush1.bf16.msra.mxu0 %v1024
    %1364 = vmatprep.subr.bf16.mxu0 %v1029
    %1365 = vmatpush1.bf16.msra.mxu0 %v1028
    %1366 = vmatprep.subr.bf16.mxu0 %v1033
    %1367 = vmatpush1.bf16.msra.mxu0 %v1032
    %1368 = vmatprep.subr.bf16.mxu0 %v1037
    %1369 = vmatpush1.bf16.msra.mxu0 %v1036
    %1370 = vmatprep.subr.bf16.mxu0 %v1041
    %1371 = vmatpush1.bf16.msra.mxu0 %v1040
    %1372 = vmatprep.subr.bf16.mxu0 %v1045
    %1373 = vmatpush1.bf16.msra.mxu0 %v1044
    %1374 = vmatprep.subr.bf16.mxu0 %v1049
    %1375 = vmatpush1.bf16.msra.mxu0 %v1048
    %1376 = vmatprep.subr.bf16.mxu0 %v1053
    %1377 = vmatpush1.bf16.msra.mxu0 %v1052
    %1378 = vmatprep.subr.bf16.mxu0 %v1057
    %1379 = vmatpush1.bf16.msra.mxu0 %v1056
    %1380 = vmatprep.subr.bf16.mxu0 %v1061
    %1381 = vmatpush1.bf16.msra.mxu0 %v1060
    %1382 = vmatprep.mubr.bf16.mxu0 %v64
    %1383 = vmatmul.mubr.bf16.gmra.mrb[0].mxu0 %v63
    %v1384 = vpop.f32.mrb[0].mxu0
    %v1385 = vadd.f32 %v1344, %v1384
    %v1386 = vpop.f32.mrb[0].mxu0
    %v1387 = vadd.f32 %v1346, %v1386
    %v1388 = vpop.f32.mrb[0].mxu0
    %v1389 = vpop.f32.mrb[0].mxu0
    %1390 = vdwg.mxu0
    %1391 = vmatprep.subr.bf16.mxu0 %v1065
    %1392 = vmatpush1.bf16.msra.mxu0 %v1064
    %1393 = vmatprep.subr.bf16.mxu0 0
    %1394 = vmatpush1.bf16.msra.mxu0 0
    %1395 = vmatprep.subr.bf16.mxu0 0
    %1396 = vmatpush1.bf16.msra.mxu0 0
    %1397 = vmatprep.subr.bf16.mxu0 0
    %1398 = vmatpush1.bf16.msra.mxu0 0
    %1399 = vmatprep.subr.bf16.mxu0 0
    %1400 = vmatpush1.bf16.msra.mxu0 0
    %1401 = vmatprep.subr.bf16.mxu0 0
    %1402 = vmatpush1.bf16.msra.mxu0 0
    %1403 = vmatprep.subr.bf16.mxu0 0
    %1404 = vmatpush1.bf16.msra.mxu0 0
    %1405 = vmatprep.subr.bf16.mxu0 0
    %1406 = vmatpush1.bf16.msra.mxu0 0
    %1407 = vmatprep.subr.bf16.mxu0 0
    %1408 = vmatpush1.bf16.msra.mxu0 0
    %1409 = vmatprep.subr.bf16.mxu0 0
    %1410 = vmatpush1.bf16.msra.mxu0 0
    %1411 = vmatprep.subr.bf16.mxu0 0
    %1412 = vmatpush1.bf16.msra.mxu0 0
    %1413 = vmatprep.subr.bf16.mxu0 0
    %1414 = vmatpush1.bf16.msra.mxu0 0
    %1415 = vmatprep.subr.bf16.mxu0 0
    %1416 = vmatpush1.bf16.msra.mxu0 0
    %1417 = vmatprep.subr.bf16.mxu0 0
    %1418 = vmatpush1.bf16.msra.mxu0 0
    %1419 = vmatprep.subr.bf16.mxu0 0
    %1420 = vmatpush1.bf16.msra.mxu0 0
    %1421 = vmatprep.subr.bf16.mxu0 0
    %1422 = vmatpush1.bf16.msra.mxu0 0
    %1423 = vmatprep.mubr.bf16.mxu0 0
    %1424 = vmatmul.mubr.bf16.gmra.mrb[0].mxu0 %v1266
    %v1425 = vpop.f32.mrb[0].mxu0
    %v1426 = vadd.f32 %v1385, %v1425
    %v1427 = vpop.f32.mrb[0].mxu0
    %v1428 = vadd.f32 %v1387, %v1427
    %v1429 = vpop.f32.mrb[0].mxu0
    %v1430 = vpop.f32.mrb[0].mxu0
    %1431 = vdwg.mxu0
    %1432 = vmatprep.subr.bf16.mxu0 %v875
    %1433 = vmatpush1.bf16.msra.mxu0 %v874
    %1434 = vmatprep.subr.bf16.mxu0 %v879
    %1435 = vmatpush1.bf16.msra.mxu0 %v878
    %1436 = vmatprep.subr.bf16.mxu0 %v883
    %1437 = vmatpush1.bf16.msra.mxu0 %v882
    %1438 = vmatprep.subr.bf16.mxu0 %v887
    %1439 = vmatpush1.bf16.msra.mxu0 %v886
    %1440 = vmatprep.subr.bf16.mxu0 %v891
    %1441 = vmatpush1.bf16.msra.mxu0 %v890
    %1442 = vmatprep.subr.bf16.mxu0 %v895
    %1443 = vmatpush1.bf16.msra.mxu0 %v894
    %1444 = vmatprep.subr.bf16.mxu0 %v899
    %1445 = vmatpush1.bf16.msra.mxu0 %v898
    %1446 = vmatprep.subr.bf16.mxu0 %v903
    %1447 = vmatpush1.bf16.msra.mxu0 %v902
    %1448 = vmatprep.subr.bf16.mxu0 %v907
    %1449 = vmatpush1.bf16.msra.mxu0 %v906
    %1450 = vmatprep.subr.bf16.mxu0 %v911
    %1451 = vmatpush1.bf16.msra.mxu0 %v910
    %1452 = vmatprep.subr.bf16.mxu0 %v915
    %1453 = vmatpush1.bf16.msra.mxu0 %v914
    %1454 = vmatprep.subr.bf16.mxu0 %v919
    %1455 = vmatpush1.bf16.msra.mxu0 %v918
    %1456 = vmatprep.subr.bf16.mxu0 %v923
    %1457 = vmatpush1.bf16.msra.mxu0 %v922
    %1458 = vmatprep.subr.bf16.mxu0 %v927
    %1459 = vmatpush1.bf16.msra.mxu0 %v926
    %1460 = vmatprep.subr.bf16.mxu0 %v931
    %1461 = vmatpush1.bf16.msra.mxu0 %v930
    %1462 = vmatprep.subr.bf16.mxu0 %v935
    %1463 = vmatpush1.bf16.msra.mxu0 %v934
    %1464 = vmatprep.mubr.bf16.mxu0 %v60
    %1465 = vmatmul.mubr.bf16.gmra.mrb[0].mxu0 %v59
    %v1466 = vpop.f32.mrb[0].mxu0
    %v1467 = vadd.f32 %v275, %v1466
    %v1468 = vpop.f32.mrb[0].mxu0
    %v1469 = vadd.f32 %v279, %v1468
    %v1470 = vpop.f32.mrb[0].mxu0
    %v1471 = vpop.f32.mrb[0].mxu0
    %1472 = vdwg.mxu0
    %1473 = vmatprep.subr.bf16.mxu0 %v939
    %1474 = vmatpush1.bf16.msra.mxu0 %v938
    %1475 = vmatprep.subr.bf16.mxu0 %v943
    %1476 = vmatpush1.bf16.msra.mxu0 %v942
    %1477 = vmatprep.subr.bf16.mxu0 %v947
    %1478 = vmatpush1.bf16.msra.mxu0 %v946
    %1479 = vmatprep.subr.bf16.mxu0 %v951
    %1480 = vmatpush1.bf16.msra.mxu0 %v950
    %1481 = vmatprep.subr.bf16.mxu0 %v955
    %1482 = vmatpush1.bf16.msra.mxu0 %v954
    %1483 = vmatprep.subr.bf16.mxu0 %v959
    %1484 = vmatpush1.bf16.msra.mxu0 %v958
    %1485 = vmatprep.subr.bf16.mxu0 %v963
    %1486 = vmatpush1.bf16.msra.mxu0 %v962
    %1487 = vmatprep.subr.bf16.mxu0 %v967
    %1488 = vmatpush1.bf16.msra.mxu0 %v966
    %1489 = vmatprep.subr.bf16.mxu0 %v971
    %1490 = vmatpush1.bf16.msra.mxu0 %v970
    %1491 = vmatprep.subr.bf16.mxu0 %v975
    %1492 = vmatpush1.bf16.msra.mxu0 %v974
    %1493 = vmatprep.subr.bf16.mxu0 %v979
    %1494 = vmatpush1.bf16.msra.mxu0 %v978
    %1495 = vmatprep.subr.bf16.mxu0 %v983
    %1496 = vmatpush1.bf16.msra.mxu0 %v982
    %1497 = vmatprep.subr.bf16.mxu0 %v987
    %1498 = vmatpush1.bf16.msra.mxu0 %v986
    %1499 = vmatprep.subr.bf16.mxu0 %v991
    %1500 = vmatpush1.bf16.msra.mxu0 %v990
    %1501 = vmatprep.subr.bf16.mxu0 %v995
    %1502 = vmatpush1.bf16.msra.mxu0 %v994
    %1503 = vmatprep.subr.bf16.mxu0 %v999
    %1504 = vmatpush1.bf16.msra.mxu0 %v998
    %1505 = vmatprep.mubr.bf16.mxu0 %v62
    %1506 = vmatmul.mubr.bf16.gmra.mrb[0].mxu0 %v61
    %v1507 = vpop.f32.mrb[0].mxu0
    %v1508 = vadd.f32 %v1467, %v1507
    %v1509 = vpop.f32.mrb[0].mxu0
    %v1510 = vadd.f32 %v1469, %v1509
    %v1511 = vpop.f32.mrb[0].mxu0
    %v1512 = vpop.f32.mrb[0].mxu0
    %1513 = vdwg.mxu0
    %1514 = vmatprep.subr.bf16.mxu0 %v1003
    %1515 = vmatpush1.bf16.msra.mxu0 %v1002
    %1516 = vmatprep.subr.bf16.mxu0 %v1007
    %1517 = vmatpush1.bf16.msra.mxu0 %v1006
    %1518 = vmatprep.subr.bf16.mxu0 %v1011
    %1519 = vmatpush1.bf16.msra.mxu0 %v1010
    %1520 = vmatprep.subr.bf16.mxu0 %v1015
    %1521 = vmatpush1.bf16.msra.mxu0 %v1014
    %1522 = vmatprep.subr.bf16.mxu0 %v1019
    %1523 = vmatpush1.bf16.msra.mxu0 %v1018
    %1524 = vmatprep.subr.bf16.mxu0 %v1023
    %1525 = vmatpush1.bf16.msra.mxu0 %v1022
    %1526 = vmatprep.subr.bf16.mxu0 %v1027
    %1527 = vmatpush1.bf16.msra.mxu0 %v1026
    %1528 = vmatprep.subr.bf16.mxu0 %v1031
    %1529 = vmatpush1.bf16.msra.mxu0 %v1030
    %1530 = vmatprep.subr.bf16.mxu0 %v1035
    %1531 = vmatpush1.bf16.msra.mxu0 %v1034
    %1532 = vmatprep.subr.bf16.mxu0 %v1039
    %1533 = vmatpush1.bf16.msra.mxu0 %v1038
    %1534 = vmatprep.subr.bf16.mxu0 %v1043
    %1535 = vmatpush1.bf16.msra.mxu0 %v1042
    %1536 = vmatprep.subr.bf16.mxu0 %v1047
    %1537 = vmatpush1.bf16.msra.mxu0 %v1046
    %1538 = vmatprep.subr.bf16.mxu0 %v1051
    %1539 = vmatpush1.bf16.msra.mxu0 %v1050
    %1540 = vmatprep.subr.bf16.mxu0 %v1055
    %1541 = vmatpush1.bf16.msra.mxu0 %v1054
    %1542 = vmatprep.subr.bf16.mxu0 %v1059
    %1543 = vmatpush1.bf16.msra.mxu0 %v1058
    %1544 = vmatprep.subr.bf16.mxu0 %v1063
    %1545 = vmatpush1.bf16.msra.mxu0 %v1062
    %1546 = vmatprep.mubr.bf16.mxu0 %v64
    %1547 = vmatmul.mubr.bf16.gmra.mrb[0].mxu0 %v63
    %v1548 = vpop.f32.mrb[0].mxu0
    %v1549 = vadd.f32 %v1508, %v1548
    %v1550 = vpop.f32.mrb[0].mxu0
    %v1551 = vadd.f32 %v1510, %v1550
    %v1552 = vpop.f32.mrb[0].mxu0
    %v1553 = vpop.f32.mrb[0].mxu0
    %1554 = vdwg.mxu0
    %1555 = vmatprep.subr.bf16.mxu0 %v1067
    %1556 = vmatpush1.bf16.msra.mxu0 %v1066
    %1557 = vmatprep.subr.bf16.mxu0 0
    %1558 = vmatpush1.bf16.msra.mxu0 0
    %1559 = vmatprep.subr.bf16.mxu0 0
    %1560 = vmatpush1.bf16.msra.mxu0 0
    %1561 = vmatprep.subr.bf16.mxu0 0
    %1562 = vmatpush1.bf16.msra.mxu0 0
    %1563 = vmatprep.subr.bf16.mxu0 0
    %1564 = vmatpush1.bf16.msra.mxu0 0
    %1565 = vmatprep.subr.bf16.mxu0 0
    %1566 = vmatpush1.bf16.msra.mxu0 0
    %1567 = vmatprep.subr.bf16.mxu0 0
    %1568 = vmatpush1.bf16.msra.mxu0 0
    %1569 = vmatprep.subr.bf16.mxu0 0
    %1570 = vmatpush1.bf16.msra.mxu0 0
    %1571 = vmatprep.subr.bf16.mxu0 0
    %1572 = vmatpush1.bf16.msra.mxu0 0
    %1573 = vmatprep.subr.bf16.mxu0 0
    %1574 = vmatpush1.bf16.msra.mxu0 0
    %1575 = vmatprep.subr.bf16.mxu0 0
    %1576 = vmatpush1.bf16.msra.mxu0 0
    %1577 = vmatprep.subr.bf16.mxu0 0
    %1578 = vmatpush1.bf16.msra.mxu0 0
    %1579 = vmatprep.subr.bf16.mxu0 0
    %1580 = vmatpush1.bf16.msra.mxu0 0
    %1581 = vmatprep.subr.bf16.mxu0 0
    %1582 = vmatpush1.bf16.msra.mxu0 0
    %1583 = vmatprep.subr.bf16.mxu0 0
    %1584 = vmatpush1.bf16.msra.mxu0 0
    %1585 = vmatprep.subr.bf16.mxu0 0
    %1586 = vmatpush1.bf16.msra.mxu0 0
    %1587 = vmatprep.mubr.bf16.mxu0 0
    %1588 = vmatmul.mubr.bf16.gmra.mrb[0].mxu0 %v1266
    %v1589 = vpop.f32.mrb[0].mxu0
    %v1590 = vadd.f32 %v1549, %v1589
    %v1591 = vpop.f32.mrb[0].mxu0
    %v1592 = vadd.f32 %v1551, %v1591
    %v1593 = vpop.f32.mrb[0].mxu0
    %v1594 = vpop.f32.mrb[0].mxu0
    %1595 = vdwg.mxu0
    %v1596 = vmax.f32 %v1426, 0.0
    %v1597 = vmax.f32 %v1428, 0.0
    %v1598 = vmax.f32 %v1590, 0.0
    %v1599 = vmax.f32 %v1592, 0.0
    %v1600 = vpack.c.bf16 %v1596, %v1596
    %v1601 = vpack.c.bf16 %v1597, %v1597
    %v1602 = vpack.c.bf16 %v1598, %v1598
    %v1603 = vpack.c.bf16 %v1599, %v1599
    %v1604 = vld [vmem:[%s4] sm:$0xff]
    %v1605 = vld [vmem:[%s4 + $0x8] sm:$0xff]
    %v1606 = vld [vmem:[%s4 + $0x10] sm:$0xff]
    %v1607 = vld [vmem:[%s4 + $0x18] sm:$0xff]
    %v1608 = vld [vmem:[%s4 + $0x20] sm:$0xff]
    %v1609 = vld [vmem:[%s4 + $0x28] sm:$0xff]
    %v1610 = vld [vmem:[%s4 + $0x30] sm:$0xff]
    %v1611 = vld [vmem:[%s4 + $0x38] sm:$0xff]
    %v1612 = vld [vmem:[%s4 + $0x40] sm:$0xff]
    %v1613 = vld [vmem:[%s4 + $0x48] sm:$0xff]
    %v1614 = vld [vmem:[%s4 + $0x50] sm:$0xff]
    %v1615 = vld [vmem:[%s4 + $0x58] sm:$0xff]
    %v1616 = vld [vmem:[%s4 + $0x60] sm:$0xff]
    %v1617 = vld [vmem:[%s4 + $0x68] sm:$0xff]
    %v1618 = vld [vmem:[%s4 + $0x70] sm:$0xff]
    %v1619 = vld [vmem:[%s4 + $0x78] sm:$0xff]
    %v1620 = vld [vmem:[%s4 + $0x80] sm:$0xff]
    %v1621 = vld [vmem:[%s4 + $0x88] sm:$0xff]
    %v1622 = vld [vmem:[%s4 + $0x90] sm:$0xff]
    %v1623 = vld [vmem:[%s4 + $0x98] sm:$0xff]
    %v1624 = vld [vmem:[%s4 + $0xa0] sm:$0xff]
    %v1625 = vld [vmem:[%s4 + $0xa8] sm:$0xff]
    %v1626 = vld [vmem:[%s4 + $0xb0] sm:$0xff]
    %v1627 = vld [vmem:[%s4 + $0xb8] sm:$0xff]
    %v1628 = vld [vmem:[%s4 + $0xc0] sm:$0xff]
    %v1629 = vld [vmem:[%s4 + $0xc8] sm:$0xff]
    %v1630 = vld [vmem:[%s4 + $0xd0] sm:$0xff]
    %v1631 = vld [vmem:[%s4 + $0xd8] sm:$0xff]
    %v1632 = vld [vmem:[%s4 + $0xe0] sm:$0xff]
    %v1633 = vld [vmem:[%s4 + $0xe8] sm:$0xff]
    %v1634 = vld [vmem:[%s4 + $0xf0] sm:$0xff]
    %v1635 = vld [vmem:[%s4 + $0xf8] sm:$0xff]
    %v1636 = vld [vmem:[%s4 + $0x100] sm:$0xff]
    %v1637 = vld [vmem:[%s4 + $0x108] sm:$0xff]
    %v1638 = vld [vmem:[%s4 + $0x110] sm:$0xff]
    %v1639 = vld [vmem:[%s4 + $0x118] sm:$0xff]
    %v1640 = vld [vmem:[%s4 + $0x120] sm:$0xff]
    %v1641 = vld [vmem:[%s4 + $0x128] sm:$0xff]
    %v1642 = vld [vmem:[%s4 + $0x130] sm:$0xff]
    %v1643 = vld [vmem:[%s4 + $0x138] sm:$0xff]
    %v1644 = vld [vmem:[%s4 + $0x140] sm:$0xff]
    %v1645 = vld [vmem:[%s4 + $0x148] sm:$0xff]
    %v1646 = vld [vmem:[%s4 + $0x150] sm:$0xff]
    %v1647 = vld [vmem:[%s4 + $0x158] sm:$0xff]
    %v1648 = vld [vmem:[%s4 + $0x160] sm:$0xff]
    %v1649 = vld [vmem:[%s4 + $0x168] sm:$0xff]
    %v1650 = vld [vmem:[%s4 + $0x170] sm:$0xff]
    %v1651 = vld [vmem:[%s4 + $0x178] sm:$0xff]
    %v1652 = vld [vmem:[%s4 + $0x180] sm:$0xff]
    %v1653 = vld [vmem:[%s4 + $0x188] sm:$0xff]
    %v1654 = vld [vmem:[%s4 + $0x190] sm:$0xff]
    %v1655 = vld [vmem:[%s4 + $0x198] sm:$0xff]
    %v1656 = vld [vmem:[%s4 + $0x1a0] sm:$0xff]
    %v1657 = vld [vmem:[%s4 + $0x1a8] sm:$0xff]
    %v1658 = vld [vmem:[%s4 + $0x1b0] sm:$0xff]
    %v1659 = vld [vmem:[%s4 + $0x1b8] sm:$0xff]
    %v1660 = vld [vmem:[%s4 + $0x1c0] sm:$0xff]
    %v1661 = vld [vmem:[%s4 + $0x1c8] sm:$0xff]
    %v1662 = vld [vmem:[%s4 + $0x1d0] sm:$0xff]
    %v1663 = vld [vmem:[%s4 + $0x1d8] sm:$0xff]
    %v1664 = vld [vmem:[%s4 + $0x1e0] sm:$0xff]
    %v1665 = vld [vmem:[%s4 + $0x1e8] sm:$0xff]
    %v1666 = vld [vmem:[%s4 + $0x1f0] sm:$0xff]
    %v1667 = vld [vmem:[%s4 + $0x1f8] sm:$0xff]
    %v1668 = vld [vmem:[%s5] sm:$0x3]
    %v1670 = vlaneseq
    %v1671 = vshrl.u32 %v1670, 7
    %v1672 = vsub.s32 0, %v1671
    %v1673 = vrot.slane %v1668, %v1672
    %v1674 = vlaneseq
    %v1675 = vshrl.u32 %v1674, 7
    %v1676 = vsub.s32 1, %v1675
    %v1677 = vrot.slane %v1668, %v1676
    %v1744 = vunpack.c.l.b16 %v1604
    %v1745 = vunpack.c.h.b16 %v1604
    %v1746 = vunpack.c.l.b16 %v1605
    %v1747 = vunpack.c.h.b16 %v1605
    %v1748 = vunpack.c.l.b16 %v1606
    %v1749 = vunpack.c.h.b16 %v1606
    %v1750 = vunpack.c.l.b16 %v1607
    %v1751 = vunpack.c.h.b16 %v1607
    %v1752 = vunpack.c.l.b16 %v1608
    %v1753 = vunpack.c.h.b16 %v1608
    %v1754 = vunpack.c.l.b16 %v1609
    %v1755 = vunpack.c.h.b16 %v1609
    %v1756 = vunpack.c.l.b16 %v1610
    %v1757 = vunpack.c.h.b16 %v1610
    %v1758 = vunpack.c.l.b16 %v1611
    %v1759 = vunpack.c.h.b16 %v1611
    %v1760 = vunpack.c.l.b16 %v1612
    %v1761 = vunpack.c.h.b16 %v1612
    %v1762 = vunpack.c.l.b16 %v1613
    %v1763 = vunpack.c.h.b16 %v1613
    %v1764 = vunpack.c.l.b16 %v1614
    %v1765 = vunpack.c.h.b16 %v1614
    %v1766 = vunpack.c.l.b16 %v1615
    %v1767 = vunpack.c.h.b16 %v1615
    %v1768 = vunpack.c.l.b16 %v1616
    %v1769 = vunpack.c.h.b16 %v1616
    %v1770 = vunpack.c.l.b16 %v1617
    %v1771 = vunpack.c.h.b16 %v1617
    %v1772 = vunpack.c.l.b16 %v1618
    %v1773 = vunpack.c.h.b16 %v1618
    %v1774 = vunpack.c.l.b16 %v1619
    %v1775 = vunpack.c.h.b16 %v1619
    %v1776 = vunpack.c.l.b16 %v1620
    %v1777 = vunpack.c.h.b16 %v1620
    %v1778 = vunpack.c.l.b16 %v1621
    %v1779 = vunpack.c.h.b16 %v1621
    %v1780 = vunpack.c.l.b16 %v1622
    %v1781 = vunpack.c.h.b16 %v1622
    %v1782 = vunpack.c.l.b16 %v1623
    %v1783 = vunpack.c.h.b16 %v1623
    %v1784 = vunpack.c.l.b16 %v1624
    %v1785 = vunpack.c.h.b16 %v1624
    %v1786 = vunpack.c.l.b16 %v1625
    %v1787 = vunpack.c.h.b16 %v1625
    %v1788 = vunpack.c.l.b16 %v1626
    %v1789 = vunpack.c.h.b16 %v1626
    %v1790 = vunpack.c.l.b16 %v1627
    %v1791 = vunpack.c.h.b16 %v1627
    %v1792 = vunpack.c.l.b16 %v1628
    %v1793 = vunpack.c.h.b16 %v1628
    %v1794 = vunpack.c.l.b16 %v1629
    %v1795 = vunpack.c.h.b16 %v1629
    %v1796 = vunpack.c.l.b16 %v1630
    %v1797 = vunpack.c.h.b16 %v1630
    %v1798 = vunpack.c.l.b16 %v1631
    %v1799 = vunpack.c.h.b16 %v1631
    %v1800 = vunpack.c.l.b16 %v1632
    %v1801 = vunpack.c.h.b16 %v1632
    %v1802 = vunpack.c.l.b16 %v1633
    %v1803 = vunpack.c.h.b16 %v1633
    %v1804 = vunpack.c.l.b16 %v1634
    %v1805 = vunpack.c.h.b16 %v1634
    %v1806 = vunpack.c.l.b16 %v1635
    %v1807 = vunpack.c.h.b16 %v1635
    %v1808 = vunpack.c.l.b16 %v1636
    %v1809 = vunpack.c.h.b16 %v1636
    %v1810 = vunpack.c.l.b16 %v1637
    %v1811 = vunpack.c.h.b16 %v1637
    %v1812 = vunpack.c.l.b16 %v1638
    %v1813 = vunpack.c.h.b16 %v1638
    %v1814 = vunpack.c.l.b16 %v1639
    %v1815 = vunpack.c.h.b16 %v1639
    %v1816 = vunpack.c.l.b16 %v1640
    %v1817 = vunpack.c.h.b16 %v1640
    %v1818 = vunpack.c.l.b16 %v1641
    %v1819 = vunpack.c.h.b16 %v1641
    %v1820 = vunpack.c.l.b16 %v1642
    %v1821 = vunpack.c.h.b16 %v1642
    %v1822 = vunpack.c.l.b16 %v1643
    %v1823 = vunpack.c.h.b16 %v1643
    %v1824 = vunpack.c.l.b16 %v1644
    %v1825 = vunpack.c.h.b16 %v1644
    %v1826 = vunpack.c.l.b16 %v1645
    %v1827 = vunpack.c.h.b16 %v1645
    %v1828 = vunpack.c.l.b16 %v1646
    %v1829 = vunpack.c.h.b16 %v1646
    %v1830 = vunpack.c.l.b16 %v1647
    %v1831 = vunpack.c.h.b16 %v1647
    %v1832 = vunpack.c.l.b16 %v1648
    %v1833 = vunpack.c.h.b16 %v1648
    %v1834 = vunpack.c.l.b16 %v1649
    %v1835 = vunpack.c.h.b16 %v1649
    %v1836 = vunpack.c.l.b16 %v1650
    %v1837 = vunpack.c.h.b16 %v1650
    %v1838 = vunpack.c.l.b16 %v1651
    %v1839 = vunpack.c.h.b16 %v1651
    %v1840 = vunpack.c.l.b16 %v1652
    %v1841 = vunpack.c.h.b16 %v1652
    %v1842 = vunpack.c.l.b16 %v1653
    %v1843 = vunpack.c.h.b16 %v1653
    %v1844 = vunpack.c.l.b16 %v1654
    %v1845 = vunpack.c.h.b16 %v1654
    %v1846 = vunpack.c.l.b16 %v1655
    %v1847 = vunpack.c.h.b16 %v1655
    %v1848 = vunpack.c.l.b16 %v1656
    %v1849 = vunpack.c.h.b16 %v1656
    %v1850 = vunpack.c.l.b16 %v1657
    %v1851 = vunpack.c.h.b16 %v1657
    %v1852 = vunpack.c.l.b16 %v1658
    %v1853 = vunpack.c.h.b16 %v1658
    %v1854 = vunpack.c.l.b16 %v1659
    %v1855 = vunpack.c.h.b16 %v1659
    %v1856 = vunpack.c.l.b16 %v1660
    %v1857 = vunpack.c.h.b16 %v1660
    %v1858 = vunpack.c.l.b16 %v1661
    %v1859 = vunpack.c.h.b16 %v1661
    %v1860 = vunpack.c.l.b16 %v1662
    %v1861 = vunpack.c.h.b16 %v1662
    %v1862 = vunpack.c.l.b16 %v1663
    %v1863 = vunpack.c.h.b16 %v1663
    %v1864 = vunpack.c.l.b16 %v1664
    %v1865 = vunpack.c.h.b16 %v1664
    %v1866 = vunpack.c.l.b16 %v1665
    %v1867 = vunpack.c.h.b16 %v1665
    %v1868 = vunpack.c.l.b16 %v1666
    %v1869 = vunpack.c.h.b16 %v1666
    %v1870 = vunpack.c.l.b16 %v1667
    %v1871 = vunpack.c.h.b16 %v1667
    %v1872 = vpack.c.b16 %v1746, %v1744
    %v1873 = vpack.c.b16 %v1747, %v1745
    %v1874 = vpack.c.b16 %v1750, %v1748
    %v1875 = vpack.c.b16 %v1751, %v1749
    %v1876 = vpack.c.b16 %v1754, %v1752
    %v1877 = vpack.c.b16 %v1755, %v1753
    %v1878 = vpack.c.b16 %v1758, %v1756
    %v1879 = vpack.c.b16 %v1759, %v1757
    %v1880 = vpack.c.b16 %v1762, %v1760
    %v1881 = vpack.c.b16 %v1763, %v1761
    %v1882 = vpack.c.b16 %v1766, %v1764
    %v1883 = vpack.c.b16 %v1767, %v1765
    %v1884 = vpack.c.b16 %v1770, %v1768
    %v1885 = vpack.c.b16 %v1771, %v1769
    %v1886 = vpack.c.b16 %v1774, %v1772
    %v1887 = vpack.c.b16 %v1775, %v1773
    %v1888 = vpack.c.b16 %v1778, %v1776
    %v1889 = vpack.c.b16 %v1779, %v1777
    %v1890 = vpack.c.b16 %v1782, %v1780
    %v1891 = vpack.c.b16 %v1783, %v1781
    %v1892 = vpack.c.b16 %v1786, %v1784
    %v1893 = vpack.c.b16 %v1787, %v1785
    %v1894 = vpack.c.b16 %v1790, %v1788
    %v1895 = vpack.c.b16 %v1791, %v1789
    %v1896 = vpack.c.b16 %v1794, %v1792
    %v1897 = vpack.c.b16 %v1795, %v1793
    %v1898 = vpack.c.b16 %v1798, %v1796
    %v1899 = vpack.c.b16 %v1799, %v1797
    %v1900 = vpack.c.b16 %v1802, %v1800
    %v1901 = vpack.c.b16 %v1803, %v1801
    %v1902 = vpack.c.b16 %v1806, %v1804
    %v1903 = vpack.c.b16 %v1807, %v1805
    %v1904 = vpack.c.b16 %v1810, %v1808
    %v1905 = vpack.c.b16 %v1811, %v1809
    %v1906 = vpack.c.b16 %v1814, %v1812
    %v1907 = vpack.c.b16 %v1815, %v1813
    %v1908 = vpack.c.b16 %v1818, %v1816
    %v1909 = vpack.c.b16 %v1819, %v1817
    %v1910 = vpack.c.b16 %v1822, %v1820
    %v1911 = vpack.c.b16 %v1823, %v1821
    %v1912 = vpack.c.b16 %v1826, %v1824
    %v1913 = vpack.c.b16 %v1827, %v1825
    %v1914 = vpack.c.b16 %v1830, %v1828
    %v1915 = vpack.c.b16 %v1831, %v1829
    %v1916 = vpack.c.b16 %v1834, %v1832
    %v1917 = vpack.c.b16 %v1835, %v1833
    %v1918 = vpack.c.b16 %v1838, %v1836
    %v1919 = vpack.c.b16 %v1839, %v1837
    %v1920 = vpack.c.b16 %v1842, %v1840
    %v1921 = vpack.c.b16 %v1843, %v1841
    %v1922 = vpack.c.b16 %v1846, %v1844
    %v1923 = vpack.c.b16 %v1847, %v1845
    %v1924 = vpack.c.b16 %v1850, %v1848
    %v1925 = vpack.c.b16 %v1851, %v1849
    %v1926 = vpack.c.b16 %v1854, %v1852
    %v1927 = vpack.c.b16 %v1855, %v1853
    %v1928 = vpack.c.b16 %v1858, %v1856
    %v1929 = vpack.c.b16 %v1859, %v1857
    %v1930 = vpack.c.b16 %v1862, %v1860
    %v1931 = vpack.c.b16 %v1863, %v1861
    %v1932 = vpack.c.b16 %v1866, %v1864
    %v1933 = vpack.c.b16 %v1867, %v1865
    %v1934 = vpack.c.b16 %v1870, %v1868
    %v1935 = vpack.c.b16 %v1871, %v1869
    %2000 = vmatprep.subr.bf16.mxu0 %v1873
    %2001 = vmatpush1.bf16.msra.mxu0 %v1872
    %2002 = vmatprep.subr.bf16.mxu0 %v1875
    %2003 = vmatpush1.bf16.msra.mxu0 %v1874
    %2004 = vmatprep.subr.bf16.mxu0 %v1877
    %2005 = vmatpush1.bf16.msra.mxu0 %v1876
    %2006 = vmatprep.subr.bf16.mxu0 %v1879
    %2007 = vmatpush1.bf16.msra.mxu0 %v1878
    %2008 = vmatprep.subr.bf16.mxu0 %v1881
    %2009 = vmatpush1.bf16.msra.mxu0 %v1880
    %2010 = vmatprep.subr.bf16.mxu0 %v1883
    %2011 = vmatpush1.bf16.msra.mxu0 %v1882
    %2012 = vmatprep.subr.bf16.mxu0 %v1885
    %2013 = vmatpush1.bf16.msra.mxu0 %v1884
    %2014 = vmatprep.subr.bf16.mxu0 %v1887
    %2015 = vmatpush1.bf16.msra.mxu0 %v1886
    %2016 = vmatprep.subr.bf16.mxu0 %v1889
    %2017 = vmatpush1.bf16.msra.mxu0 %v1888
    %2018 = vmatprep.subr.bf16.mxu0 %v1891
    %2019 = vmatpush1.bf16.msra.mxu0 %v1890
    %2020 = vmatprep.subr.bf16.mxu0 %v1893
    %2021 = vmatpush1.bf16.msra.mxu0 %v1892
    %2022 = vmatprep.subr.bf16.mxu0 %v1895
    %2023 = vmatpush1.bf16.msra.mxu0 %v1894
    %2024 = vmatprep.subr.bf16.mxu0 %v1897
    %2025 = vmatpush1.bf16.msra.mxu0 %v1896
    %2026 = vmatprep.subr.bf16.mxu0 %v1899
    %2027 = vmatpush1.bf16.msra.mxu0 %v1898
    %2028 = vmatprep.subr.bf16.mxu0 %v1901
    %2029 = vmatpush1.bf16.msra.mxu0 %v1900
    %2030 = vmatprep.subr.bf16.mxu0 %v1903
    %2031 = vmatpush1.bf16.msra.mxu0 %v1902
    %2032 = vmatprep.mubr.bf16.mxu0 %v1601
    %2033 = vmatmul.mubr.bf16.gmra.mrb[0].mxu0 %v1600
    %v2034 = vpop.f32.mrb[0].mxu0
    %v2035 = vadd.f32 %v1673, %v2034
    %v2036 = vpop.f32.mrb[0].mxu0
    %v2037 = vadd.f32 %v1677, %v2036
    %v2038 = vpop.f32.mrb[0].mxu0
    %v2039 = vpop.f32.mrb[0].mxu0
    %2040 = vdwg.mxu0
    %2041 = vmatprep.subr.bf16.mxu0 %v1905
    %2042 = vmatpush1.bf16.msra.mxu0 %v1904
    %2043 = vmatprep.subr.bf16.mxu0 %v1907
    %2044 = vmatpush1.bf16.msra.mxu0 %v1906
    %2045 = vmatprep.subr.bf16.mxu0 %v1909
    %2046 = vmatpush1.bf16.msra.mxu0 %v1908
    %2047 = vmatprep.subr.bf16.mxu0 %v1911
    %2048 = vmatpush1.bf16.msra.mxu0 %v1910
    %2049 = vmatprep.subr.bf16.mxu0 %v1913
    %2050 = vmatpush1.bf16.msra.mxu0 %v1912
    %2051 = vmatprep.subr.bf16.mxu0 %v1915
    %2052 = vmatpush1.bf16.msra.mxu0 %v1914
    %2053 = vmatprep.subr.bf16.mxu0 %v1917
    %2054 = vmatpush1.bf16.msra.mxu0 %v1916
    %2055 = vmatprep.subr.bf16.mxu0 %v1919
    %2056 = vmatpush1.bf16.msra.mxu0 %v1918
    %2057 = vmatprep.subr.bf16.mxu0 %v1921
    %2058 = vmatpush1.bf16.msra.mxu0 %v1920
    %2059 = vmatprep.subr.bf16.mxu0 %v1923
    %2060 = vmatpush1.bf16.msra.mxu0 %v1922
    %2061 = vmatprep.subr.bf16.mxu0 %v1925
    %2062 = vmatpush1.bf16.msra.mxu0 %v1924
    %2063 = vmatprep.subr.bf16.mxu0 %v1927
    %2064 = vmatpush1.bf16.msra.mxu0 %v1926
    %2065 = vmatprep.subr.bf16.mxu0 %v1929
    %2066 = vmatpush1.bf16.msra.mxu0 %v1928
    %2067 = vmatprep.subr.bf16.mxu0 %v1931
    %2068 = vmatpush1.bf16.msra.mxu0 %v1930
    %2069 = vmatprep.subr.bf16.mxu0 %v1933
    %2070 = vmatpush1.bf16.msra.mxu0 %v1932
    %2071 = vmatprep.subr.bf16.mxu0 %v1935
    %2072 = vmatpush1.bf16.msra.mxu0 %v1934
    %2073 = vmatprep.mubr.bf16.mxu0 %v1603
    %2074 = vmatmul.mubr.bf16.gmra.mrb[0].mxu0 %v1602
    %v2075 = vpop.f32.mrb[0].mxu0
    %v2076 = vadd.f32 %v2035, %v2075
    %v2077 = vpop.f32.mrb[0].mxu0
    %v2078 = vadd.f32 %v2037, %v2077
    %v2079 = vpop.f32.mrb[0].mxu0
    %v2080 = vpop.f32.mrb[0].mxu0
    %2081 = vdwg.mxu0
    %v2082 = vmax.f32 %v2076, 0.0
    %v2083 = vmax.f32 %v2078, 0.0
    %v2084 = vpack.c.bf16 %v2082, %v2082
    %v2085 = vpack.c.bf16 %v2083, %v2083
    %v2086 = vld [vmem:[%s6] sm:$0xff]
    %v2087 = vld [vmem:[%s6 + $0x8] sm:$0xff]
    %v2088 = vld [vmem:[%s6 + $0x10] sm:$0xff]
    %v2089 = vld [vmem:[%s6 + $0x18] sm:$0xff]
    %v2090 = vld [vmem:[%s6 + $0x20] sm:$0xff]
    %v2091 = vld [vmem:[%s6 + $0x28] sm:$0xff]
    %v2092 = vld [vmem:[%s6 + $0x30] sm:$0xff]
    %v2093 = vld [vmem:[%s6 + $0x38] sm:$0xff]
    %v2094 = vld [vmem:[%s6 + $0x40] sm:$0xff]
    %v2095 = vld [vmem:[%s6 + $0x48] sm:$0xff]
    %v2096 = vld [vmem:[%s6 + $0x50] sm:$0xff]
    %v2097 = vld [vmem:[%s6 + $0x58] sm:$0xff]
    %v2098 = vld [vmem:[%s6 + $0x60] sm:$0xff]
    %v2099 = vld [vmem:[%s6 + $0x68] sm:$0xff]
    %v2100 = vld [vmem:[%s6 + $0x70] sm:$0xff]
    %v2101 = vld [vmem:[%s6 + $0x78] sm:$0xff]
    %v2102 = vld [vmem:[%s6 + $0x80] sm:$0xff]
    %v2103 = vld [vmem:[%s6 + $0x88] sm:$0xff]
    %v2104 = vld [vmem:[%s6 + $0x90] sm:$0xff]
    %v2105 = vld [vmem:[%s6 + $0x98] sm:$0xff]
    %v2106 = vld [vmem:[%s6 + $0xa0] sm:$0xff]
    %v2107 = vld [vmem:[%s6 + $0xa8] sm:$0xff]
    %v2108 = vld [vmem:[%s6 + $0xb0] sm:$0xff]
    %v2109 = vld [vmem:[%s6 + $0xb8] sm:$0xff]
    %v2110 = vld [vmem:[%s6 + $0xc0] sm:$0xff]
    %v2111 = vld [vmem:[%s6 + $0xc8] sm:$0xff]
    %v2112 = vld [vmem:[%s6 + $0xd0] sm:$0xff]
    %v2113 = vld [vmem:[%s6 + $0xd8] sm:$0xff]
    %v2114 = vld [vmem:[%s6 + $0xe0] sm:$0xff]
    %v2115 = vld [vmem:[%s6 + $0xe8] sm:$0xff]
    %v2116 = vld [vmem:[%s6 + $0xf0] sm:$0xff]
    %v2117 = vld [vmem:[%s6 + $0xf8] sm:$0xff]
    %v2118 = vld [vmem:[%s7] sm:$0x3]
    %v2120 = vlaneseq
    %v2121 = vshrl.u32 %v2120, 7
    %v2122 = vsub.s32 0, %v2121
    %v2123 = vrot.slane %v2118, %v2122
    %v2124 = vlaneseq
    %v2125 = vshrl.u32 %v2124, 7
    %v2126 = vsub.s32 1, %v2125
    %v2127 = vrot.slane %v2118, %v2126
    %v2162 = vunpack.c.l.b16 %v2086
    %v2163 = vunpack.c.h.b16 %v2086
    %v2164 = vunpack.c.l.b16 %v2087
    %v2165 = vunpack.c.h.b16 %v2087
    %v2166 = vunpack.c.l.b16 %v2088
    %v2167 = vunpack.c.h.b16 %v2088
    %v2168 = vunpack.c.l.b16 %v2089
    %v2169 = vunpack.c.h.b16 %v2089
    %v2170 = vunpack.c.l.b16 %v2090
    %v2171 = vunpack.c.h.b16 %v2090
    %v2172 = vunpack.c.l.b16 %v2091
    %v2173 = vunpack.c.h.b16 %v2091
    %v2174 = vunpack.c.l.b16 %v2092
    %v2175 = vunpack.c.h.b16 %v2092
    %v2176 = vunpack.c.l.b16 %v2093
    %v2177 = vunpack.c.h.b16 %v2093
    %v2178 = vunpack.c.l.b16 %v2094
    %v2179 = vunpack.c.h.b16 %v2094
    %v2180 = vunpack.c.l.b16 %v2095
    %v2181 = vunpack.c.h.b16 %v2095
    %v2182 = vunpack.c.l.b16 %v2096
    %v2183 = vunpack.c.h.b16 %v2096
    %v2184 = vunpack.c.l.b16 %v2097
    %v2185 = vunpack.c.h.b16 %v2097
    %v2186 = vunpack.c.l.b16 %v2098
    %v2187 = vunpack.c.h.b16 %v2098
    %v2188 = vunpack.c.l.b16 %v2099
    %v2189 = vunpack.c.h.b16 %v2099
    %v2190 = vunpack.c.l.b16 %v2100
    %v2191 = vunpack.c.h.b16 %v2100
    %v2192 = vunpack.c.l.b16 %v2101
    %v2193 = vunpack.c.h.b16 %v2101
    %v2194 = vunpack.c.l.b16 %v2102
    %v2195 = vunpack.c.h.b16 %v2102
    %v2196 = vunpack.c.l.b16 %v2103
    %v2197 = vunpack.c.h.b16 %v2103
    %v2198 = vunpack.c.l.b16 %v2104
    %v2199 = vunpack.c.h.b16 %v2104
    %v2200 = vunpack.c.l.b16 %v2105
    %v2201 = vunpack.c.h.b16 %v2105
    %v2202 = vunpack.c.l.b16 %v2106
    %v2203 = vunpack.c.h.b16 %v2106
    %v2204 = vunpack.c.l.b16 %v2107
    %v2205 = vunpack.c.h.b16 %v2107
    %v2206 = vunpack.c.l.b16 %v2108
    %v2207 = vunpack.c.h.b16 %v2108
    %v2208 = vunpack.c.l.b16 %v2109
    %v2209 = vunpack.c.h.b16 %v2109
    %v2210 = vunpack.c.l.b16 %v2110
    %v2211 = vunpack.c.h.b16 %v2110
    %v2212 = vunpack.c.l.b16 %v2111
    %v2213 = vunpack.c.h.b16 %v2111
    %v2214 = vunpack.c.l.b16 %v2112
    %v2215 = vunpack.c.h.b16 %v2112
    %v2216 = vunpack.c.l.b16 %v2113
    %v2217 = vunpack.c.h.b16 %v2113
    %v2218 = vunpack.c.l.b16 %v2114
    %v2219 = vunpack.c.h.b16 %v2114
    %v2220 = vunpack.c.l.b16 %v2115
    %v2221 = vunpack.c.h.b16 %v2115
    %v2222 = vunpack.c.l.b16 %v2116
    %v2223 = vunpack.c.h.b16 %v2116
    %v2224 = vunpack.c.l.b16 %v2117
    %v2225 = vunpack.c.h.b16 %v2117
    %v2226 = vpack.c.b16 %v2164, %v2162
    %v2227 = vpack.c.b16 %v2165, %v2163
    %v2228 = vpack.c.b16 %v2168, %v2166
    %v2229 = vpack.c.b16 %v2169, %v2167
    %v2230 = vpack.c.b16 %v2172, %v2170
    %v2231 = vpack.c.b16 %v2173, %v2171
    %v2232 = vpack.c.b16 %v2176, %v2174
    %v2233 = vpack.c.b16 %v2177, %v2175
    %v2234 = vpack.c.b16 %v2180, %v2178
    %v2235 = vpack.c.b16 %v2181, %v2179
    %v2236 = vpack.c.b16 %v2184, %v2182
    %v2237 = vpack.c.b16 %v2185, %v2183
    %v2238 = vpack.c.b16 %v2188, %v2186
    %v2239 = vpack.c.b16 %v2189, %v2187
    %v2240 = vpack.c.b16 %v2192, %v2190
    %v2241 = vpack.c.b16 %v2193, %v2191
    %v2242 = vpack.c.b16 %v2196, %v2194
    %v2243 = vpack.c.b16 %v2197, %v2195
    %v2244 = vpack.c.b16 %v2200, %v2198
    %v2245 = vpack.c.b16 %v2201, %v2199
    %v2246 = vpack.c.b16 %v2204, %v2202
    %v2247 = vpack.c.b16 %v2205, %v2203
    %v2248 = vpack.c.b16 %v2208, %v2206
    %v2249 = vpack.c.b16 %v2209, %v2207
    %v2250 = vpack.c.b16 %v2212, %v2210
    %v2251 = vpack.c.b16 %v2213, %v2211
    %v2252 = vpack.c.b16 %v2216, %v2214
    %v2253 = vpack.c.b16 %v2217, %v2215
    %v2254 = vpack.c.b16 %v2220, %v2218
    %v2255 = vpack.c.b16 %v2221, %v2219
    %v2256 = vpack.c.b16 %v2224, %v2222
    %v2257 = vpack.c.b16 %v2225, %v2223
    %2290 = vmatprep.subr.bf16.mxu0 %v2227
    %2291 = vmatpush1.bf16.msra.mxu0 %v2226
    %2292 = vmatprep.subr.bf16.mxu0 %v2229
    %2293 = vmatpush1.bf16.msra.mxu0 %v2228
    %2294 = vmatprep.subr.bf16.mxu0 %v2231
    %2295 = vmatpush1.bf16.msra.mxu0 %v2230
    %2296 = vmatprep.subr.bf16.mxu0 %v2233
    %2297 = vmatpush1.bf16.msra.mxu0 %v2232
    %2298 = vmatprep.subr.bf16.mxu0 %v2235
    %2299 = vmatpush1.bf16.msra.mxu0 %v2234
    %2300 = vmatprep.subr.bf16.mxu0 %v2237
    %2301 = vmatpush1.bf16.msra.mxu0 %v2236
    %2302 = vmatprep.subr.bf16.mxu0 %v2239
    %2303 = vmatpush1.bf16.msra.mxu0 %v2238
    %2304 = vmatprep.subr.bf16.mxu0 %v2241
    %2305 = vmatpush1.bf16.msra.mxu0 %v2240
    %2306 = vmatprep.subr.bf16.mxu0 %v2243
    %2307 = vmatpush1.bf16.msra.mxu0 %v2242
    %2308 = vmatprep.subr.bf16.mxu0 %v2245
    %2309 = vmatpush1.bf16.msra.mxu0 %v2244
    %2310 = vmatprep.subr.bf16.mxu0 %v2247
    %2311 = vmatpush1.bf16.msra.mxu0 %v2246
    %2312 = vmatprep.subr.bf16.mxu0 %v2249
    %2313 = vmatpush1.bf16.msra.mxu0 %v2248
    %2314 = vmatprep.subr.bf16.mxu0 %v2251
    %2315 = vmatpush1.bf16.msra.mxu0 %v2250
    %2316 = vmatprep.subr.bf16.mxu0 %v2253
    %2317 = vmatpush1.bf16.msra.mxu0 %v2252
    %2318 = vmatprep.subr.bf16.mxu0 %v2255
    %2319 = vmatpush1.bf16.msra.mxu0 %v2254
    %2320 = vmatprep.subr.bf16.mxu0 %v2257
    %2321 = vmatpush1.bf16.msra.mxu0 %v2256
    %2322 = vmatprep.mubr.bf16.mxu0 %v2085
    %2323 = vmatmul.mubr.bf16.gmra.mrb[0].mxu0 %v2084
    %v2324 = vpop.f32.mrb[0].mxu0
    %v2325 = vadd.f32 %v2123, %v2324
    %v2326 = vpop.f32.mrb[0].mxu0
    %v2327 = vadd.f32 %v2127, %v2326
    %v2328 = vpop.f32.mrb[0].mxu0
    %v2329 = vpop.f32.mrb[0].mxu0
    %2330 = vdwg.mxu0
    %v2331 = vmul.f32 %v2327, 1.442695
    %v2332 = vpow.pop %v2331
    %v2333 = vld [vmem:[%s1] sm:$0xff]
    %v2334 = vsel %vm1264, %v2333, 0.0
    %v2335 = vmul.f32 %v2332, %v2334
    %v2336 = vadd.f32 %v2325, %v2335
    %s2337 = smul.u32 0, 8
    %v2338 = vlaneseq
    %v2339 = vshrl.u32 %v2338, 7
    %v2340 = vstv %s2337
    %v2341 = vadd.s32 %v2340, %v2339
    %v2342 = vlaneseq
    %v2343 = vand.u32 %v2342, 127
    %vm2344 = vcmp.lt.s32.totalorder %v2341, 2
    %vm2345 = vcmp.lt.s32.totalorder %v2343, 16
    %vm2346 = vmand %vm2344, %vm2345
    %v2347 = vmul.f32 %v2332, %v2332
    %v2348 = vmul.f32 %v2325, %v2325
    %v2349 = vadd.f32 %v2347, %v2348
    %v2350 = vsub.f32 %v2349, %v2327
    %v2351 = vsub.f32 %v2350, 0.5
    %v2352 = vsel %vm2346, %v2351, 0.0
    %v2353 = vadd.f32 %v2352, 0.0
    %2354 = vst [vmem:[#allocation4] sm:$0xff] %v2353
    %v2355 = vpack.c.bf16 %v2336, %v2336
    %v2356 = vld [vmem:[%s8] sm:$0xff]
    %v2357 = vld [vmem:[%s8 + $0x8] sm:$0xff]
    %v2358 = vld [vmem:[%s8 + $0x10] sm:$0xff]
    %v2359 = vld [vmem:[%s8 + $0x18] sm:$0xff]
    %v2360 = vld [vmem:[%s8 + $0x20] sm:$0xff]
    %v2361 = vld [vmem:[%s8 + $0x28] sm:$0xff]
    %v2362 = vld [vmem:[%s8 + $0x30] sm:$0xff]
    %v2363 = vld [vmem:[%s8 + $0x38] sm:$0xff]
    %v2364 = vld [vmem:[%s8 + $0x40] sm:$0xff]
    %v2365 = vld [vmem:[%s8 + $0x48] sm:$0xff]
    %v2366 = vld [vmem:[%s8 + $0x50] sm:$0xff]
    %v2367 = vld [vmem:[%s8 + $0x58] sm:$0xff]
    %v2368 = vld [vmem:[%s8 + $0x60] sm:$0xff]
    %v2369 = vld [vmem:[%s8 + $0x68] sm:$0xff]
    %v2370 = vld [vmem:[%s8 + $0x70] sm:$0xff]
    %v2371 = vld [vmem:[%s8 + $0x78] sm:$0xff]
    %v2372 = vld [vmem:[%s9] sm:$0x3]
    %v2374 = vlaneseq
    %v2375 = vshrl.u32 %v2374, 7
    %v2376 = vsub.s32 0, %v2375
    %v2377 = vrot.slane %v2372, %v2376
    %v2378 = vlaneseq
    %v2379 = vshrl.u32 %v2378, 7
    %v2380 = vsub.s32 1, %v2379
    %v2381 = vrot.slane %v2372, %v2380
    %v2400 = vunpack.c.l.b16 %v2356
    %v2401 = vunpack.c.h.b16 %v2356
    %v2402 = vunpack.c.l.b16 %v2357
    %v2403 = vunpack.c.h.b16 %v2357
    %v2404 = vunpack.c.l.b16 %v2358
    %v2405 = vunpack.c.h.b16 %v2358
    %v2406 = vunpack.c.l.b16 %v2359
    %v2407 = vunpack.c.h.b16 %v2359
    %v2408 = vunpack.c.l.b16 %v2360
    %v2409 = vunpack.c.h.b16 %v2360
    %v2410 = vunpack.c.l.b16 %v2361
    %v2411 = vunpack.c.h.b16 %v2361
    %v2412 = vunpack.c.l.b16 %v2362
    %v2413 = vunpack.c.h.b16 %v2362
    %v2414 = vunpack.c.l.b16 %v2363
    %v2415 = vunpack.c.h.b16 %v2363
    %v2416 = vunpack.c.l.b16 %v2364
    %v2417 = vunpack.c.h.b16 %v2364
    %v2418 = vunpack.c.l.b16 %v2365
    %v2419 = vunpack.c.h.b16 %v2365
    %v2420 = vunpack.c.l.b16 %v2366
    %v2421 = vunpack.c.h.b16 %v2366
    %v2422 = vunpack.c.l.b16 %v2367
    %v2423 = vunpack.c.h.b16 %v2367
    %v2424 = vunpack.c.l.b16 %v2368
    %v2425 = vunpack.c.h.b16 %v2368
    %v2426 = vunpack.c.l.b16 %v2369
    %v2427 = vunpack.c.h.b16 %v2369
    %v2428 = vunpack.c.l.b16 %v2370
    %v2429 = vunpack.c.h.b16 %v2370
    %v2430 = vunpack.c.l.b16 %v2371
    %v2431 = vunpack.c.h.b16 %v2371
    %v2432 = vpack.c.b16 %v2402, %v2400
    %v2433 = vpack.c.b16 %v2403, %v2401
    %v2434 = vpack.c.b16 %v2406, %v2404
    %v2435 = vpack.c.b16 %v2407, %v2405
    %v2436 = vpack.c.b16 %v2410, %v2408
    %v2437 = vpack.c.b16 %v2411, %v2409
    %v2438 = vpack.c.b16 %v2414, %v2412
    %v2439 = vpack.c.b16 %v2415, %v2413
    %v2440 = vpack.c.b16 %v2418, %v2416
    %v2441 = vpack.c.b16 %v2419, %v2417
    %v2442 = vpack.c.b16 %v2422, %v2420
    %v2443 = vpack.c.b16 %v2423, %v2421
    %v2444 = vpack.c.b16 %v2426, %v2424
    %v2445 = vpack.c.b16 %v2427, %v2425
    %v2446 = vpack.c.b16 %v2430, %v2428
    %v2447 = vpack.c.b16 %v2431, %v2429
    %2464 = vmatprep.subr.bf16.mxu0 %v2433
    %2465 = vmatpush1.bf16.msra.mxu0 %v2432
    %2466 = vmatprep.subr.bf16.mxu0 %v2435
    %2467 = vmatpush1.bf16.msra.mxu0 %v2434
    %2468 = vmatprep.subr.bf16.mxu0 %v2437
    %2469 = vmatpush1.bf16.msra.mxu0 %v2436
    %2470 = vmatprep.subr.bf16.mxu0 %v2439
    %2471 = vmatpush1.bf16.msra.mxu0 %v2438
    %2472 = vmatprep.subr.bf16.mxu0 %v2441
    %2473 = vmatpush1.bf16.msra.mxu0 %v2440
    %2474 = vmatprep.subr.bf16.mxu0 %v2443
    %2475 = vmatpush1.bf16.msra.mxu0 %v2442
    %2476 = vmatprep.subr.bf16.mxu0 %v2445
    %2477 = vmatpush1.bf16.msra.mxu0 %v2444
    %2478 = vmatprep.subr.bf16.mxu0 %v2447
    %2479 = vmatpush1.bf16.msra.mxu0 %v2446
    %2480 = vmatprep.subr.bf16.mxu0 0
    %2481 = vmatpush1.bf16.msra.mxu0 0
    %2482 = vmatprep.subr.bf16.mxu0 0
    %2483 = vmatpush1.bf16.msra.mxu0 0
    %2484 = vmatprep.subr.bf16.mxu0 0
    %2485 = vmatpush1.bf16.msra.mxu0 0
    %2486 = vmatprep.subr.bf16.mxu0 0
    %2487 = vmatpush1.bf16.msra.mxu0 0
    %2488 = vmatprep.subr.bf16.mxu0 0
    %2489 = vmatpush1.bf16.msra.mxu0 0
    %2490 = vmatprep.subr.bf16.mxu0 0
    %2491 = vmatpush1.bf16.msra.mxu0 0
    %2492 = vmatprep.subr.bf16.mxu0 0
    %2493 = vmatpush1.bf16.msra.mxu0 0
    %2494 = vmatprep.subr.bf16.mxu0 0
    %2495 = vmatpush1.bf16.msra.mxu0 0
    %2496 = vmatprep.mubr.bf16.mxu0 0
    %2497 = vmatmul.mubr.bf16.gmra.mrb[0].mxu0 %v2355
    %v2498 = vpop.f32.mrb[0].mxu0
    %v2499 = vadd.f32 %v2377, %v2498
    %v2500 = vpop.f32.mrb[0].mxu0
    %v2501 = vadd.f32 %v2381, %v2500
    %v2502 = vpop.f32.mrb[0].mxu0
    %v2503 = vpop.f32.mrb[0].mxu0
    %2504 = vdwg.mxu0
    %v2505 = vmax.f32 %v2499, 0.0
    %v2506 = vmax.f32 %v2501, 0.0
    %v2507 = vpack.c.bf16 %v2505, %v2505
    %v2508 = vpack.c.bf16 %v2506, %v2506
    %v2509 = vld [vmem:[%s10] sm:$0xff]
    %v2510 = vld [vmem:[%s10 + $0x8] sm:$0xff]
    %v2511 = vld [vmem:[%s10 + $0x10] sm:$0xff]
    %v2512 = vld [vmem:[%s10 + $0x18] sm:$0xff]
    %v2513 = vld [vmem:[%s10 + $0x20] sm:$0xff]
    %v2514 = vld [vmem:[%s10 + $0x28] sm:$0xff]
    %v2515 = vld [vmem:[%s10 + $0x30] sm:$0xff]
    %v2516 = vld [vmem:[%s10 + $0x38] sm:$0xff]
    %v2517 = vld [vmem:[%s10 + $0x40] sm:$0xff]
    %v2518 = vld [vmem:[%s10 + $0x48] sm:$0xff]
    %v2519 = vld [vmem:[%s10 + $0x50] sm:$0xff]
    %v2520 = vld [vmem:[%s10 + $0x58] sm:$0xff]
    %v2521 = vld [vmem:[%s10 + $0x60] sm:$0xff]
    %v2522 = vld [vmem:[%s10 + $0x68] sm:$0xff]
    %v2523 = vld [vmem:[%s10 + $0x70] sm:$0xff]
    %v2524 = vld [vmem:[%s10 + $0x78] sm:$0xff]
    %v2525 = vld [vmem:[%s10 + $0x80] sm:$0xff]
    %v2526 = vld [vmem:[%s10 + $0x88] sm:$0xff]
    %v2527 = vld [vmem:[%s10 + $0x90] sm:$0xff]
    %v2528 = vld [vmem:[%s10 + $0x98] sm:$0xff]
    %v2529 = vld [vmem:[%s10 + $0xa0] sm:$0xff]
    %v2530 = vld [vmem:[%s10 + $0xa8] sm:$0xff]
    %v2531 = vld [vmem:[%s10 + $0xb0] sm:$0xff]
    %v2532 = vld [vmem:[%s10 + $0xb8] sm:$0xff]
    %v2533 = vld [vmem:[%s10 + $0xc0] sm:$0xff]
    %v2534 = vld [vmem:[%s10 + $0xc8] sm:$0xff]
    %v2535 = vld [vmem:[%s10 + $0xd0] sm:$0xff]
    %v2536 = vld [vmem:[%s10 + $0xd8] sm:$0xff]
    %v2537 = vld [vmem:[%s10 + $0xe0] sm:$0xff]
    %v2538 = vld [vmem:[%s10 + $0xe8] sm:$0xff]
    %v2539 = vld [vmem:[%s10 + $0xf0] sm:$0xff]
    %v2540 = vld [vmem:[%s10 + $0xf8] sm:$0xff]
    %v2541 = vld [vmem:[%s10 + $0x100] sm:$0xff]
    %v2542 = vld [vmem:[%s10 + $0x108] sm:$0xff]
    %v2543 = vld [vmem:[%s10 + $0x110] sm:$0xff]
    %v2544 = vld [vmem:[%s10 + $0x118] sm:$0xff]
    %v2545 = vld [vmem:[%s10 + $0x120] sm:$0xff]
    %v2546 = vld [vmem:[%s10 + $0x128] sm:$0xff]
    %v2547 = vld [vmem:[%s10 + $0x130] sm:$0xff]
    %v2548 = vld [vmem:[%s10 + $0x138] sm:$0xff]
    %v2549 = vld [vmem:[%s10 + $0x140] sm:$0xff]
    %v2550 = vld [vmem:[%s10 + $0x148] sm:$0xff]
    %v2551 = vld [vmem:[%s10 + $0x150] sm:$0xff]
    %v2552 = vld [vmem:[%s10 + $0x158] sm:$0xff]
    %v2553 = vld [vmem:[%s10 + $0x160] sm:$0xff]
    %v2554 = vld [vmem:[%s10 + $0x168] sm:$0xff]
    %v2555 = vld [vmem:[%s10 + $0x170] sm:$0xff]
    %v2556 = vld [vmem:[%s10 + $0x178] sm:$0xff]
    %v2557 = vld [vmem:[%s10 + $0x180] sm:$0xff]
    %v2558 = vld [vmem:[%s10 + $0x188] sm:$0xff]
    %v2559 = vld [vmem:[%s10 + $0x190] sm:$0xff]
    %v2560 = vld [vmem:[%s10 + $0x198] sm:$0xff]
    %v2561 = vld [vmem:[%s10 + $0x1a0] sm:$0xff]
    %v2562 = vld [vmem:[%s10 + $0x1a8] sm:$0xff]
    %v2563 = vld [vmem:[%s10 + $0x1b0] sm:$0xff]
    %v2564 = vld [vmem:[%s10 + $0x1b8] sm:$0xff]
    %v2565 = vld [vmem:[%s10 + $0x1c0] sm:$0xff]
    %v2566 = vld [vmem:[%s10 + $0x1c8] sm:$0xff]
    %v2567 = vld [vmem:[%s10 + $0x1d0] sm:$0xff]
    %v2568 = vld [vmem:[%s10 + $0x1d8] sm:$0xff]
    %v2569 = vld [vmem:[%s10 + $0x1e0] sm:$0xff]
    %v2570 = vld [vmem:[%s10 + $0x1e8] sm:$0xff]
    %v2571 = vld [vmem:[%s10 + $0x1f0] sm:$0xff]
    %v2572 = vld [vmem:[%s10 + $0x1f8] sm:$0xff]
    %v2573 = vld [vmem:[%s11] sm:$0xf]
    %v2575 = vlaneseq
    %v2576 = vshrl.u32 %v2575, 7
    %v2577 = vsub.s32 0, %v2576
    %v2578 = vrot.slane %v2573, %v2577
    %v2579 = vlaneseq
    %v2580 = vshrl.u32 %v2579, 7
    %v2581 = vsub.s32 1, %v2580
    %v2582 = vrot.slane %v2573, %v2581
    %v2583 = vlaneseq
    %v2584 = vshrl.u32 %v2583, 7
    %v2585 = vsub.s32 2, %v2584
    %v2586 = vrot.slane %v2573, %v2585
    %v2587 = vlaneseq
    %v2588 = vshrl.u32 %v2587, 7
    %v2589 = vsub.s32 3, %v2588
    %v2590 = vrot.slane %v2573, %v2589
    %v2659 = vunpack.c.l.b16 %v2509
    %v2660 = vunpack.c.h.b16 %v2509
    %v2661 = vunpack.c.l.b16 %v2510
    %v2662 = vunpack.c.h.b16 %v2510
    %v2663 = vunpack.c.l.b16 %v2511
    %v2664 = vunpack.c.h.b16 %v2511
    %v2665 = vunpack.c.l.b16 %v2512
    %v2666 = vunpack.c.h.b16 %v2512
    %v2667 = vunpack.c.l.b16 %v2513
    %v2668 = vunpack.c.h.b16 %v2513
    %v2669 = vunpack.c.l.b16 %v2514
    %v2670 = vunpack.c.h.b16 %v2514
    %v2671 = vunpack.c.l.b16 %v2515
    %v2672 = vunpack.c.h.b16 %v2515
    %v2673 = vunpack.c.l.b16 %v2516
    %v2674 = vunpack.c.h.b16 %v2516
    %v2675 = vunpack.c.l.b16 %v2517
    %v2676 = vunpack.c.h.b16 %v2517
    %v2677 = vunpack.c.l.b16 %v2518
    %v2678 = vunpack.c.h.b16 %v2518
    %v2679 = vunpack.c.l.b16 %v2519
    %v2680 = vunpack.c.h.b16 %v2519
    %v2681 = vunpack.c.l.b16 %v2520
    %v2682 = vunpack.c.h.b16 %v2520
    %v2683 = vunpack.c.l.b16 %v2521
    %v2684 = vunpack.c.h.b16 %v2521
    %v2685 = vunpack.c.l.b16 %v2522
    %v2686 = vunpack.c.h.b16 %v2522
    %v2687 = vunpack.c.l.b16 %v2523
    %v2688 = vunpack.c.h.b16 %v2523
    %v2689 = vunpack.c.l.b16 %v2524
    %v2690 = vunpack.c.h.b16 %v2524
    %v2691 = vunpack.c.l.b16 %v2525
    %v2692 = vunpack.c.h.b16 %v2525
    %v2693 = vunpack.c.l.b16 %v2526
    %v2694 = vunpack.c.h.b16 %v2526
    %v2695 = vunpack.c.l.b16 %v2527
    %v2696 = vunpack.c.h.b16 %v2527
    %v2697 = vunpack.c.l.b16 %v2528
    %v2698 = vunpack.c.h.b16 %v2528
    %v2699 = vunpack.c.l.b16 %v2529
    %v2700 = vunpack.c.h.b16 %v2529
    %v2701 = vunpack.c.l.b16 %v2530
    %v2702 = vunpack.c.h.b16 %v2530
    %v2703 = vunpack.c.l.b16 %v2531
    %v2704 = vunpack.c.h.b16 %v2531
    %v2705 = vunpack.c.l.b16 %v2532
    %v2706 = vunpack.c.h.b16 %v2532
    %v2707 = vunpack.c.l.b16 %v2533
    %v2708 = vunpack.c.h.b16 %v2533
    %v2709 = vunpack.c.l.b16 %v2534
    %v2710 = vunpack.c.h.b16 %v2534
    %v2711 = vunpack.c.l.b16 %v2535
    %v2712 = vunpack.c.h.b16 %v2535
    %v2713 = vunpack.c.l.b16 %v2536
    %v2714 = vunpack.c.h.b16 %v2536
    %v2715 = vunpack.c.l.b16 %v2537
    %v2716 = vunpack.c.h.b16 %v2537
    %v2717 = vunpack.c.l.b16 %v2538
    %v2718 = vunpack.c.h.b16 %v2538
    %v2719 = vunpack.c.l.b16 %v2539
    %v2720 = vunpack.c.h.b16 %v2539
    %v2721 = vunpack.c.l.b16 %v2540
    %v2722 = vunpack.c.h.b16 %v2540
    %v2723 = vunpack.c.l.b16 %v2541
    %v2724 = vunpack.c.h.b16 %v2541
    %v2725 = vunpack.c.l.b16 %v2542
    %v2726 = vunpack.c.h.b16 %v2542
    %v2727 = vunpack.c.l.b16 %v2543
    %v2728 = vunpack.c.h.b16 %v2543
    %v2729 = vunpack.c.l.b16 %v2544
    %v2730 = vunpack.c.h.b16 %v2544
    %v2731 = vunpack.c.l.b16 %v2545
    %v2732 = vunpack.c.h.b16 %v2545
    %v2733 = vunpack.c.l.b16 %v2546
    %v2734 = vunpack.c.h.b16 %v2546
    %v2735 = vunpack.c.l.b16 %v2547
    %v2736 = vunpack.c.h.b16 %v2547
    %v2737 = vunpack.c.l.b16 %v2548
    %v2738 = vunpack.c.h.b16 %v2548
    %v2739 = vunpack.c.l.b16 %v2549
    %v2740 = vunpack.c.h.b16 %v2549
    %v2741 = vunpack.c.l.b16 %v2550
    %v2742 = vunpack.c.h.b16 %v2550
    %v2743 = vunpack.c.l.b16 %v2551
    %v2744 = vunpack.c.h.b16 %v2551
    %v2745 = vunpack.c.l.b16 %v2552
    %v2746 = vunpack.c.h.b16 %v2552
    %v2747 = vunpack.c.l.b16 %v2553
    %v2748 = vunpack.c.h.b16 %v2553
    %v2749 = vunpack.c.l.b16 %v2554
    %v2750 = vunpack.c.h.b16 %v2554
    %v2751 = vunpack.c.l.b16 %v2555
    %v2752 = vunpack.c.h.b16 %v2555
    %v2753 = vunpack.c.l.b16 %v2556
    %v2754 = vunpack.c.h.b16 %v2556
    %v2755 = vunpack.c.l.b16 %v2557
    %v2756 = vunpack.c.h.b16 %v2557
    %v2757 = vunpack.c.l.b16 %v2558
    %v2758 = vunpack.c.h.b16 %v2558
    %v2759 = vunpack.c.l.b16 %v2559
    %v2760 = vunpack.c.h.b16 %v2559
    %v2761 = vunpack.c.l.b16 %v2560
    %v2762 = vunpack.c.h.b16 %v2560
    %v2763 = vunpack.c.l.b16 %v2561
    %v2764 = vunpack.c.h.b16 %v2561
    %v2765 = vunpack.c.l.b16 %v2562
    %v2766 = vunpack.c.h.b16 %v2562
    %v2767 = vunpack.c.l.b16 %v2563
    %v2768 = vunpack.c.h.b16 %v2563
    %v2769 = vunpack.c.l.b16 %v2564
    %v2770 = vunpack.c.h.b16 %v2564
    %v2771 = vunpack.c.l.b16 %v2565
    %v2772 = vunpack.c.h.b16 %v2565
    %v2773 = vunpack.c.l.b16 %v2566
    %v2774 = vunpack.c.h.b16 %v2566
    %v2775 = vunpack.c.l.b16 %v2567
    %v2776 = vunpack.c.h.b16 %v2567
    %v2777 = vunpack.c.l.b16 %v2568
    %v2778 = vunpack.c.h.b16 %v2568
    %v2779 = vunpack.c.l.b16 %v2569
    %v2780 = vunpack.c.h.b16 %v2569
    %v2781 = vunpack.c.l.b16 %v2570
    %v2782 = vunpack.c.h.b16 %v2570
    %v2783 = vunpack.c.l.b16 %v2571
    %v2784 = vunpack.c.h.b16 %v2571
    %v2785 = vunpack.c.l.b16 %v2572
    %v2786 = vunpack.c.h.b16 %v2572
    %v2787 = vpack.c.b16 %v2663, %v2659
    %v2788 = vpack.c.b16 %v2664, %v2660
    %v2789 = vpack.c.b16 %v2665, %v2661
    %v2790 = vpack.c.b16 %v2666, %v2662
    %v2791 = vpack.c.b16 %v2671, %v2667
    %v2792 = vpack.c.b16 %v2672, %v2668
    %v2793 = vpack.c.b16 %v2673, %v2669
    %v2794 = vpack.c.b16 %v2674, %v2670
    %v2795 = vpack.c.b16 %v2679, %v2675
    %v2796 = vpack.c.b16 %v2680, %v2676
    %v2797 = vpack.c.b16 %v2681, %v2677
    %v2798 = vpack.c.b16 %v2682, %v2678
    %v2799 = vpack.c.b16 %v2687, %v2683
    %v2800 = vpack.c.b16 %v2688, %v2684
    %v2801 = vpack.c.b16 %v2689, %v2685
    %v2802 = vpack.c.b16 %v2690, %v2686
    %v2803 = vpack.c.b16 %v2695, %v2691
    %v2804 = vpack.c.b16 %v2696, %v2692
    %v2805 = vpack.c.b16 %v2697, %v2693
    %v2806 = vpack.c.b16 %v2698, %v2694
    %v2807 = vpack.c.b16 %v2703, %v2699
    %v2808 = vpack.c.b16 %v2704, %v2700
    %v2809 = vpack.c.b16 %v2705, %v2701
    %v2810 = vpack.c.b16 %v2706, %v2702
    %v2811 = vpack.c.b16 %v2711, %v2707
    %v2812 = vpack.c.b16 %v2712, %v2708
    %v2813 = vpack.c.b16 %v2713, %v2709
    %v2814 = vpack.c.b16 %v2714, %v2710
    %v2815 = vpack.c.b16 %v2719, %v2715
    %v2816 = vpack.c.b16 %v2720, %v2716
    %v2817 = vpack.c.b16 %v2721, %v2717
    %v2818 = vpack.c.b16 %v2722, %v2718
    %v2819 = vpack.c.b16 %v2727, %v2723
    %v2820 = vpack.c.b16 %v2728, %v2724
    %v2821 = vpack.c.b16 %v2729, %v2725
    %v2822 = vpack.c.b16 %v2730, %v2726
    %v2823 = vpack.c.b16 %v2735, %v2731
    %v2824 = vpack.c.b16 %v2736, %v2732
    %v2825 = vpack.c.b16 %v2737, %v2733
    %v2826 = vpack.c.b16 %v2738, %v2734
    %v2827 = vpack.c.b16 %v2743, %v2739
    %v2828 = vpack.c.b16 %v2744, %v2740
    %v2829 = vpack.c.b16 %v2745, %v2741
    %v2830 = vpack.c.b16 %v2746, %v2742
    %v2831 = vpack.c.b16 %v2751, %v2747
    %v2832 = vpack.c.b16 %v2752, %v2748
    %v2833 = vpack.c.b16 %v2753, %v2749
    %v2834 = vpack.c.b16 %v2754, %v2750
    %v2835 = vpack.c.b16 %v2759, %v2755
    %v2836 = vpack.c.b16 %v2760, %v2756
    %v2837 = vpack.c.b16 %v2761, %v2757
    %v2838 = vpack.c.b16 %v2762, %v2758
    %v2839 = vpack.c.b16 %v2767, %v2763
    %v2840 = vpack.c.b16 %v2768, %v2764
    %v2841 = vpack.c.b16 %v2769, %v2765
    %v2842 = vpack.c.b16 %v2770, %v2766
    %v2843 = vpack.c.b16 %v2775, %v2771
    %v2844 = vpack.c.b16 %v2776, %v2772
    %v2845 = vpack.c.b16 %v2777, %v2773
    %v2846 = vpack.c.b16 %v2778, %v2774
    %v2847 = vpack.c.b16 %v2783, %v2779
    %v2848 = vpack.c.b16 %v2784, %v2780
    %v2849 = vpack.c.b16 %v2785, %v2781
    %v2850 = vpack.c.b16 %v2786, %v2782
    %2915 = vmatprep.subr.bf16.mxu0 %v2788
    %2916 = vmatpush1.bf16.msra.mxu0 %v2787
    %2917 = vmatprep.subr.bf16.mxu0 %v2792
    %2918 = vmatpush1.bf16.msra.mxu0 %v2791
    %2919 = vmatprep.subr.bf16.mxu0 %v2796
    %2920 = vmatpush1.bf16.msra.mxu0 %v2795
    %2921 = vmatprep.subr.bf16.mxu0 %v2800
    %2922 = vmatpush1.bf16.msra.mxu0 %v2799
    %2923 = vmatprep.subr.bf16.mxu0 %v2804
    %2924 = vmatpush1.bf16.msra.mxu0 %v2803
    %2925 = vmatprep.subr.bf16.mxu0 %v2808
    %2926 = vmatpush1.bf16.msra.mxu0 %v2807
    %2927 = vmatprep.subr.bf16.mxu0 %v2812
    %2928 = vmatpush1.bf16.msra.mxu0 %v2811
    %2929 = vmatprep.subr.bf16.mxu0 %v2816
    %2930 = vmatpush1.bf16.msra.mxu0 %v2815
    %2931 = vmatprep.subr.bf16.mxu0 %v2820
    %2932 = vmatpush1.bf16.msra.mxu0 %v2819
    %2933 = vmatprep.subr.bf16.mxu0 %v2824
    %2934 = vmatpush1.bf16.msra.mxu0 %v2823
    %2935 = vmatprep.subr.bf16.mxu0 %v2828
    %2936 = vmatpush1.bf16.msra.mxu0 %v2827
    %2937 = vmatprep.subr.bf16.mxu0 %v2832
    %2938 = vmatpush1.bf16.msra.mxu0 %v2831
    %2939 = vmatprep.subr.bf16.mxu0 %v2836
    %2940 = vmatpush1.bf16.msra.mxu0 %v2835
    %2941 = vmatprep.subr.bf16.mxu0 %v2840
    %2942 = vmatpush1.bf16.msra.mxu0 %v2839
    %2943 = vmatprep.subr.bf16.mxu0 %v2844
    %2944 = vmatpush1.bf16.msra.mxu0 %v2843
    %2945 = vmatprep.subr.bf16.mxu0 %v2848
    %2946 = vmatpush1.bf16.msra.mxu0 %v2847
    %2947 = vmatprep.mubr.bf16.mxu0 %v2508
    %2948 = vmatmul.mubr.bf16.gmra.mrb[0].mxu0 %v2507
    %v2949 = vpop.f32.mrb[0].mxu0
    %v2950 = vadd.f32 %v2578, %v2949
    %v2951 = vpop.f32.mrb[0].mxu0
    %v2952 = vadd.f32 %v2582, %v2951
    %v2953 = vpop.f32.mrb[0].mxu0
    %v2954 = vpop.f32.mrb[0].mxu0
    %2955 = vdwg.mxu0
    %2956 = vmatprep.subr.bf16.mxu0 %v2790
    %2957 = vmatpush1.bf16.msra.mxu0 %v2789
    %2958 = vmatprep.subr.bf16.mxu0 %v2794
    %2959 = vmatpush1.bf16.msra.mxu0 %v2793
    %2960 = vmatprep.subr.bf16.mxu0 %v2798
    %2961 = vmatpush1.bf16.msra.mxu0 %v2797
    %2962 = vmatprep.subr.bf16.mxu0 %v2802
    %2963 = vmatpush1.bf16.msra.mxu0 %v2801
    %2964 = vmatprep.subr.bf16.mxu0 %v2806
    %2965 = vmatpush1.bf16.msra.mxu0 %v2805
    %2966 = vmatprep.subr.bf16.mxu0 %v2810
    %2967 = vmatpush1.bf16.msra.mxu0 %v2809
    %2968 = vmatprep.subr.bf16.mxu0 %v2814
    %2969 = vmatpush1.bf16.msra.mxu0 %v2813
    %2970 = vmatprep.subr.bf16.mxu0 %v2818
    %2971 = vmatpush1.bf16.msra.mxu0 %v2817
    %2972 = vmatprep.subr.bf16.mxu0 %v2822
    %2973 = vmatpush1.bf16.msra.mxu0 %v2821
    %2974 = vmatprep.subr.bf16.mxu0 %v2826
    %2975 = vmatpush1.bf16.msra.mxu0 %v2825
    %2976 = vmatprep.subr.bf16.mxu0 %v2830
    %2977 = vmatpush1.bf16.msra.mxu0 %v2829
    %2978 = vmatprep.subr.bf16.mxu0 %v2834
    %2979 = vmatpush1.bf16.msra.mxu0 %v2833
    %2980 = vmatprep.subr.bf16.mxu0 %v2838
    %2981 = vmatpush1.bf16.msra.mxu0 %v2837
    %2982 = vmatprep.subr.bf16.mxu0 %v2842
    %2983 = vmatpush1.bf16.msra.mxu0 %v2841
    %2984 = vmatprep.subr.bf16.mxu0 %v2846
    %2985 = vmatpush1.bf16.msra.mxu0 %v2845
    %2986 = vmatprep.subr.bf16.mxu0 %v2850
    %2987 = vmatpush1.bf16.msra.mxu0 %v2849
    %2988 = vmatprep.mubr.bf16.mxu0 %v2508
    %2989 = vmatmul.mubr.bf16.gmra.mrb[0].mxu0 %v2507
    %v2990 = vpop.f32.mrb[0].mxu0
    %v2991 = vadd.f32 %v2586, %v2990
    %v2992 = vpop.f32.mrb[0].mxu0
    %v2993 = vadd.f32 %v2590, %v2992
    %v2994 = vpop.f32.mrb[0].mxu0
    %v2995 = vpop.f32.mrb[0].mxu0
    %2996 = vdwg.mxu0
    %v2997 = vmax.f32 %v2950, 0.0
    %v2998 = vmax.f32 %v2952, 0.0
    %v2999 = vmax.f32 %v2991, 0.0
    %v3000 = vmax.f32 %v2993, 0.0
    %v3001 = vpack.c.bf16 %v2997, %v2997
    %v3002 = vpack.c.bf16 %v2998, %v2998
    %v3003 = vpack.c.bf16 %v2999, %v2999
    %v3004 = vpack.c.bf16 %v3000, %v3000
    %v3005 = vld [vmem:[%s12] sm:$0xff]
    %v3006 = vld [vmem:[%s12 + $0x8] sm:$0xff]
    %v3007 = vld [vmem:[%s12 + $0x10] sm:$0xff]
    %v3008 = vld [vmem:[%s12 + $0x18] sm:$0xf]
    %v3009 = vld [vmem:[%s12 + $0x1c] sm:$0xff]
    %v3010 = vld [vmem:[%s12 + $0x24] sm:$0xff]
    %v3011 = vld [vmem:[%s12 + $0x2c] sm:$0xff]
    %v3012 = vld [vmem:[%s12 + $0x34] sm:$0xf]
    %v3013 = vld [vmem:[%s12 + $0x38] sm:$0xff]
    %v3014 = vld [vmem:[%s12 + $0x40] sm:$0xff]
    %v3015 = vld [vmem:[%s12 + $0x48] sm:$0xff]
    %v3016 = vld [vmem:[%s12 + $0x50] sm:$0xf]
    %v3017 = vld [vmem:[%s12 + $0x54] sm:$0xff]
    %v3018 = vld [vmem:[%s12 + $0x5c] sm:$0xff]
    %v3019 = vld [vmem:[%s12 + $0x64] sm:$0xff]
    %v3020 = vld [vmem:[%s12 + $0x6c] sm:$0xf]
    %v3021 = vld [vmem:[%s12 + $0x70] sm:$0xff]
    %v3022 = vld [vmem:[%s12 + $0x78] sm:$0xff]
    %v3023 = vld [vmem:[%s12 + $0x80] sm:$0xff]
    %v3024 = vld [vmem:[%s12 + $0x88] sm:$0xf]
    %v3025 = vld [vmem:[%s12 + $0x8c] sm:$0xff]
    %v3026 = vld [vmem:[%s12 + $0x94] sm:$0xff]
    %v3027 = vld [vmem:[%s12 + $0x9c] sm:$0xff]
    %v3028 = vld [vmem:[%s12 + $0xa4] sm:$0xf]
    %v3029 = vld [vmem:[%s12 + $0xa8] sm:$0xff]
    %v3030 = vld [vmem:[%s12 + $0xb0] sm:$0xff]
    %v3031 = vld [vmem:[%s12 + $0xb8] sm:$0xff]
    %v3032 = vld [vmem:[%s12 + $0xc0] sm:$0xf]
    %v3033 = vld [vmem:[%s12 + $0xc4] sm:$0xff]
    %v3034 = vld [vmem:[%s12 + $0xcc] sm:$0xff]
    %v3035 = vld [vmem:[%s12 + $0xd4] sm:$0xff]
    %v3036 = vld [vmem:[%s12 + $0xdc] sm:$0xf]
    %v3037 = vld [vmem:[%s12 + $0xe0] sm:$0xff]
    %v3038 = vld [vmem:[%s12 + $0xe8] sm:$0xff]
    %v3039 = vld [vmem:[%s12 + $0xf0] sm:$0xff]
    %v3040 = vld [vmem:[%s12 + $0xf8] sm:$0xf]
    %v3041 = vld [vmem:[%s12 + $0xfc] sm:$0xff]
    %v3042 = vld [vmem:[%s12 + $0x104] sm:$0xff]
    %v3043 = vld [vmem:[%s12 + $0x10c] sm:$0xff]
    %v3044 = vld [vmem:[%s12 + $0x114] sm:$0xf]
    %v3045 = vld [vmem:[%s12 + $0x118] sm:$0xff]
    %v3046 = vld [vmem:[%s12 + $0x120] sm:$0xff]
    %v3047 = vld [vmem:[%s12 + $0x128] sm:$0xff]
    %v3048 = vld [vmem:[%s12 + $0x130] sm:$0xf]
    %v3049 = vld [vmem:[%s12 + $0x134] sm:$0xff]
    %v3050 = vld [vmem:[%s12 + $0x13c] sm:$0xff]
    %v3051 = vld [vmem:[%s12 + $0x144] sm:$0xff]
    %v3052 = vld [vmem:[%s12 + $0x14c] sm:$0xf]
    %v3053 = vld [vmem:[%s12 + $0x150] sm:$0xff]
    %v3054 = vld [vmem:[%s12 + $0x158] sm:$0xff]
    %v3055 = vld [vmem:[%s12 + $0x160] sm:$0xff]
    %v3056 = vld [vmem:[%s12 + $0x168] sm:$0xf]
    %v3057 = vld [vmem:[%s12 + $0x16c] sm:$0xff]
    %v3058 = vld [vmem:[%s12 + $0x174] sm:$0xff]
    %v3059 = vld [vmem:[%s12 + $0x17c] sm:$0xff]
    %v3060 = vld [vmem:[%s12 + $0x184] sm:$0xf]
    %v3061 = vld [vmem:[%s12 + $0x188] sm:$0xff]
    %v3062 = vld [vmem:[%s12 + $0x190] sm:$0xff]
    %v3063 = vld [vmem:[%s12 + $0x198] sm:$0xff]
    %v3064 = vld [vmem:[%s12 + $0x1a0] sm:$0xf]
    %v3065 = vld [vmem:[%s12 + $0x1a4] sm:$0xff]
    %v3066 = vld [vmem:[%s12 + $0x1ac] sm:$0xff]
    %v3067 = vld [vmem:[%s12 + $0x1b4] sm:$0xff]
    %v3068 = vld [vmem:[%s12 + $0x1bc] sm:$0xf]
    %v3069 = vld [vmem:[%s12 + $0x1c0] sm:$0xff]
    %v3070 = vld [vmem:[%s12 + $0x1c8] sm:$0xff]
    %v3071 = vld [vmem:[%s12 + $0x1d0] sm:$0xff]
    %v3072 = vld [vmem:[%s12 + $0x1d8] sm:$0xf]
    %v3073 = vld [vmem:[%s12 + $0x1dc] sm:$0xff]
    %v3074 = vld [vmem:[%s12 + $0x1e4] sm:$0xff]
    %v3075 = vld [vmem:[%s12 + $0x1ec] sm:$0xff]
    %v3076 = vld [vmem:[%s12 + $0x1f4] sm:$0xf]
    %v3077 = vld [vmem:[%s12 + $0x1f8] sm:$0xff]
    %v3078 = vld [vmem:[%s12 + $0x200] sm:$0xff]
    %v3079 = vld [vmem:[%s12 + $0x208] sm:$0xff]
    %v3080 = vld [vmem:[%s12 + $0x210] sm:$0xf]
    %v3081 = vld [vmem:[%s12 + $0x214] sm:$0xff]
    %v3082 = vld [vmem:[%s12 + $0x21c] sm:$0xff]
    %v3083 = vld [vmem:[%s12 + $0x224] sm:$0xff]
    %v3084 = vld [vmem:[%s12 + $0x22c] sm:$0xf]
    %v3085 = vld [vmem:[%s12 + $0x230] sm:$0xff]
    %v3086 = vld [vmem:[%s12 + $0x238] sm:$0xff]
    %v3087 = vld [vmem:[%s12 + $0x240] sm:$0xff]
    %v3088 = vld [vmem:[%s12 + $0x248] sm:$0xf]
    %v3089 = vld [vmem:[%s12 + $0x24c] sm:$0xff]
    %v3090 = vld [vmem:[%s12 + $0x254] sm:$0xff]
    %v3091 = vld [vmem:[%s12 + $0x25c] sm:$0xff]
    %v3092 = vld [vmem:[%s12 + $0x264] sm:$0xf]
    %v3093 = vld [vmem:[%s12 + $0x268] sm:$0xff]
    %v3094 = vld [vmem:[%s12 + $0x270] sm:$0xff]
    %v3095 = vld [vmem:[%s12 + $0x278] sm:$0xff]
    %v3096 = vld [vmem:[%s12 + $0x280] sm:$0xf]
    %v3097 = vld [vmem:[%s12 + $0x284] sm:$0xff]
    %v3098 = vld [vmem:[%s12 + $0x28c] sm:$0xff]
    %v3099 = vld [vmem:[%s12 + $0x294] sm:$0xff]
    %v3100 = vld [vmem:[%s12 + $0x29c] sm:$0xf]
    %v3101 = vld [vmem:[%s12 + $0x2a0] sm:$0xff]
    %v3102 = vld [vmem:[%s12 + $0x2a8] sm:$0xff]
    %v3103 = vld [vmem:[%s12 + $0x2b0] sm:$0xff]
    %v3104 = vld [vmem:[%s12 + $0x2b8] sm:$0xf]
    %v3105 = vld [vmem:[%s12 + $0x2bc] sm:$0xff]
    %v3106 = vld [vmem:[%s12 + $0x2c4] sm:$0xff]
    %v3107 = vld [vmem:[%s12 + $0x2cc] sm:$0xff]
    %v3108 = vld [vmem:[%s12 + $0x2d4] sm:$0xf]
    %v3109 = vld [vmem:[%s12 + $0x2d8] sm:$0xff]
    %v3110 = vld [vmem:[%s12 + $0x2e0] sm:$0xff]
    %v3111 = vld [vmem:[%s12 + $0x2e8] sm:$0xff]
    %v3112 = vld [vmem:[%s12 + $0x2f0] sm:$0xf]
    %v3113 = vld [vmem:[%s12 + $0x2f4] sm:$0xff]
    %v3114 = vld [vmem:[%s12 + $0x2fc] sm:$0xff]
    %v3115 = vld [vmem:[%s12 + $0x304] sm:$0xff]
    %v3116 = vld [vmem:[%s12 + $0x30c] sm:$0xf]
    %v3117 = vld [vmem:[%s12 + $0x310] sm:$0xff]
    %v3118 = vld [vmem:[%s12 + $0x318] sm:$0xff]
    %v3119 = vld [vmem:[%s12 + $0x320] sm:$0xff]
    %v3120 = vld [vmem:[%s12 + $0x328] sm:$0xf]
    %v3121 = vld [vmem:[%s12 + $0x32c] sm:$0xff]
    %v3122 = vld [vmem:[%s12 + $0x334] sm:$0xff]
    %v3123 = vld [vmem:[%s12 + $0x33c] sm:$0xff]
    %v3124 = vld [vmem:[%s12 + $0x344] sm:$0xf]
    %v3125 = vld [vmem:[%s12 + $0x348] sm:$0xff]
    %v3126 = vld [vmem:[%s12 + $0x350] sm:$0xff]
    %v3127 = vld [vmem:[%s12 + $0x358] sm:$0xff]
    %v3128 = vld [vmem:[%s12 + $0x360] sm:$0xf]
    %v3129 = vld [vmem:[%s12 + $0x364] sm:$0xff]
    %v3130 = vld [vmem:[%s12 + $0x36c] sm:$0xff]
    %v3131 = vld [vmem:[%s12 + $0x374] sm:$0xff]
    %v3132 = vld [vmem:[%s12 + $0x37c] sm:$0xf]
    %v3133 = vld [vmem:[%s12 + $0x380] sm:$0xff]
    %v3134 = vld [vmem:[%s12 + $0x388] sm:$0xff]
    %v3135 = vld [vmem:[%s12 + $0x390] sm:$0xff]
    %v3136 = vld [vmem:[%s12 + $0x398] sm:$0xf]
    %v3137 = vld [vmem:[%s12 + $0x39c] sm:$0xff]
    %v3138 = vld [vmem:[%s12 + $0x3a4] sm:$0xff]
    %v3139 = vld [vmem:[%s12 + $0x3ac] sm:$0xff]
    %v3140 = vld [vmem:[%s12 + $0x3b4] sm:$0xf]
    %v3141 = vld [vmem:[%s12 + $0x3b8] sm:$0xff]
    %v3142 = vld [vmem:[%s12 + $0x3c0] sm:$0xff]
    %v3143 = vld [vmem:[%s12 + $0x3c8] sm:$0xff]
    %v3144 = vld [vmem:[%s12 + $0x3d0] sm:$0xf]
    %v3145 = vld [vmem:[%s12 + $0x3d4] sm:$0xff]
    %v3146 = vld [vmem:[%s12 + $0x3dc] sm:$0xff]
    %v3147 = vld [vmem:[%s12 + $0x3e4] sm:$0xff]
    %v3148 = vld [vmem:[%s12 + $0x3ec] sm:$0xf]
    %v3149 = vld [vmem:[%s12 + $0x3f0] sm:$0xff]
    %v3150 = vld [vmem:[%s12 + $0x3f8] sm:$0xff]
    %v3151 = vld [vmem:[%s12 + $0x400] sm:$0xff]
    %v3152 = vld [vmem:[%s12 + $0x408] sm:$0xf]
    %v3153 = vld [vmem:[%s12 + $0x40c] sm:$0xff]
    %v3154 = vld [vmem:[%s12 + $0x414] sm:$0xff]
    %v3155 = vld [vmem:[%s12 + $0x41c] sm:$0xff]
    %v3156 = vld [vmem:[%s12 + $0x424] sm:$0xf]
    %v3157 = vld [vmem:[%s12 + $0x428] sm:$0xff]
    %v3158 = vld [vmem:[%s12 + $0x430] sm:$0xff]
    %v3159 = vld [vmem:[%s12 + $0x438] sm:$0xff]
    %v3160 = vld [vmem:[%s12 + $0x440] sm:$0xf]
    %v3161 = vld [vmem:[%s12 + $0x444] sm:$0xff]
    %v3162 = vld [vmem:[%s12 + $0x44c] sm:$0xff]
    %v3163 = vld [vmem:[%s12 + $0x454] sm:$0xff]
    %v3164 = vld [vmem:[%s12 + $0x45c] sm:$0xf]
    %v3165 = vld [vmem:[%s12 + $0x460] sm:$0xff]
    %v3166 = vld [vmem:[%s12 + $0x468] sm:$0xff]
    %v3167 = vld [vmem:[%s12 + $0x470] sm:$0xff]
    %v3168 = vld [vmem:[%s12 + $0x478] sm:$0xf]
    %v3169 = vld [vmem:[%s12 + $0x47c] sm:$0xff]
    %v3170 = vld [vmem:[%s12 + $0x484] sm:$0xff]
    %v3171 = vld [vmem:[%s12 + $0x48c] sm:$0xff]
    %v3172 = vld [vmem:[%s12 + $0x494] sm:$0xf]
    %v3173 = vld [vmem:[%s12 + $0x498] sm:$0xff]
    %v3174 = vld [vmem:[%s12 + $0x4a0] sm:$0xff]
    %v3175 = vld [vmem:[%s12 + $0x4a8] sm:$0xff]
    %v3176 = vld [vmem:[%s12 + $0x4b0] sm:$0xf]
    %v3177 = vld [vmem:[%s12 + $0x4b4] sm:$0xff]
    %v3178 = vld [vmem:[%s12 + $0x4bc] sm:$0xff]
    %v3179 = vld [vmem:[%s12 + $0x4c4] sm:$0xff]
    %v3180 = vld [vmem:[%s12 + $0x4cc] sm:$0xf]
    %v3181 = vld [vmem:[%s12 + $0x4d0] sm:$0xff]
    %v3182 = vld [vmem:[%s12 + $0x4d8] sm:$0xff]
    %v3183 = vld [vmem:[%s12 + $0x4e0] sm:$0xff]
    %v3184 = vld [vmem:[%s12 + $0x4e8] sm:$0xf]
    %v3185 = vld [vmem:[%s12 + $0x4ec] sm:$0xff]
    %v3186 = vld [vmem:[%s12 + $0x4f4] sm:$0xff]
    %v3187 = vld [vmem:[%s12 + $0x4fc] sm:$0xff]
    %v3188 = vld [vmem:[%s12 + $0x504] sm:$0xf]
    %v3189 = vld [vmem:[%s12 + $0x508] sm:$0xff]
    %v3190 = vld [vmem:[%s12 + $0x510] sm:$0xff]
    %v3191 = vld [vmem:[%s12 + $0x518] sm:$0xff]
    %v3192 = vld [vmem:[%s12 + $0x520] sm:$0xf]
    %v3193 = vld [vmem:[%s12 + $0x524] sm:$0xff]
    %v3194 = vld [vmem:[%s12 + $0x52c] sm:$0xff]
    %v3195 = vld [vmem:[%s12 + $0x534] sm:$0xff]
    %v3196 = vld [vmem:[%s12 + $0x53c] sm:$0xf]
    %v3197 = vld [vmem:[%s12 + $0x540] sm:$0xff]
    %v3198 = vld [vmem:[%s12 + $0x548] sm:$0xff]
    %v3199 = vld [vmem:[%s12 + $0x550] sm:$0xff]
    %v3200 = vld [vmem:[%s12 + $0x558] sm:$0xf]
    %v3201 = vld [vmem:[%s12 + $0x55c] sm:$0xff]
    %v3202 = vld [vmem:[%s12 + $0x564] sm:$0xff]
    %v3203 = vld [vmem:[%s12 + $0x56c] sm:$0xff]
    %v3204 = vld [vmem:[%s12 + $0x574] sm:$0xf]
    %v3205 = vld [vmem:[%s12 + $0x578] sm:$0xff]
    %v3206 = vld [vmem:[%s12 + $0x580] sm:$0xff]
    %v3207 = vld [vmem:[%s12 + $0x588] sm:$0xff]
    %v3208 = vld [vmem:[%s12 + $0x590] sm:$0xf]
    %v3209 = vld [vmem:[%s12 + $0x594] sm:$0xff]
    %v3210 = vld [vmem:[%s12 + $0x59c] sm:$0xff]
    %v3211 = vld [vmem:[%s12 + $0x5a4] sm:$0xff]
    %v3212 = vld [vmem:[%s12 + $0x5ac] sm:$0xf]
    %v3213 = vld [vmem:[%s12 + $0x5b0] sm:$0xff]
    %v3214 = vld [vmem:[%s12 + $0x5b8] sm:$0xff]
    %v3215 = vld [vmem:[%s12 + $0x5c0] sm:$0xff]
    %v3216 = vld [vmem:[%s12 + $0x5c8] sm:$0xf]
    %v3217 = vld [vmem:[%s12 + $0x5cc] sm:$0xff]
    %v3218 = vld [vmem:[%s12 + $0x5d4] sm:$0xff]
    %v3219 = vld [vmem:[%s12 + $0x5dc] sm:$0xff]
    %v3220 = vld [vmem:[%s12 + $0x5e4] sm:$0xf]
    %v3221 = vld [vmem:[%s12 + $0x5e8] sm:$0xff]
    %v3222 = vld [vmem:[%s12 + $0x5f0] sm:$0xff]
    %v3223 = vld [vmem:[%s12 + $0x5f8] sm:$0xff]
    %v3224 = vld [vmem:[%s12 + $0x600] sm:$0xf]
    %v3225 = vld [vmem:[%s12 + $0x604] sm:$0xff]
    %v3226 = vld [vmem:[%s12 + $0x60c] sm:$0xff]
    %v3227 = vld [vmem:[%s12 + $0x614] sm:$0xff]
    %v3228 = vld [vmem:[%s12 + $0x61c] sm:$0xf]
    %v3229 = vld [vmem:[%s12 + $0x620] sm:$0xff]
    %v3230 = vld [vmem:[%s12 + $0x628] sm:$0xff]
    %v3231 = vld [vmem:[%s12 + $0x630] sm:$0xff]
    %v3232 = vld [vmem:[%s12 + $0x638] sm:$0xf]
    %v3233 = vld [vmem:[%s12 + $0x63c] sm:$0xff]
    %v3234 = vld [vmem:[%s12 + $0x644] sm:$0xff]
    %v3235 = vld [vmem:[%s12 + $0x64c] sm:$0xff]
    %v3236 = vld [vmem:[%s12 + $0x654] sm:$0xf]
    %v3237 = vld [vmem:[%s12 + $0x658] sm:$0xff]
    %v3238 = vld [vmem:[%s12 + $0x660] sm:$0xff]
    %v3239 = vld [vmem:[%s12 + $0x668] sm:$0xff]
    %v3240 = vld [vmem:[%s12 + $0x670] sm:$0xf]
    %v3241 = vld [vmem:[%s12 + $0x674] sm:$0xff]
    %v3242 = vld [vmem:[%s12 + $0x67c] sm:$0xff]
    %v3243 = vld [vmem:[%s12 + $0x684] sm:$0xff]
    %v3244 = vld [vmem:[%s12 + $0x68c] sm:$0xf]
    %v3245 = vld [vmem:[%s12 + $0x690] sm:$0xff]
    %v3246 = vld [vmem:[%s12 + $0x698] sm:$0xff]
    %v3247 = vld [vmem:[%s12 + $0x6a0] sm:$0xff]
    %v3248 = vld [vmem:[%s12 + $0x6a8] sm:$0xf]
    %v3249 = vld [vmem:[%s12 + $0x6ac] sm:$0xff]
    %v3250 = vld [vmem:[%s12 + $0x6b4] sm:$0xff]
    %v3251 = vld [vmem:[%s12 + $0x6bc] sm:$0xff]
    %v3252 = vld [vmem:[%s12 + $0x6c4] sm:$0xf]
    %v3253 = vld [vmem:[%s12 + $0x6c8] sm:$0xff]
    %v3254 = vld [vmem:[%s12 + $0x6d0] sm:$0xff]
    %v3255 = vld [vmem:[%s12 + $0x6d8] sm:$0xff]
    %v3256 = vld [vmem:[%s12 + $0x6e0] sm:$0xf]
    %v3257 = vld [vmem:[%s12 + $0x6e4] sm:$0xff]
    %v3258 = vld [vmem:[%s12 + $0x6ec] sm:$0xff]
    %v3259 = vld [vmem:[%s12 + $0x6f4] sm:$0xff]
    %v3260 = vld [vmem:[%s12 + $0x6fc] sm:$0xf]
    %v3261 = vld [vmem:[%s13] sm:$0x7f]
    %v3263 = vlaneseq
    %v3264 = vshrl.u32 %v3263, 7
    %v3265 = vsub.s32 0, %v3264
    %v3266 = vrot.slane %v3261, %v3265
    %v3267 = vlaneseq
    %v3268 = vshrl.u32 %v3267, 7
    %v3269 = vsub.s32 1, %v3268
    %v3270 = vrot.slane %v3261, %v3269
    %v3271 = vlaneseq
    %v3272 = vshrl.u32 %v3271, 7
    %v3273 = vsub.s32 2, %v3272
    %v3274 = vrot.slane %v3261, %v3273
    %v3275 = vlaneseq
    %v3276 = vshrl.u32 %v3275, 7
    %v3277 = vsub.s32 3, %v3276
    %v3278 = vrot.slane %v3261, %v3277
    %v3279 = vlaneseq
    %v3280 = vshrl.u32 %v3279, 7
    %v3281 = vsub.s32 4, %v3280
    %v3282 = vrot.slane %v3261, %v3281
    %v3283 = vlaneseq
    %v3284 = vshrl.u32 %v3283, 7
    %v3285 = vsub.s32 5, %v3284
    %v3286 = vrot.slane %v3261, %v3285
    %v3287 = vlaneseq
    %v3288 = vshrl.u32 %v3287, 7
    %v3289 = vsub.s32 6, %v3288
    %v3290 = vrot.slane %v3261, %v3289
    %v3554 = vunpack.c.l.b16 %v3005
    %v3555 = vunpack.c.h.b16 %v3005
    %v3556 = vunpack.c.l.b16 %v3006
    %v3557 = vunpack.c.h.b16 %v3006
    %v3558 = vunpack.c.l.b16 %v3007
    %v3559 = vunpack.c.h.b16 %v3007
    %v3560 = vunpack.c.l.b16 %v3008
    %v3561 = vunpack.c.l.b16 %v3009
    %v3562 = vunpack.c.h.b16 %v3009
    %v3563 = vunpack.c.l.b16 %v3010
    %v3564 = vunpack.c.h.b16 %v3010
    %v3565 = vunpack.c.l.b16 %v3011
    %v3566 = vunpack.c.h.b16 %v3011
    %v3567 = vunpack.c.l.b16 %v3012
    %v3568 = vunpack.c.l.b16 %v3013
    %v3569 = vunpack.c.h.b16 %v3013
    %v3570 = vunpack.c.l.b16 %v3014
    %v3571 = vunpack.c.h.b16 %v3014
    %v3572 = vunpack.c.l.b16 %v3015
    %v3573 = vunpack.c.h.b16 %v3015
    %v3574 = vunpack.c.l.b16 %v3016
    %v3575 = vunpack.c.l.b16 %v3017
    %v3576 = vunpack.c.h.b16 %v3017
    %v3577 = vunpack.c.l.b16 %v3018
    %v3578 = vunpack.c.h.b16 %v3018
    %v3579 = vunpack.c.l.b16 %v3019
    %v3580 = vunpack.c.h.b16 %v3019
    %v3581 = vunpack.c.l.b16 %v3020
    %v3582 = vunpack.c.l.b16 %v3021
    %v3583 = vunpack.c.h.b16 %v3021
    %v3584 = vunpack.c.l.b16 %v3022
    %v3585 = vunpack.c.h.b16 %v3022
    %v3586 = vunpack.c.l.b16 %v3023
    %v3587 = vunpack.c.h.b16 %v3023
    %v3588 = vunpack.c.l.b16 %v3024
    %v3589 = vunpack.c.l.b16 %v3025
    %v3590 = vunpack.c.h.b16 %v3025
    %v3591 = vunpack.c.l.b16 %v3026
    %v3592 = vunpack.c.h.b16 %v3026
    %v3593 = vunpack.c.l.b16 %v3027
    %v3594 = vunpack.c.h.b16 %v3027
    %v3595 = vunpack.c.l.b16 %v3028
    %v3596 = vunpack.c.l.b16 %v3029
    %v3597 = vunpack.c.h.b16 %v3029
    %v3598 = vunpack.c.l.b16 %v3030
    %v3599 = vunpack.c.h.b16 %v3030
    %v3600 = vunpack.c.l.b16 %v3031
    %v3601 = vunpack.c.h.b16 %v3031
    %v3602 = vunpack.c.l.b16 %v3032
    %v3603 = vunpack.c.l.b16 %v3033
    %v3604 = vunpack.c.h.b16 %v3033
    %v3605 = vunpack.c.l.b16 %v3034
    %v3606 = vunpack.c.h.b16 %v3034
    %v3607 = vunpack.c.l.b16 %v3035
    %v3608 = vunpack.c.h.b16 %v3035
    %v3609 = vunpack.c.l.b16 %v3036
    %v3610 = vunpack.c.l.b16 %v3037
    %v3611 = vunpack.c.h.b16 %v3037
    %v3612 = vunpack.c.l.b16 %v3038
    %v3613 = vunpack.c.h.b16 %v3038
    %v3614 = vunpack.c.l.b16 %v3039
    %v3615 = vunpack.c.h.b16 %v3039
    %v3616 = vunpack.c.l.b16 %v3040
    %v3617 = vunpack.c.l.b16 %v3041
    %v3618 = vunpack.c.h.b16 %v3041
    %v3619 = vunpack.c.l.b16 %v3042
    %v3620 = vunpack.c.h.b16 %v3042
    %v3621 = vunpack.c.l.b16 %v3043
    %v3622 = vunpack.c.h.b16 %v3043
    %v3623 = vunpack.c.l.b16 %v3044
    %v3624 = vunpack.c.l.b16 %v3045
    %v3625 = vunpack.c.h.b16 %v3045
    %v3626 = vunpack.c.l.b16 %v3046
    %v3627 = vunpack.c.h.b16 %v3046
    %v3628 = vunpack.c.l.b16 %v3047
    %v3629 = vunpack.c.h.b16 %v3047
    %v3630 = vunpack.c.l.b16 %v3048
    %v3631 = vunpack.c.l.b16 %v3049
    %v3632 = vunpack.c.h.b16 %v3049
    %v3633 = vunpack.c.l.b16 %v3050
    %v3634 = vunpack.c.h.b16 %v3050
    %v3635 = vunpack.c.l.b16 %v3051
    %v3636 = vunpack.c.h.b16 %v3051
    %v3637 = vunpack.c.l.b16 %v3052
    %v3638 = vunpack.c.l.b16 %v3053
    %v3639 = vunpack.c.h.b16 %v3053
    %v3640 = vunpack.c.l.b16 %v3054
    %v3641 = vunpack.c.h.b16 %v3054
    %v3642 = vunpack.c.l.b16 %v3055
    %v3643 = vunpack.c.h.b16 %v3055
    %v3644 = vunpack.c.l.b16 %v3056
    %v3645 = vunpack.c.l.b16 %v3057
    %v3646 = vunpack.c.h.b16 %v3057
    %v3647 = vunpack.c.l.b16 %v3058
    %v3648 = vunpack.c.h.b16 %v3058
    %v3649 = vunpack.c.l.b16 %v3059
    %v3650 = vunpack.c.h.b16 %v3059
    %v3651 = vunpack.c.l.b16 %v3060
    %v3652 = vunpack.c.l.b16 %v3061
    %v3653 = vunpack.c.h.b16 %v3061
    %v3654 = vunpack.c.l.b16 %v3062
    %v3655 = vunpack.c.h.b16 %v3062
    %v3656 = vunpack.c.l.b16 %v3063
    %v3657 = vunpack.c.h.b16 %v3063
    %v3658 = vunpack.c.l.b16 %v3064
    %v3659 = vunpack.c.l.b16 %v3065
    %v3660 = vunpack.c.h.b16 %v3065
    %v3661 = vunpack.c.l.b16 %v3066
    %v3662 = vunpack.c.h.b16 %v3066
    %v3663 = vunpack.c.l.b16 %v3067
    %v3664 = vunpack.c.h.b16 %v3067
    %v3665 = vunpack.c.l.b16 %v3068
    %v3666 = vunpack.c.l.b16 %v3069
    %v3667 = vunpack.c.h.b16 %v3069
    %v3668 = vunpack.c.l.b16 %v3070
    %v3669 = vunpack.c.h.b16 %v3070
    %v3670 = vunpack.c.l.b16 %v3071
    %v3671 = vunpack.c.h.b16 %v3071
    %v3672 = vunpack.c.l.b16 %v3072
    %v3673 = vunpack.c.l.b16 %v3073
    %v3674 = vunpack.c.h.b16 %v3073
    %v3675 = vunpack.c.l.b16 %v3074
    %v3676 = vunpack.c.h.b16 %v3074
    %v3677 = vunpack.c.l.b16 %v3075
    %v3678 = vunpack.c.h.b16 %v3075
    %v3679 = vunpack.c.l.b16 %v3076
    %v3680 = vunpack.c.l.b16 %v3077
    %v3681 = vunpack.c.h.b16 %v3077
    %v3682 = vunpack.c.l.b16 %v3078
    %v3683 = vunpack.c.h.b16 %v3078
    %v3684 = vunpack.c.l.b16 %v3079
    %v3685 = vunpack.c.h.b16 %v3079
    %v3686 = vunpack.c.l.b16 %v3080
    %v3687 = vunpack.c.l.b16 %v3081
    %v3688 = vunpack.c.h.b16 %v3081
    %v3689 = vunpack.c.l.b16 %v3082
    %v3690 = vunpack.c.h.b16 %v3082
    %v3691 = vunpack.c.l.b16 %v3083
    %v3692 = vunpack.c.h.b16 %v3083
    %v3693 = vunpack.c.l.b16 %v3084
    %v3694 = vunpack.c.l.b16 %v3085
    %v3695 = vunpack.c.h.b16 %v3085
    %v3696 = vunpack.c.l.b16 %v3086
    %v3697 = vunpack.c.h.b16 %v3086
    %v3698 = vunpack.c.l.b16 %v3087
    %v3699 = vunpack.c.h.b16 %v3087
    %v3700 = vunpack.c.l.b16 %v3088
    %v3701 = vunpack.c.l.b16 %v3089
    %v3702 = vunpack.c.h.b16 %v3089
    %v3703 = vunpack.c.l.b16 %v3090
    %v3704 = vunpack.c.h.b16 %v3090
    %v3705 = vunpack.c.l.b16 %v3091
    %v3706 = vunpack.c.h.b16 %v3091
    %v3707 = vunpack.c.l.b16 %v3092
    %v3708 = vunpack.c.l.b16 %v3093
    %v3709 = vunpack.c.h.b16 %v3093
    %v3710 = vunpack.c.l.b16 %v3094
    %v3711 = vunpack.c.h.b16 %v3094
    %v3712 = vunpack.c.l.b16 %v3095
    %v3713 = vunpack.c.h.b16 %v3095
    %v3714 = vunpack.c.l.b16 %v3096
    %v3715 = vunpack.c.l.b16 %v3097
    %v3716 = vunpack.c.h.b16 %v3097
    %v3717 = vunpack.c.l.b16 %v3098
    %v3718 = vunpack.c.h.b16 %v3098
    %v3719 = vunpack.c.l.b16 %v3099
    %v3720 = vunpack.c.h.b16 %v3099
    %v3721 = vunpack.c.l.b16 %v3100
    %v3722 = vunpack.c.l.b16 %v3101
    %v3723 = vunpack.c.h.b16 %v3101
    %v3724 = vunpack.c.l.b16 %v3102
    %v3725 = vunpack.c.h.b16 %v3102
    %v3726 = vunpack.c.l.b16 %v3103
    %v3727 = vunpack.c.h.b16 %v3103
    %v3728 = vunpack.c.l.b16 %v3104
    %v3729 = vunpack.c.l.b16 %v3105
    %v3730 = vunpack.c.h.b16 %v3105
    %v3731 = vunpack.c.l.b16 %v3106
    %v3732 = vunpack.c.h.b16 %v3106
    %v3733 = vunpack.c.l.b16 %v3107
    %v3734 = vunpack.c.h.b16 %v3107
    %v3735 = vunpack.c.l.b16 %v3108
    %v3736 = vunpack.c.l.b16 %v3109
    %v3737 = vunpack.c.h.b16 %v3109
    %v3738 = vunpack.c.l.b16 %v3110
    %v3739 = vunpack.c.h.b16 %v3110
    %v3740 = vunpack.c.l.b16 %v3111
    %v3741 = vunpack.c.h.b16 %v3111
    %v3742 = vunpack.c.l.b16 %v3112
    %v3743 = vunpack.c.l.b16 %v3113
    %v3744 = vunpack.c.h.b16 %v3113
    %v3745 = vunpack.c.l.b16 %v3114
    %v3746 = vunpack.c.h.b16 %v3114
    %v3747 = vunpack.c.l.b16 %v3115
    %v3748 = vunpack.c.h.b16 %v3115
    %v3749 = vunpack.c.l.b16 %v3116
    %v3750 = vunpack.c.l.b16 %v3117
    %v3751 = vunpack.c.h.b16 %v3117
    %v3752 = vunpack.c.l.b16 %v3118
    %v3753 = vunpack.c.h.b16 %v3118
    %v3754 = vunpack.c.l.b16 %v3119
    %v3755 = vunpack.c.h.b16 %v3119
    %v3756 = vunpack.c.l.b16 %v3120
    %v3757 = vunpack.c.l.b16 %v3121
    %v3758 = vunpack.c.h.b16 %v3121
    %v3759 = vunpack.c.l.b16 %v3122
    %v3760 = vunpack.c.h.b16 %v3122
    %v3761 = vunpack.c.l.b16 %v3123
    %v3762 = vunpack.c.h.b16 %v3123
    %v3763 = vunpack.c.l.b16 %v3124
    %v3764 = vunpack.c.l.b16 %v3125
    %v3765 = vunpack.c.h.b16 %v3125
    %v3766 = vunpack.c.l.b16 %v3126
    %v3767 = vunpack.c.h.b16 %v3126
    %v3768 = vunpack.c.l.b16 %v3127
    %v3769 = vunpack.c.h.b16 %v3127
    %v3770 = vunpack.c.l.b16 %v3128
    %v3771 = vunpack.c.l.b16 %v3129
    %v3772 = vunpack.c.h.b16 %v3129
    %v3773 = vunpack.c.l.b16 %v3130
    %v3774 = vunpack.c.h.b16 %v3130
    %v3775 = vunpack.c.l.b16 %v3131
    %v3776 = vunpack.c.h.b16 %v3131
    %v3777 = vunpack.c.l.b16 %v3132
    %v3778 = vunpack.c.l.b16 %v3133
    %v3779 = vunpack.c.h.b16 %v3133
    %v3780 = vunpack.c.l.b16 %v3134
    %v3781 = vunpack.c.h.b16 %v3134
    %v3782 = vunpack.c.l.b16 %v3135
    %v3783 = vunpack.c.h.b16 %v3135
    %v3784 = vunpack.c.l.b16 %v3136
    %v3785 = vunpack.c.l.b16 %v3137
    %v3786 = vunpack.c.h.b16 %v3137
    %v3787 = vunpack.c.l.b16 %v3138
    %v3788 = vunpack.c.h.b16 %v3138
    %v3789 = vunpack.c.l.b16 %v3139
    %v3790 = vunpack.c.h.b16 %v3139
    %v3791 = vunpack.c.l.b16 %v3140
    %v3792 = vunpack.c.l.b16 %v3141
    %v3793 = vunpack.c.h.b16 %v3141
    %v3794 = vunpack.c.l.b16 %v3142
    %v3795 = vunpack.c.h.b16 %v3142
    %v3796 = vunpack.c.l.b16 %v3143
    %v3797 = vunpack.c.h.b16 %v3143
    %v3798 = vunpack.c.l.b16 %v3144
    %v3799 = vunpack.c.l.b16 %v3145
    %v3800 = vunpack.c.h.b16 %v3145
    %v3801 = vunpack.c.l.b16 %v3146
    %v3802 = vunpack.c.h.b16 %v3146
    %v3803 = vunpack.c.l.b16 %v3147
    %v3804 = vunpack.c.h.b16 %v3147
    %v3805 = vunpack.c.l.b16 %v3148
    %v3806 = vunpack.c.l.b16 %v3149
    %v3807 = vunpack.c.h.b16 %v3149
    %v3808 = vunpack.c.l.b16 %v3150
    %v3809 = vunpack.c.h.b16 %v3150
    %v3810 = vunpack.c.l.b16 %v3151
    %v3811 = vunpack.c.h.b16 %v3151
    %v3812 = vunpack.c.l.b16 %v3152
    %v3813 = vunpack.c.l.b16 %v3153
    %v3814 = vunpack.c.h.b16 %v3153
    %v3815 = vunpack.c.l.b16 %v3154
    %v3816 = vunpack.c.h.b16 %v3154
    %v3817 = vunpack.c.l.b16 %v3155
    %v3818 = vunpack.c.h.b16 %v3155
    %v3819 = vunpack.c.l.b16 %v3156
    %v3820 = vunpack.c.l.b16 %v3157
    %v3821 = vunpack.c.h.b16 %v3157
    %v3822 = vunpack.c.l.b16 %v3158
    %v3823 = vunpack.c.h.b16 %v3158
    %v3824 = vunpack.c.l.b16 %v3159
    %v3825 = vunpack.c.h.b16 %v3159
    %v3826 = vunpack.c.l.b16 %v3160
    %v3827 = vunpack.c.l.b16 %v3161
    %v3828 = vunpack.c.h.b16 %v3161
    %v3829 = vunpack.c.l.b16 %v3162
    %v3830 = vunpack.c.h.b16 %v3162
    %v3831 = vunpack.c.l.b16 %v3163
    %v3832 = vunpack.c.h.b16 %v3163
    %v3833 = vunpack.c.l.b16 %v3164
    %v3834 = vunpack.c.l.b16 %v3165
    %v3835 = vunpack.c.h.b16 %v3165
    %v3836 = vunpack.c.l.b16 %v3166
    %v3837 = vunpack.c.h.b16 %v3166
    %v3838 = vunpack.c.l.b16 %v3167
    %v3839 = vunpack.c.h.b16 %v3167
    %v3840 = vunpack.c.l.b16 %v3168
    %v3841 = vunpack.c.l.b16 %v3169
    %v3842 = vunpack.c.h.b16 %v3169
    %v3843 = vunpack.c.l.b16 %v3170
    %v3844 = vunpack.c.h.b16 %v3170
    %v3845 = vunpack.c.l.b16 %v3171
    %v3846 = vunpack.c.h.b16 %v3171
    %v3847 = vunpack.c.l.b16 %v3172
    %v3848 = vunpack.c.l.b16 %v3173
    %v3849 = vunpack.c.h.b16 %v3173
    %v3850 = vunpack.c.l.b16 %v3174
    %v3851 = vunpack.c.h.b16 %v3174
    %v3852 = vunpack.c.l.b16 %v3175
    %v3853 = vunpack.c.h.b16 %v3175
    %v3854 = vunpack.c.l.b16 %v3176
    %v3855 = vunpack.c.l.b16 %v3177
    %v3856 = vunpack.c.h.b16 %v3177
    %v3857 = vunpack.c.l.b16 %v3178
    %v3858 = vunpack.c.h.b16 %v3178
    %v3859 = vunpack.c.l.b16 %v3179
    %v3860 = vunpack.c.h.b16 %v3179
    %v3861 = vunpack.c.l.b16 %v3180
    %v3862 = vunpack.c.l.b16 %v3181
    %v3863 = vunpack.c.h.b16 %v3181
    %v3864 = vunpack.c.l.b16 %v3182
    %v3865 = vunpack.c.h.b16 %v3182
    %v3866 = vunpack.c.l.b16 %v3183
    %v3867 = vunpack.c.h.b16 %v3183
    %v3868 = vunpack.c.l.b16 %v3184
    %v3869 = vunpack.c.l.b16 %v3185
    %v3870 = vunpack.c.h.b16 %v3185
    %v3871 = vunpack.c.l.b16 %v3186
    %v3872 = vunpack.c.h.b16 %v3186
    %v3873 = vunpack.c.l.b16 %v3187
    %v3874 = vunpack.c.h.b16 %v3187
    %v3875 = vunpack.c.l.b16 %v3188
    %v3876 = vunpack.c.l.b16 %v3189
    %v3877 = vunpack.c.h.b16 %v3189
    %v3878 = vunpack.c.l.b16 %v3190
    %v3879 = vunpack.c.h.b16 %v3190
    %v3880 = vunpack.c.l.b16 %v3191
    %v3881 = vunpack.c.h.b16 %v3191
    %v3882 = vunpack.c.l.b16 %v3192
    %v3883 = vunpack.c.l.b16 %v3193
    %v3884 = vunpack.c.h.b16 %v3193
    %v3885 = vunpack.c.l.b16 %v3194
    %v3886 = vunpack.c.h.b16 %v3194
    %v3887 = vunpack.c.l.b16 %v3195
    %v3888 = vunpack.c.h.b16 %v3195
    %v3889 = vunpack.c.l.b16 %v3196
    %v3890 = vunpack.c.l.b16 %v3197
    %v3891 = vunpack.c.h.b16 %v3197
    %v3892 = vunpack.c.l.b16 %v3198
    %v3893 = vunpack.c.h.b16 %v3198
    %v3894 = vunpack.c.l.b16 %v3199
    %v3895 = vunpack.c.h.b16 %v3199
    %v3896 = vunpack.c.l.b16 %v3200
    %v3897 = vunpack.c.l.b16 %v3201
    %v3898 = vunpack.c.h.b16 %v3201
    %v3899 = vunpack.c.l.b16 %v3202
    %v3900 = vunpack.c.h.b16 %v3202
    %v3901 = vunpack.c.l.b16 %v3203
    %v3902 = vunpack.c.h.b16 %v3203
    %v3903 = vunpack.c.l.b16 %v3204
    %v3904 = vunpack.c.l.b16 %v3205
    %v3905 = vunpack.c.h.b16 %v3205
    %v3906 = vunpack.c.l.b16 %v3206
    %v3907 = vunpack.c.h.b16 %v3206
    %v3908 = vunpack.c.l.b16 %v3207
    %v3909 = vunpack.c.h.b16 %v3207
    %v3910 = vunpack.c.l.b16 %v3208
    %v3911 = vunpack.c.l.b16 %v3209
    %v3912 = vunpack.c.h.b16 %v3209
    %v3913 = vunpack.c.l.b16 %v3210
    %v3914 = vunpack.c.h.b16 %v3210
    %v3915 = vunpack.c.l.b16 %v3211
    %v3916 = vunpack.c.h.b16 %v3211
    %v3917 = vunpack.c.l.b16 %v3212
    %v3918 = vunpack.c.l.b16 %v3213
    %v3919 = vunpack.c.h.b16 %v3213
    %v3920 = vunpack.c.l.b16 %v3214
    %v3921 = vunpack.c.h.b16 %v3214
    %v3922 = vunpack.c.l.b16 %v3215
    %v3923 = vunpack.c.h.b16 %v3215
    %v3924 = vunpack.c.l.b16 %v3216
    %v3925 = vunpack.c.l.b16 %v3217
    %v3926 = vunpack.c.h.b16 %v3217
    %v3927 = vunpack.c.l.b16 %v3218
    %v3928 = vunpack.c.h.b16 %v3218
    %v3929 = vunpack.c.l.b16 %v3219
    %v3930 = vunpack.c.h.b16 %v3219
    %v3931 = vunpack.c.l.b16 %v3220
    %v3932 = vunpack.c.l.b16 %v3221
    %v3933 = vunpack.c.h.b16 %v3221
    %v3934 = vunpack.c.l.b16 %v3222
    %v3935 = vunpack.c.h.b16 %v3222
    %v3936 = vunpack.c.l.b16 %v3223
    %v3937 = vunpack.c.h.b16 %v3223
    %v3938 = vunpack.c.l.b16 %v3224
    %v3939 = vunpack.c.l.b16 %v3225
    %v3940 = vunpack.c.h.b16 %v3225
    %v3941 = vunpack.c.l.b16 %v3226
    %v3942 = vunpack.c.h.b16 %v3226
    %v3943 = vunpack.c.l.b16 %v3227
    %v3944 = vunpack.c.h.b16 %v3227
    %v3945 = vunpack.c.l.b16 %v3228
    %v3946 = vunpack.c.l.b16 %v3229
    %v3947 = vunpack.c.h.b16 %v3229
    %v3948 = vunpack.c.l.b16 %v3230
    %v3949 = vunpack.c.h.b16 %v3230
    %v3950 = vunpack.c.l.b16 %v3231
    %v3951 = vunpack.c.h.b16 %v3231
    %v3952 = vunpack.c.l.b16 %v3232
    %v3953 = vunpack.c.l.b16 %v3233
    %v3954 = vunpack.c.h.b16 %v3233
    %v3955 = vunpack.c.l.b16 %v3234
    %v3956 = vunpack.c.h.b16 %v3234
    %v3957 = vunpack.c.l.b16 %v3235
    %v3958 = vunpack.c.h.b16 %v3235
    %v3959 = vunpack.c.l.b16 %v3236
    %v3960 = vunpack.c.l.b16 %v3237
    %v3961 = vunpack.c.h.b16 %v3237
    %v3962 = vunpack.c.l.b16 %v3238
    %v3963 = vunpack.c.h.b16 %v3238
    %v3964 = vunpack.c.l.b16 %v3239
    %v3965 = vunpack.c.h.b16 %v3239
    %v3966 = vunpack.c.l.b16 %v3240
    %v3967 = vunpack.c.l.b16 %v3241
    %v3968 = vunpack.c.h.b16 %v3241
    %v3969 = vunpack.c.l.b16 %v3242
    %v3970 = vunpack.c.h.b16 %v3242
    %v3971 = vunpack.c.l.b16 %v3243
    %v3972 = vunpack.c.h.b16 %v3243
    %v3973 = vunpack.c.l.b16 %v3244
    %v3974 = vunpack.c.l.b16 %v3245
    %v3975 = vunpack.c.h.b16 %v3245
    %v3976 = vunpack.c.l.b16 %v3246
    %v3977 = vunpack.c.h.b16 %v3246
    %v3978 = vunpack.c.l.b16 %v3247
    %v3979 = vunpack.c.h.b16 %v3247
    %v3980 = vunpack.c.l.b16 %v3248
    %v3981 = vunpack.c.l.b16 %v3249
    %v3982 = vunpack.c.h.b16 %v3249
    %v3983 = vunpack.c.l.b16 %v3250
    %v3984 = vunpack.c.h.b16 %v3250
    %v3985 = vunpack.c.l.b16 %v3251
    %v3986 = vunpack.c.h.b16 %v3251
    %v3987 = vunpack.c.l.b16 %v3252
    %v3988 = vunpack.c.l.b16 %v3253
    %v3989 = vunpack.c.h.b16 %v3253
    %v3990 = vunpack.c.l.b16 %v3254
    %v3991 = vunpack.c.h.b16 %v3254
    %v3992 = vunpack.c.l.b16 %v3255
    %v3993 = vunpack.c.h.b16 %v3255
    %v3994 = vunpack.c.l.b16 %v3256
    %v3995 = vunpack.c.l.b16 %v3257
    %v3996 = vunpack.c.h.b16 %v3257
    %v3997 = vunpack.c.l.b16 %v3258
    %v3998 = vunpack.c.h.b16 %v3258
    %v3999 = vunpack.c.l.b16 %v3259
    %v4000 = vunpack.c.h.b16 %v3259
    %v4001 = vunpack.c.l.b16 %v3260
    %v4002 = vpack.c.b16 %v3561, %v3554
    %v4003 = vpack.c.b16 %v3562, %v3555
    %v4004 = vpack.c.b16 %v3563, %v3556
    %v4005 = vpack.c.b16 %v3564, %v3557
    %v4006 = vpack.c.b16 %v3565, %v3558
    %v4007 = vpack.c.b16 %v3566, %v3559
    %v4008 = vpack.c.b16 %v3567, %v3560
    %v4009 = vpack.c.b16 %v3575, %v3568
    %v4010 = vpack.c.b16 %v3576, %v3569
    %v4011 = vpack.c.b16 %v3577, %v3570
    %v4012 = vpack.c.b16 %v3578, %v3571
    %v4013 = vpack.c.b16 %v3579, %v3572
    %v4014 = vpack.c.b16 %v3580, %v3573
    %v4015 = vpack.c.b16 %v3581, %v3574
    %v4016 = vpack.c.b16 %v3589, %v3582
    %v4017 = vpack.c.b16 %v3590, %v3583
    %v4018 = vpack.c.b16 %v3591, %v3584
    %v4019 = vpack.c.b16 %v3592, %v3585
    %v4020 = vpack.c.b16 %v3593, %v3586
    %v4021 = vpack.c.b16 %v3594, %v3587
    %v4022 = vpack.c.b16 %v3595, %v3588
    %v4023 = vpack.c.b16 %v3603, %v3596
    %v4024 = vpack.c.b16 %v3604, %v3597
    %v4025 = vpack.c.b16 %v3605, %v3598
    %v4026 = vpack.c.b16 %v3606, %v3599
    %v4027 = vpack.c.b16 %v3607, %v3600
    %v4028 = vpack.c.b16 %v3608, %v3601
    %v4029 = vpack.c.b16 %v3609, %v3602
    %v4030 = vpack.c.b16 %v3617, %v3610
    %v4031 = vpack.c.b16 %v3618, %v3611
    %v4032 = vpack.c.b16 %v3619, %v3612
    %v4033 = vpack.c.b16 %v3620, %v3613
    %v4034 = vpack.c.b16 %v3621, %v3614
    %v4035 = vpack.c.b16 %v3622, %v3615
    %v4036 = vpack.c.b16 %v3623, %v3616
    %v4037 = vpack.c.b16 %v3631, %v3624
    %v4038 = vpack.c.b16 %v3632, %v3625
    %v4039 = vpack.c.b16 %v3633, %v3626
    %v4040 = vpack.c.b16 %v3634, %v3627
    %v4041 = vpack.c.b16 %v3635, %v3628
    %v4042 = vpack.c.b16 %v3636, %v3629
    %v4043 = vpack.c.b16 %v3637, %v3630
    %v4044 = vpack.c.b16 %v3645, %v3638
    %v4045 = vpack.c.b16 %v3646, %v3639
    %v4046 = vpack.c.b16 %v3647, %v3640
    %v4047 = vpack.c.b16 %v3648, %v3641
    %v4048 = vpack.c.b16 %v3649, %v3642
    %v4049 = vpack.c.b16 %v3650, %v3643
    %v4050 = vpack.c.b16 %v3651, %v3644
    %v4051 = vpack.c.b16 %v3659, %v3652
    %v4052 = vpack.c.b16 %v3660, %v3653
    %v4053 = vpack.c.b16 %v3661, %v3654
    %v4054 = vpack.c.b16 %v3662, %v3655
    %v4055 = vpack.c.b16 %v3663, %v3656
    %v4056 = vpack.c.b16 %v3664, %v3657
    %v4057 = vpack.c.b16 %v3665, %v3658
    %v4058 = vpack.c.b16 %v3673, %v3666
    %v4059 = vpack.c.b16 %v3674, %v3667
    %v4060 = vpack.c.b16 %v3675, %v3668
    %v4061 = vpack.c.b16 %v3676, %v3669
    %v4062 = vpack.c.b16 %v3677, %v3670
    %v4063 = vpack.c.b16 %v3678, %v3671
    %v4064 = vpack.c.b16 %v3679, %v3672
    %v4065 = vpack.c.b16 %v3687, %v3680
    %v4066 = vpack.c.b16 %v3688, %v3681
    %v4067 = vpack.c.b16 %v3689, %v3682
    %v4068 = vpack.c.b16 %v3690, %v3683
    %v4069 = vpack.c.b16 %v3691, %v3684
    %v4070 = vpack.c.b16 %v3692, %v3685
    %v4071 = vpack.c.b16 %v3693, %v3686
    %v4072 = vpack.c.b16 %v3701, %v3694
    %v4073 = vpack.c.b16 %v3702, %v3695
    %v4074 = vpack.c.b16 %v3703, %v3696
    %v4075 = vpack.c.b16 %v3704, %v3697
    %v4076 = vpack.c.b16 %v3705, %v3698
    %v4077 = vpack.c.b16 %v3706, %v3699
    %v4078 = vpack.c.b16 %v3707, %v3700
    %v4079 = vpack.c.b16 %v3715, %v3708
    %v4080 = vpack.c.b16 %v3716, %v3709
    %v4081 = vpack.c.b16 %v3717, %v3710
    %v4082 = vpack.c.b16 %v3718, %v3711
    %v4083 = vpack.c.b16 %v3719, %v3712
    %v4084 = vpack.c.b16 %v3720, %v3713
    %v4085 = vpack.c.b16 %v3721, %v3714
    %v4086 = vpack.c.b16 %v3729, %v3722
    %v4087 = vpack.c.b16 %v3730, %v3723
    %v4088 = vpack.c.b16 %v3731, %v3724
    %v4089 = vpack.c.b16 %v3732, %v3725
    %v4090 = vpack.c.b16 %v3733, %v3726
    %v4091 = vpack.c.b16 %v3734, %v3727
    %v4092 = vpack.c.b16 %v3735, %v3728
    %v4093 = vpack.c.b16 %v3743, %v3736
    %v4094 = vpack.c.b16 %v3744, %v3737
    %v4095 = vpack.c.b16 %v3745, %v3738
    %v4096 = vpack.c.b16 %v3746, %v3739
    %v4097 = vpack.c.b16 %v3747, %v3740
    %v4098 = vpack.c.b16 %v3748, %v3741
    %v4099 = vpack.c.b16 %v3749, %v3742
    %v4100 = vpack.c.b16 %v3757, %v3750
    %v4101 = vpack.c.b16 %v3758, %v3751
    %v4102 = vpack.c.b16 %v3759, %v3752
    %v4103 = vpack.c.b16 %v3760, %v3753
    %v4104 = vpack.c.b16 %v3761, %v3754
    %v4105 = vpack.c.b16 %v3762, %v3755
    %v4106 = vpack.c.b16 %v3763, %v3756
    %v4107 = vpack.c.b16 %v3771, %v3764
    %v4108 = vpack.c.b16 %v3772, %v3765
    %v4109 = vpack.c.b16 %v3773, %v3766
    %v4110 = vpack.c.b16 %v3774, %v3767
    %v4111 = vpack.c.b16 %v3775, %v3768
    %v4112 = vpack.c.b16 %v3776, %v3769
    %v4113 = vpack.c.b16 %v3777, %v3770
    %v4114 = vpack.c.b16 %v3785, %v3778
    %v4115 = vpack.c.b16 %v3786, %v3779
    %v4116 = vpack.c.b16 %v3787, %v3780
    %v4117 = vpack.c.b16 %v3788, %v3781
    %v4118 = vpack.c.b16 %v3789, %v3782
    %v4119 = vpack.c.b16 %v3790, %v3783
    %v4120 = vpack.c.b16 %v3791, %v3784
    %v4121 = vpack.c.b16 %v3799, %v3792
    %v4122 = vpack.c.b16 %v3800, %v3793
    %v4123 = vpack.c.b16 %v3801, %v3794
    %v4124 = vpack.c.b16 %v3802, %v3795
    %v4125 = vpack.c.b16 %v3803, %v3796
    %v4126 = vpack.c.b16 %v3804, %v3797
    %v4127 = vpack.c.b16 %v3805, %v3798
    %v4128 = vpack.c.b16 %v3813, %v3806
    %v4129 = vpack.c.b16 %v3814, %v3807
    %v4130 = vpack.c.b16 %v3815, %v3808
    %v4131 = vpack.c.b16 %v3816, %v3809
    %v4132 = vpack.c.b16 %v3817, %v3810
    %v4133 = vpack.c.b16 %v3818, %v3811
    %v4134 = vpack.c.b16 %v3819, %v3812
    %v4135 = vpack.c.b16 %v3827, %v3820
    %v4136 = vpack.c.b16 %v3828, %v3821
    %v4137 = vpack.c.b16 %v3829, %v3822
    %v4138 = vpack.c.b16 %v3830, %v3823
    %v4139 = vpack.c.b16 %v3831, %v3824
    %v4140 = vpack.c.b16 %v3832, %v3825
    %v4141 = vpack.c.b16 %v3833, %v3826
    %v4142 = vpack.c.b16 %v3841, %v3834
    %v4143 = vpack.c.b16 %v3842, %v3835
    %v4144 = vpack.c.b16 %v3843, %v3836
    %v4145 = vpack.c.b16 %v3844, %v3837
    %v4146 = vpack.c.b16 %v3845, %v3838
    %v4147 = vpack.c.b16 %v3846, %v3839
    %v4148 = vpack.c.b16 %v3847, %v3840
    %v4149 = vpack.c.b16 %v3855, %v3848
    %v4150 = vpack.c.b16 %v3856, %v3849
    %v4151 = vpack.c.b16 %v3857, %v3850
    %v4152 = vpack.c.b16 %v3858, %v3851
    %v4153 = vpack.c.b16 %v3859, %v3852
    %v4154 = vpack.c.b16 %v3860, %v3853
    %v4155 = vpack.c.b16 %v3861, %v3854
    %v4156 = vpack.c.b16 %v3869, %v3862
    %v4157 = vpack.c.b16 %v3870, %v3863
    %v4158 = vpack.c.b16 %v3871, %v3864
    %v4159 = vpack.c.b16 %v3872, %v3865
    %v4160 = vpack.c.b16 %v3873, %v3866
    %v4161 = vpack.c.b16 %v3874, %v3867
    %v4162 = vpack.c.b16 %v3875, %v3868
    %v4163 = vpack.c.b16 %v3883, %v3876
    %v4164 = vpack.c.b16 %v3884, %v3877
    %v4165 = vpack.c.b16 %v3885, %v3878
    %v4166 = vpack.c.b16 %v3886, %v3879
    %v4167 = vpack.c.b16 %v3887, %v3880
    %v4168 = vpack.c.b16 %v3888, %v3881
    %v4169 = vpack.c.b16 %v3889, %v3882
    %v4170 = vpack.c.b16 %v3897, %v3890
    %v4171 = vpack.c.b16 %v3898, %v3891
    %v4172 = vpack.c.b16 %v3899, %v3892
    %v4173 = vpack.c.b16 %v3900, %v3893
    %v4174 = vpack.c.b16 %v3901, %v3894
    %v4175 = vpack.c.b16 %v3902, %v3895
    %v4176 = vpack.c.b16 %v3903, %v3896
    %v4177 = vpack.c.b16 %v3911, %v3904
    %v4178 = vpack.c.b16 %v3912, %v3905
    %v4179 = vpack.c.b16 %v3913, %v3906
    %v4180 = vpack.c.b16 %v3914, %v3907
    %v4181 = vpack.c.b16 %v3915, %v3908
    %v4182 = vpack.c.b16 %v3916, %v3909
    %v4183 = vpack.c.b16 %v3917, %v3910
    %v4184 = vpack.c.b16 %v3925, %v3918
    %v4185 = vpack.c.b16 %v3926, %v3919
    %v4186 = vpack.c.b16 %v3927, %v3920
    %v4187 = vpack.c.b16 %v3928, %v3921
    %v4188 = vpack.c.b16 %v3929, %v3922
    %v4189 = vpack.c.b16 %v3930, %v3923
    %v4190 = vpack.c.b16 %v3931, %v3924
    %v4191 = vpack.c.b16 %v3939, %v3932
    %v4192 = vpack.c.b16 %v3940, %v3933
    %v4193 = vpack.c.b16 %v3941, %v3934
    %v4194 = vpack.c.b16 %v3942, %v3935
    %v4195 = vpack.c.b16 %v3943, %v3936
    %v4196 = vpack.c.b16 %v3944, %v3937
    %v4197 = vpack.c.b16 %v3945, %v3938
    %v4198 = vpack.c.b16 %v3953, %v3946
    %v4199 = vpack.c.b16 %v3954, %v3947
    %v4200 = vpack.c.b16 %v3955, %v3948
    %v4201 = vpack.c.b16 %v3956, %v3949
    %v4202 = vpack.c.b16 %v3957, %v3950
    %v4203 = vpack.c.b16 %v3958, %v3951
    %v4204 = vpack.c.b16 %v3959, %v3952
    %v4205 = vpack.c.b16 %v3967, %v3960
    %v4206 = vpack.c.b16 %v3968, %v3961
    %v4207 = vpack.c.b16 %v3969, %v3962
    %v4208 = vpack.c.b16 %v3970, %v3963
    %v4209 = vpack.c.b16 %v3971, %v3964
    %v4210 = vpack.c.b16 %v3972, %v3965
    %v4211 = vpack.c.b16 %v3973, %v3966
    %v4212 = vpack.c.b16 %v3981, %v3974
    %v4213 = vpack.c.b16 %v3982, %v3975
    %v4214 = vpack.c.b16 %v3983, %v3976
    %v4215 = vpack.c.b16 %v3984, %v3977
    %v4216 = vpack.c.b16 %v3985, %v3978
    %v4217 = vpack.c.b16 %v3986, %v3979
    %v4218 = vpack.c.b16 %v3987, %v3980
    %v4219 = vpack.c.b16 %v3995, %v3988
    %v4220 = vpack.c.b16 %v3996, %v3989
    %v4221 = vpack.c.b16 %v3997, %v3990
    %v4222 = vpack.c.b16 %v3998, %v3991
    %v4223 = vpack.c.b16 %v3999, %v3992
    %v4224 = vpack.c.b16 %v4000, %v3993
    %v4225 = vpack.c.b16 %v4001, %v3994
    %4450 = vmatprep.subr.bf16.mxu0 %v4003
    %4451 = vmatpush1.bf16.msra.mxu0 %v4002
    %4452 = vmatprep.subr.bf16.mxu0 %v4010
    %4453 = vmatpush1.bf16.msra.mxu0 %v4009
    %4454 = vmatprep.subr.bf16.mxu0 %v4017
    %4455 = vmatpush1.bf16.msra.mxu0 %v4016
    %4456 = vmatprep.subr.bf16.mxu0 %v4024
    %4457 = vmatpush1.bf16.msra.mxu0 %v4023
    %4458 = vmatprep.subr.bf16.mxu0 %v4031
    %4459 = vmatpush1.bf16.msra.mxu0 %v4030
    %4460 = vmatprep.subr.bf16.mxu0 %v4038
    %4461 = vmatpush1.bf16.msra.mxu0 %v4037
    %4462 = vmatprep.subr.bf16.mxu0 %v4045
    %4463 = vmatpush1.bf16.msra.mxu0 %v4044
    %4464 = vmatprep.subr.bf16.mxu0 %v4052
    %4465 = vmatpush1.bf16.msra.mxu0 %v4051
    %4466 = vmatprep.subr.bf16.mxu0 %v4059
    %4467 = vmatpush1.bf16.msra.mxu0 %v4058
    %4468 = vmatprep.subr.bf16.mxu0 %v4066
    %4469 = vmatpush1.bf16.msra.mxu0 %v4065
    %4470 = vmatprep.subr.bf16.mxu0 %v4073
    %4471 = vmatpush1.bf16.msra.mxu0 %v4072
    %4472 = vmatprep.subr.bf16.mxu0 %v4080
    %4473 = vmatpush1.bf16.msra.mxu0 %v4079
    %4474 = vmatprep.subr.bf16.mxu0 %v4087
    %4475 = vmatpush1.bf16.msra.mxu0 %v4086
    %4476 = vmatprep.subr.bf16.mxu0 %v4094
    %4477 = vmatpush1.bf16.msra.mxu0 %v4093
    %4478 = vmatprep.subr.bf16.mxu0 %v4101
    %4479 = vmatpush1.bf16.msra.mxu0 %v4100
    %4480 = vmatprep.subr.bf16.mxu0 %v4108
    %4481 = vmatpush1.bf16.msra.mxu0 %v4107
    %4482 = vmatprep.mubr.bf16.mxu0 %v3002
    %4483 = vmatmul.mubr.bf16.gmra.mrb[0].mxu0 %v3001
    %v4484 = vpop.f32.mrb[0].mxu0
    %v4485 = vadd.f32 %v3266, %v4484
    %v4486 = vpop.f32.mrb[0].mxu0
    %v4487 = vadd.f32 %v3270, %v4486
    %v4488 = vpop.f32.mrb[0].mxu0
    %v4489 = vpop.f32.mrb[0].mxu0
    %4490 = vdwg.mxu0
    %4491 = vmatprep.subr.bf16.mxu0 %v4115
    %4492 = vmatpush1.bf16.msra.mxu0 %v4114
    %4493 = vmatprep.subr.bf16.mxu0 %v4122
    %4494 = vmatpush1.bf16.msra.mxu0 %v4121
    %4495 = vmatprep.subr.bf16.mxu0 %v4129
    %4496 = vmatpush1.bf16.msra.mxu0 %v4128
    %4497 = vmatprep.subr.bf16.mxu0 %v4136
    %4498 = vmatpush1.bf16.msra.mxu0 %v4135
    %4499 = vmatprep.subr.bf16.mxu0 %v4143
    %4500 = vmatpush1.bf16.msra.mxu0 %v4142
    %4501 = vmatprep.subr.bf16.mxu0 %v4150
    %4502 = vmatpush1.bf16.msra.mxu0 %v4149
    %4503 = vmatprep.subr.bf16.mxu0 %v4157
    %4504 = vmatpush1.bf16.msra.mxu0 %v4156
    %4505 = vmatprep.subr.bf16.mxu0 %v4164
    %4506 = vmatpush1.bf16.msra.mxu0 %v4163
    %4507 = vmatprep.subr.bf16.mxu0 %v4171
    %4508 = vmatpush1.bf16.msra.mxu0 %v4170
    %4509 = vmatprep.subr.bf16.mxu0 %v4178
    %4510 = vmatpush1.bf16.msra.mxu0 %v4177
    %4511 = vmatprep.subr.bf16.mxu0 %v4185
    %4512 = vmatpush1.bf16.msra.mxu0 %v4184
    %4513 = vmatprep.subr.bf16.mxu0 %v4192
    %4514 = vmatpush1.bf16.msra.mxu0 %v4191
    %4515 = vmatprep.subr.bf16.mxu0 %v4199
    %4516 = vmatpush1.bf16.msra.mxu0 %v4198
    %4517 = vmatprep.subr.bf16.mxu0 %v4206
    %4518 = vmatpush1.bf16.msra.mxu0 %v4205
    %4519 = vmatprep.subr.bf16.mxu0 %v4213
    %4520 = vmatpush1.bf16.msra.mxu0 %v4212
    %4521 = vmatprep.subr.bf16.mxu0 %v4220
    %4522 = vmatpush1.bf16.msra.mxu0 %v4219
    %4523 = vmatprep.mubr.bf16.mxu0 %v3004
    %4524 = vmatmul.mubr.bf16.gmra.mrb[0].mxu0 %v3003
    %v4525 = vpop.f32.mrb[0].mxu0
    %v4526 = vadd.f32 %v4485, %v4525
    %v4527 = vpop.f32.mrb[0].mxu0
    %v4528 = vadd.f32 %v4487, %v4527
    %v4529 = vpop.f32.mrb[0].mxu0
    %v4530 = vpop.f32.mrb[0].mxu0
    %4531 = vdwg.mxu0
    %4532 = vmatprep.subr.bf16.mxu0 %v4005
    %4533 = vmatpush1.bf16.msra.mxu0 %v4004
    %4534 = vmatprep.subr.bf16.mxu0 %v4012
    %4535 = vmatpush1.bf16.msra.mxu0 %v4011
    %4536 = vmatprep.subr.bf16.mxu0 %v4019
    %4537 = vmatpush1.bf16.msra.mxu0 %v4018
    %4538 = vmatprep.subr.bf16.mxu0 %v4026
    %4539 = vmatpush1.bf16.msra.mxu0 %v4025
    %4540 = vmatprep.subr.bf16.mxu0 %v4033
    %4541 = vmatpush1.bf16.msra.mxu0 %v4032
    %4542 = vmatprep.subr.bf16.mxu0 %v4040
    %4543 = vmatpush1.bf16.msra.mxu0 %v4039
    %4544 = vmatprep.subr.bf16.mxu0 %v4047
    %4545 = vmatpush1.bf16.msra.mxu0 %v4046
    %4546 = vmatprep.subr.bf16.mxu0 %v4054
    %4547 = vmatpush1.bf16.msra.mxu0 %v4053
    %4548 = vmatprep.subr.bf16.mxu0 %v4061
    %4549 = vmatpush1.bf16.msra.mxu0 %v4060
    %4550 = vmatprep.subr.bf16.mxu0 %v4068
    %4551 = vmatpush1.bf16.msra.mxu0 %v4067
    %4552 = vmatprep.subr.bf16.mxu0 %v4075
    %4553 = vmatpush1.bf16.msra.mxu0 %v4074
    %4554 = vmatprep.subr.bf16.mxu0 %v4082
    %4555 = vmatpush1.bf16.msra.mxu0 %v4081
    %4556 = vmatprep.subr.bf16.mxu0 %v4089
    %4557 = vmatpush1.bf16.msra.mxu0 %v4088
    %4558 = vmatprep.subr.bf16.mxu0 %v4096
    %4559 = vmatpush1.bf16.msra.mxu0 %v4095
    %4560 = vmatprep.subr.bf16.mxu0 %v4103
    %4561 = vmatpush1.bf16.msra.mxu0 %v4102
    %4562 = vmatprep.subr.bf16.mxu0 %v4110
    %4563 = vmatpush1.bf16.msra.mxu0 %v4109
    %4564 = vmatprep.mubr.bf16.mxu0 %v3002
    %4565 = vmatmul.mubr.bf16.gmra.mrb[0].mxu0 %v3001
    %v4566 = vpop.f32.mrb[0].mxu0
    %v4567 = vadd.f32 %v3274, %v4566
    %v4568 = vpop.f32.mrb[0].mxu0
    %v4569 = vadd.f32 %v3278, %v4568
    %v4570 = vpop.f32.mrb[0].mxu0
    %v4571 = vpop.f32.mrb[0].mxu0
    %4572 = vdwg.mxu0
    %4573 = vmatprep.subr.bf16.mxu0 %v4117
    %4574 = vmatpush1.bf16.msra.mxu0 %v4116
    %4575 = vmatprep.subr.bf16.mxu0 %v4124
    %4576 = vmatpush1.bf16.msra.mxu0 %v4123
    %4577 = vmatprep.subr.bf16.mxu0 %v4131
    %4578 = vmatpush1.bf16.msra.mxu0 %v4130
    %4579 = vmatprep.subr.bf16.mxu0 %v4138
    %4580 = vmatpush1.bf16.msra.mxu0 %v4137
    %4581 = vmatprep.subr.bf16.mxu0 %v4145
    %4582 = vmatpush1.bf16.msra.mxu0 %v4144
    %4583 = vmatprep.subr.bf16.mxu0 %v4152
    %4584 = vmatpush1.bf16.msra.mxu0 %v4151
    %4585 = vmatprep.subr.bf16.mxu0 %v4159
    %4586 = vmatpush1.bf16.msra.mxu0 %v4158
    %4587 = vmatprep.subr.bf16.mxu0 %v4166
    %4588 = vmatpush1.bf16.msra.mxu0 %v4165
    %4589 = vmatprep.subr.bf16.mxu0 %v4173
    %4590 = vmatpush1.bf16.msra.mxu0 %v4172
    %4591 = vmatprep.subr.bf16.mxu0 %v4180
    %4592 = vmatpush1.bf16.msra.mxu0 %v4179
    %4593 = vmatprep.subr.bf16.mxu0 %v4187
    %4594 = vmatpush1.bf16.msra.mxu0 %v4186
    %4595 = vmatprep.subr.bf16.mxu0 %v4194
    %4596 = vmatpush1.bf16.msra.mxu0 %v4193
    %4597 = vmatprep.subr.bf16.mxu0 %v4201
    %4598 = vmatpush1.bf16.msra.mxu0 %v4200
    %4599 = vmatprep.subr.bf16.mxu0 %v4208
    %4600 = vmatpush1.bf16.msra.mxu0 %v4207
    %4601 = vmatprep.subr.bf16.mxu0 %v4215
    %4602 = vmatpush1.bf16.msra.mxu0 %v4214
    %4603 = vmatprep.subr.bf16.mxu0 %v4222
    %4604 = vmatpush1.bf16.msra.mxu0 %v4221
    %4605 = vmatprep.mubr.bf16.mxu0 %v3004
    %4606 = vmatmul.mubr.bf16.gmra.mrb[0].mxu0 %v3003
    %v4607 = vpop.f32.mrb[0].mxu0
    %v4608 = vadd.f32 %v4567, %v4607
    %v4609 = vpop.f32.mrb[0].mxu0
    %v4610 = vadd.f32 %v4569, %v4609
    %v4611 = vpop.f32.mrb[0].mxu0
    %v4612 = vpop.f32.mrb[0].mxu0
    %4613 = vdwg.mxu0
    %4614 = vmatprep.subr.bf16.mxu0 %v4007
    %4615 = vmatpush1.bf16.msra.mxu0 %v4006
    %4616 = vmatprep.subr.bf16.mxu0 %v4014
    %4617 = vmatpush1.bf16.msra.mxu0 %v4013
    %4618 = vmatprep.subr.bf16.mxu0 %v4021
    %4619 = vmatpush1.bf16.msra.mxu0 %v4020
    %4620 = vmatprep.subr.bf16.mxu0 %v4028
    %4621 = vmatpush1.bf16.msra.mxu0 %v4027
    %4622 = vmatprep.subr.bf16.mxu0 %v4035
    %4623 = vmatpush1.bf16.msra.mxu0 %v4034
    %4624 = vmatprep.subr.bf16.mxu0 %v4042
    %4625 = vmatpush1.bf16.msra.mxu0 %v4041
    %4626 = vmatprep.subr.bf16.mxu0 %v4049
    %4627 = vmatpush1.bf16.msra.mxu0 %v4048
    %4628 = vmatprep.subr.bf16.mxu0 %v4056
    %4629 = vmatpush1.bf16.msra.mxu0 %v4055
    %4630 = vmatprep.subr.bf16.mxu0 %v4063
    %4631 = vmatpush1.bf16.msra.mxu0 %v4062
    %4632 = vmatprep.subr.bf16.mxu0 %v4070
    %4633 = vmatpush1.bf16.msra.mxu0 %v4069
    %4634 = vmatprep.subr.bf16.mxu0 %v4077
    %4635 = vmatpush1.bf16.msra.mxu0 %v4076
    %4636 = vmatprep.subr.bf16.mxu0 %v4084
    %4637 = vmatpush1.bf16.msra.mxu0 %v4083
    %4638 = vmatprep.subr.bf16.mxu0 %v4091
    %4639 = vmatpush1.bf16.msra.mxu0 %v4090
    %4640 = vmatprep.subr.bf16.mxu0 %v4098
    %4641 = vmatpush1.bf16.msra.mxu0 %v4097
    %4642 = vmatprep.subr.bf16.mxu0 %v4105
    %4643 = vmatpush1.bf16.msra.mxu0 %v4104
    %4644 = vmatprep.subr.bf16.mxu0 %v4112
    %4645 = vmatpush1.bf16.msra.mxu0 %v4111
    %4646 = vmatprep.mubr.bf16.mxu0 %v3002
    %4647 = vmatmul.mubr.bf16.gmra.mrb[0].mxu0 %v3001
    %v4648 = vpop.f32.mrb[0].mxu0
    %v4649 = vadd.f32 %v3282, %v4648
    %v4650 = vpop.f32.mrb[0].mxu0
    %v4651 = vadd.f32 %v3286, %v4650
    %v4652 = vpop.f32.mrb[0].mxu0
    %v4653 = vpop.f32.mrb[0].mxu0
    %4654 = vdwg.mxu0
    %4655 = vmatprep.subr.bf16.mxu0 %v4119
    %4656 = vmatpush1.bf16.msra.mxu0 %v4118
    %4657 = vmatprep.subr.bf16.mxu0 %v4126
    %4658 = vmatpush1.bf16.msra.mxu0 %v4125
    %4659 = vmatprep.subr.bf16.mxu0 %v4133
    %4660 = vmatpush1.bf16.msra.mxu0 %v4132
    %4661 = vmatprep.subr.bf16.mxu0 %v4140
    %4662 = vmatpush1.bf16.msra.mxu0 %v4139
    %4663 = vmatprep.subr.bf16.mxu0 %v4147
    %4664 = vmatpush1.bf16.msra.mxu0 %v4146
    %4665 = vmatprep.subr.bf16.mxu0 %v4154
    %4666 = vmatpush1.bf16.msra.mxu0 %v4153
    %4667 = vmatprep.subr.bf16.mxu0 %v4161
    %4668 = vmatpush1.bf16.msra.mxu0 %v4160
    %4669 = vmatprep.subr.bf16.mxu0 %v4168
    %4670 = vmatpush1.bf16.msra.mxu0 %v4167
    %4671 = vmatprep.subr.bf16.mxu0 %v4175
    %4672 = vmatpush1.bf16.msra.mxu0 %v4174
    %4673 = vmatprep.subr.bf16.mxu0 %v4182
    %4674 = vmatpush1.bf16.msra.mxu0 %v4181
    %4675 = vmatprep.subr.bf16.mxu0 %v4189
    %4676 = vmatpush1.bf16.msra.mxu0 %v4188
    %4677 = vmatprep.subr.bf16.mxu0 %v4196
    %4678 = vmatpush1.bf16.msra.mxu0 %v4195
    %4679 = vmatprep.subr.bf16.mxu0 %v4203
    %4680 = vmatpush1.bf16.msra.mxu0 %v4202
    %4681 = vmatprep.subr.bf16.mxu0 %v4210
    %4682 = vmatpush1.bf16.msra.mxu0 %v4209
    %4683 = vmatprep.subr.bf16.mxu0 %v4217
    %4684 = vmatpush1.bf16.msra.mxu0 %v4216
    %4685 = vmatprep.subr.bf16.mxu0 %v4224
    %4686 = vmatpush1.bf16.msra.mxu0 %v4223
    %4687 = vmatprep.mubr.bf16.mxu0 %v3004
    %4688 = vmatmul.mubr.bf16.gmra.mrb[0].mxu0 %v3003
    %v4689 = vpop.f32.mrb[0].mxu0
    %v4690 = vadd.f32 %v4649, %v4689
    %v4691 = vpop.f32.mrb[0].mxu0
    %v4692 = vadd.f32 %v4651, %v4691
    %v4693 = vpop.f32.mrb[0].mxu0
    %v4694 = vpop.f32.mrb[0].mxu0
    %4695 = vdwg.mxu0
    %4696 = vmatprep.subr.bf16.mxu0 0
    %4697 = vmatpush1.bf16.msra.mxu0 %v4008
    %4698 = vmatprep.subr.bf16.mxu0 0
    %4699 = vmatpush1.bf16.msra.mxu0 %v4015
    %4700 = vmatprep.subr.bf16.mxu0 0
    %4701 = vmatpush1.bf16.msra.mxu0 %v4022
    %4702 = vmatprep.subr.bf16.mxu0 0
    %4703 = vmatpush1.bf16.msra.mxu0 %v4029
    %4704 = vmatprep.subr.bf16.mxu0 0
    %4705 = vmatpush1.bf16.msra.mxu0 %v4036
    %4706 = vmatprep.subr.bf16.mxu0 0
    %4707 = vmatpush1.bf16.msra.mxu0 %v4043
    %4708 = vmatprep.subr.bf16.mxu0 0
    %4709 = vmatpush1.bf16.msra.mxu0 %v4050
    %4710 = vmatprep.subr.bf16.mxu0 0
    %4711 = vmatpush1.bf16.msra.mxu0 %v4057
    %4712 = vmatprep.subr.bf16.mxu0 0
    %4713 = vmatpush1.bf16.msra.mxu0 %v4064
    %4714 = vmatprep.subr.bf16.mxu0 0
    %4715 = vmatpush1.bf16.msra.mxu0 %v4071
    %4716 = vmatprep.subr.bf16.mxu0 0
    %4717 = vmatpush1.bf16.msra.mxu0 %v4078
    %4718 = vmatprep.subr.bf16.mxu0 0
    %4719 = vmatpush1.bf16.msra.mxu0 %v4085
    %4720 = vmatprep.subr.bf16.mxu0 0
    %4721 = vmatpush1.bf16.msra.mxu0 %v4092
    %4722 = vmatprep.subr.bf16.mxu0 0
    %4723 = vmatpush1.bf16.msra.mxu0 %v4099
    %4724 = vmatprep.subr.bf16.mxu0 0
    %4725 = vmatpush1.bf16.msra.mxu0 %v4106
    %4726 = vmatprep.subr.bf16.mxu0 0
    %4727 = vmatpush1.bf16.msra.mxu0 %v4113
    %4728 = vmatprep.mubr.bf16.mxu0 %v3002
    %4729 = vmatmul.mubr.bf16.gmra.mrb[0].mxu0 %v3001
    %v4730 = vpop.f32.mrb[0].mxu0
    %v4731 = vadd.f32 %v3290, %v4730
    %v4732 = vpop.f32.mrb[0].mxu0
    %v4733 = vpop.f32.mrb[0].mxu0
    %v4734 = vpop.f32.mrb[0].mxu0
    %4735 = vdwg.mxu0
    %4736 = vmatprep.subr.bf16.mxu0 0
    %4737 = vmatpush1.bf16.msra.mxu0 %v4120
    %4738 = vmatprep.subr.bf16.mxu0 0
    %4739 = vmatpush1.bf16.msra.mxu0 %v4127
    %4740 = vmatprep.subr.bf16.mxu0 0
    %4741 = vmatpush1.bf16.msra.mxu0 %v4134
    %4742 = vmatprep.subr.bf16.mxu0 0
    %4743 = vmatpush1.bf16.msra.mxu0 %v4141
    %4744 = vmatprep.subr.bf16.mxu0 0
    %4745 = vmatpush1.bf16.msra.mxu0 %v4148
    %4746 = vmatprep.subr.bf16.mxu0 0
    %4747 = vmatpush1.bf16.msra.mxu0 %v4155
    %4748 = vmatprep.subr.bf16.mxu0 0
    %4749 = vmatpush1.bf16.msra.mxu0 %v4162
    %4750 = vmatprep.subr.bf16.mxu0 0
    %4751 = vmatpush1.bf16.msra.mxu0 %v4169
    %4752 = vmatprep.subr.bf16.mxu0 0
    %4753 = vmatpush1.bf16.msra.mxu0 %v4176
    %4754 = vmatprep.subr.bf16.mxu0 0
    %4755 = vmatpush1.bf16.msra.mxu0 %v4183
    %4756 = vmatprep.subr.bf16.mxu0 0
    %4757 = vmatpush1.bf16.msra.mxu0 %v4190
    %4758 = vmatprep.subr.bf16.mxu0 0
    %4759 = vmatpush1.bf16.msra.mxu0 %v4197
    %4760 = vmatprep.subr.bf16.mxu0 0
    %4761 = vmatpush1.bf16.msra.mxu0 %v4204
    %4762 = vmatprep.subr.bf16.mxu0 0
    %4763 = vmatpush1.bf16.msra.mxu0 %v4211
    %4764 = vmatprep.subr.bf16.mxu0 0
    %4765 = vmatpush1.bf16.msra.mxu0 %v4218
    %4766 = vmatprep.subr.bf16.mxu0 0
    %4767 = vmatpush1.bf16.msra.mxu0 %v4225
    %4768 = vmatprep.mubr.bf16.mxu0 %v3004
    %4769 = vmatmul.mubr.bf16.gmra.mrb[0].mxu0 %v3003
    %v4770 = vpop.f32.mrb[0].mxu0
    %v4771 = vadd.f32 %v4731, %v4770
    %v4772 = vpop.f32.mrb[0].mxu0
    %v4773 = vpop.f32.mrb[0].mxu0
    %v4774 = vpop.f32.mrb[0].mxu0
    %4775 = vdwg.mxu0
    %v4776 = vxor.u32 %v4526, 2147483648
    %v4777 = vxor.u32 %v4528, 2147483648
    %v4778 = vxor.u32 %v4608, 2147483648
    %v4779 = vxor.u32 %v4610, 2147483648
    %v4780 = vxor.u32 %v4690, 2147483648
    %v4781 = vxor.u32 %v4692, 2147483648
    %v4782 = vxor.u32 %v4771, 2147483648
    %v4783 = vmul.f32 %v4776, 1.442695
    %v4784 = vpow.pop %v4783
    %v4785 = vmul.f32 %v4777, 1.442695
    %v4786 = vpow.pop %v4785
    %v4787 = vmul.f32 %v4778, 1.442695
    %v4788 = vpow.pop %v4787
    %v4789 = vmul.f32 %v4779, 1.442695
    %v4790 = vpow.pop %v4789
    %v4791 = vmul.f32 %v4780, 1.442695
    %v4792 = vpow.pop %v4791
    %v4793 = vmul.f32 %v4781, 1.442695
    %v4794 = vpow.pop %v4793
    %v4795 = vmul.f32 %v4782, 1.442695
    %v4796 = vpow.pop %v4795
    %v4797 = vadd.f32 %v4784, 1.0
    %v4798 = vadd.f32 %v4786, 1.0
    %v4799 = vadd.f32 %v4788, 1.0
    %v4800 = vadd.f32 %v4790, 1.0
    %v4801 = vadd.f32 %v4792, 1.0
    %v4802 = vadd.f32 %v4794, 1.0
    %v4803 = vadd.f32 %v4796, 1.0
    %v4804 = vrcp.pop %v4797
    %v4805 = vmul.f32 1.0, %v4804
    %v4806 = vrcp.pop %v4798
    %v4807 = vmul.f32 1.0, %v4806
    %v4808 = vrcp.pop %v4799
    %v4809 = vmul.f32 1.0, %v4808
    %v4810 = vrcp.pop %v4800
    %v4811 = vmul.f32 1.0, %v4810
    %v4812 = vrcp.pop %v4801
    %v4813 = vmul.f32 1.0, %v4812
    %v4814 = vrcp.pop %v4802
    %v4815 = vmul.f32 1.0, %v4814
    %v4816 = vrcp.pop %v4803
    %v4817 = vmul.f32 1.0, %v4816
    %4818 = vst [vmem:[#allocation2] sm:$0xff] %v4805
    %4819 = vst [vmem:[#allocation2 + $0x8] sm:$0xff] %v4807
    %4820 = vst [vmem:[#allocation2 + $0x10] sm:$0xff] %v4809
    %4821 = vst [vmem:[#allocation2 + $0x18] sm:$0xff] %v4811
    %4822 = vst [vmem:[#allocation2 + $0x20] sm:$0xff] %v4813
    %4823 = vst [vmem:[#allocation2 + $0x28] sm:$0xff] %v4815
    %4824 = vst.msk [vmem:[#allocation2 + $0x30] sm:$0xff] %vm1264, %v4817
    // Predicated region
    $region58: #{tpu_custom_call.1} parent=1 // pred_check
      _
    $region59: #{tpu_custom_call.1} parent=1 // pred_check_branch
      %4826 = sbr.rel (0) target = $region61
    $region60: #{tpu_custom_call.1} parent=1 // pred_region
      %s4828 = ssub.s32 896, 896
      %4829 = vsyncadd [#allocation3], %s4828
      %s4831 = sshll.u32 [#allocation2], 4
      %s4832 = int_to_ptr.vmem [resolvable:$true] %s4831
      %4834 = dma.vmem_to_hbm [thread:$0]  %s4832, 896, %s14, [#allocation3]
    $region61: #{tpu_custom_call.1} parent=1 // pred_fallthru
      _
    // Predicated region
    $region62: #{tpu_custom_call.1} parent=1 // pred_check
      _
    $region63: #{tpu_custom_call.1} parent=1 // pred_check_branch
      %4836 = sbr.rel (0) target = $region65
    $region64: #{tpu_custom_call.1} parent=1 // pred_region
      %s4838 = ssub.s32 128, 128
      %4839 = vsyncadd [#allocation5], %s4838
      %s4841 = sshll.u32 [#allocation4], 4
      %s4842 = int_to_ptr.vmem [resolvable:$true] %s4841
      %4844 = dma.vmem_to_hbm [thread:$0]  %s4842, 128, %s15, [#allocation5]
    $region65: #{tpu_custom_call.1} parent=1 // pred_fallthru
      _
    // Predicated region
    $region66: #{tpu_custom_call.1} parent=1 // pred_check
      _
    $region67: #{tpu_custom_call.1} parent=1 // pred_check_branch
      %4846 = sbr.rel (0) target = $region69
    $region68: #{tpu_custom_call.1} parent=1 // pred_region
      %4847 = dma.done [#allocation3], 896
    $region69: #{tpu_custom_call.1} parent=1 // pred_fallthru
      _
    // Predicated region
    $region70: #{tpu_custom_call.1} parent=1 // pred_check
      _
    $region71: #{tpu_custom_call.1} parent=1 // pred_check_branch
      %4849 = sbr.rel (0) target = $region73
    $region72: #{tpu_custom_call.1} parent=1 // pred_region
      %4850 = dma.done [#allocation5], 128
    $region73: #{tpu_custom_call.1} parent=1 // pred_fallthru
      _
    %4851 = vsyncpa [#allocation3], 1
    %4852 = vsyncpa [#allocation5], 1

</llo_original>
